<compile_context>
chip_gen: v5e
topology: v5e:2x2
jax: 0.10.0
libtpu: 0.0.40
codegen_flags: <defaults>
</compile_context>

<pallas_src>
import jax
import jax.numpy as jnp
from jax.experimental import pallas as pl
from jax.experimental.pallas import tpu as pltpu

SMOOTH = 1e-5    # FTanimoto smooth
FTDEPTH = 5      # FTanimoto depth
BN_EPS = 1e-5    # BatchNorm2d default eps


# ----------------------------- fused CATFusion forward -----------------------

def catfusion_forward(params, x1, x2):
    """x1, x2: (N, C, H, W) float32 (PyTorch NCHW). Returns (N, Cout, H, W)."""
    N, C, H, W = x1.shape
    HW = H * W
    x1p = x1.reshape(N, C, HW)
    x2p = x2.reshape(N, C, HW)

    p12, p21 = params["att12"], params["att21"]
    g1, g2 = params["gamma1"], params["gamma2"]

    # ---- fold three (conv -> BN) blocks sharing a source into one weight ----
    def fuse_qkv(triple):
        ws, ss, bs = [], [], []
        for w, s, b in triple:                      # w: HWIO (3,3,Cin,Cout)
            ws.append(jnp.transpose(w, (3, 0, 1, 2)).reshape(w.shape[3], -1))
            ss.append(s.reshape(-1))
            bs.append(b.reshape(-1))
        return (jnp.concatenate(ws, axis=0),        # (3C, 9C), row = g*C+co, col = t*C+ci
                jnp.concatenate(ss).reshape(-1, 1),  # (3C, 1)
                jnp.concatenate(bs).reshape(-1, 1))

    # convs whose source is x1: q of att12, k of att21, v of att21
    wa, sa, ba = fuse_qkv([p12["q"], p21["k"], p21["v"]])
    # convs whose source is x2: k of att12, v of att12, q of att21
    wb, sb, bb = fuse_qkv([p12["k"], p12["v"], p21["q"]])

    # gamma folded into the attention output norm (exact linear fold)
    n12s = (g1 * p12["norm"][0]).reshape(C, 1)
    n12b = (g1 * p12["norm"][1]).reshape(C, 1)
    n21s = (g2 * p21["norm"][0]).reshape(C, 1)
    n21b = (g2 * p21["norm"][1]).reshape(C, 1)

    wf_full, sf_v, bf_v = params["fuse"]            # (3,3,2C,Cout), (Cout,), (Cout,)
    Cout = wf_full.shape[-1]
    wf1 = jnp.transpose(wf_full[:, :, :C, :], (3, 0, 1, 2)).reshape(Cout, 9 * C)
    wf2 = jnp.transpose(wf_full[:, :, C:, :], (3, 0, 1, 2)).reshape(Cout, 9 * C)
    wf = jnp.concatenate([wf1, wf2], axis=1)        # (Cout, 18C)
    sf = sf_v.reshape(Cout, 1)
    bf = bf_v.reshape(Cout, 1)

    # ---- 9 edge masks for the padded 3x3 taps on the flattened H*W axis -----
    hh = jnp.arange(HW, dtype=jnp.int32) // W
    ww = jnp.arange(HW, dtype=jnp.int32) % W
    mask_rows = []
    for t in range(9):
        dy, dx = t // 3, t % 3
        ok_h = (hh + dy - 1 >= 0) & (hh + dy - 1 < H)
        ok_w = (ww + dx - 1 >= 0) & (ww + dx - 1 < W)
        mask_rows.append((ok_h & ok_w).astype(jnp.float32))
    masks = jnp.stack(mask_rows, axis=0)            # (9, HW)

    # ----------------------------- the kernel --------------------------------
    def kernel(x1_ref, x2_ref, m_ref,
               wa_ref, sa_ref, ba_ref,
               wb_ref, sb_ref, bb_ref,
               n12s_ref, n12b_ref, n21s_ref, n21b_ref,
               wf_ref, sf_ref, bf_ref,
               out_ref):
        x1v = x1_ref[0]                              # (C, HW), lane-dense
        x2v = x2_ref[0]
        mv = m_ref[...]                              # (9, HW)

        # im2col in planar layout: tap = lane-roll of the flat plane + edge mask
        def masked_taps(img):                        # img: (C, HW) -> (9C, HW)
            taps = []
            for t in range(9):
                dy, dx = t // 3, t % 3
                off = (dy - 1) * W + (dx - 1)
                shift = (-off) % HW
                rolled = pltpu.roll(img, shift, axis=1) if shift != 0 else img
                taps.append(rolled * mv[t:t + 1, :])
            return jnp.concatenate(taps, axis=0)

        # ---- q/k/v convs: one MXU dot per source + fused BN + sigmoid -------
        qkv1 = jnp.dot(wa_ref[...], masked_taps(x1v),
                       preferred_element_type=jnp.float32)       # (3C, HW)
        qkv2 = jnp.dot(wb_ref[...], masked_taps(x2v),
                       preferred_element_type=jnp.float32)
        qkv1 = jax.nn.sigmoid(qkv1 * sa_ref[...] + ba_ref[...])
        qkv2 = jax.nn.sigmoid(qkv2 * sb_ref[...] + bb_ref[...])

        q12, k21, v21 = qkv1[0:C], qkv1[C:2 * C], qkv1[2 * C:3 * C]
        k12, v12, q21 = qkv2[0:C], qkv2[C:2 * C], qkv2[2 * C:3 * C]

        # ---- fractal Tanimoto with complement (shared base sums) ------------
        def ft_pair(tpl, tpp, tll, sq, sk, n):
            def base(tpl_, tpp_, tll_):
                den = 0.0
                for d in range(FTDEPTH):
                    a = 2.0 ** d
                    b = -(2.0 * a - 1.0)
                    den = den + 1.0 / (a * (tpp_ + tll_) + b * tpl_ + SMOOTH)
                return (tpl_ + SMOOTH) * den * (1.0 / FTDEPTH)
            direct = base(tpl, tpp, tll)
            comp = base(n - sq - sk + tpl, n - 2.0 * sq + tpp, n - 2.0 * sk + tll)
            return 0.5 * (direct + comp)

        def relft(q, k, v):
            qk, qq, kk = q * k, q * q, k * k         # computed once, reused by both axes
            def sums(axis):
                return (jnp.sum(qk, axis=axis, keepdims=True),
                        jnp.sum(qq, axis=axis, keepdims=True),
                        jnp.sum(kk, axis=axis, keepdims=True),
                        jnp.sum(q, axis=axis, keepdims=True),
                        jnp.sum(k, axis=axis, keepdims=True))
            att_spat = ft_pair(*sums(0), n=float(C))   # torch metric_space (axis=1) -> (1, HW)
            att_chan = ft_pair(*sums(1), n=float(HW))  # torch metric_channel (axis=[2,3]) -> (C, 1)
            return 0.5 * (att_chan * v) * (att_spat * v)

        # gamma1/gamma2 already folded into the norm scale/bias
        a12 = relft(q12, k12, v12) * n12s_ref[...] + n12b_ref[...]
        a21 = relft(q21, k21, v21) * n21s_ref[...] + n21b_ref[...]
        out12 = x1v * (1.0 + a12)
        out21 = x2v * (1.0 + a21)

        # ---- fuse conv (2C -> Cout): single MXU dot + folded BN + ReLU ------
        patch = jnp.concatenate([masked_taps(out12), masked_taps(out21)], axis=0)  # (18C, HW)
        y = jnp.dot(wf_ref[...], patch, preferred_element_type=jnp.float32)        # (Cout, HW)
        y = jnp.maximum(y * sf_ref[...] + bf_ref[...], 0.0)
        out_ref[...] = y.reshape(1, Cout, HW)

    # ----------------------------- pallas_call -------------------------------
    def const_spec(arr):
        shape = arr.shape
        return pl.BlockSpec(shape, lambda n: (0,) * len(shape))

    mm_flops = 2 * N * HW * (2 * (9 * C) * (3 * C) + (18 * C) * Cout)
    ew_flops = 80 * N * C * HW                        # rough FT / attention elementwise
    n_trans = N * HW * (6 * C + 8 * FTDEPTH)          # sigmoids + FT reciprocals (rough)
    bytes_acc = 4 * (2 * N * C * HW + N * Cout * HW + masks.size
                     + wa.size + wb.size + wf.size + sa.size + ba.size
                     + sb.size + bb.size + 4 * n12s.size + sf.size + bf.size)

    out = pl.pallas_call(
        kernel,
        out_shape=jax.ShapeDtypeStruct((N, Cout, HW), jnp.float32),
        grid=(N,),
        in_specs=[
            pl.BlockSpec((1, C, HW), lambda n: (n, 0, 0)),
            pl.BlockSpec((1, C, HW), lambda n: (n, 0, 0)),
            const_spec(masks),
            const_spec(wa), const_spec(sa), const_spec(ba),
            const_spec(wb), const_spec(sb), const_spec(bb),
            const_spec(n12s), const_spec(n12b), const_spec(n21s), const_spec(n21b),
            const_spec(wf), const_spec(sf), const_spec(bf),
        ],
        out_specs=pl.BlockSpec((1, Cout, HW), lambda n: (n, 0, 0)),
        compiler_params=pltpu.CompilerParams(dimension_semantics=("parallel",)),
        cost_estimate=pl.CostEstimate(flops=mm_flops + ew_flops,
                                      transcendentals=n_trans,
                                      bytes_accessed=bytes_acc),
    )(x1p, x2p, masks, wa, sa, ba, wb, sb, bb,
      n12s, n12b, n21s, n21b, wf, sf, bf)

    return out.reshape(N, Cout, H, W)


# ----------------------------- pure-JAX reference (NCHW, like torch) ---------

def _ft_base_ref(p, l, axes):
    tpl = jnp.sum(p * l, axis=axes, keepdims=True)
    tpp = jnp.sum(p * p, axis=axes, keepdims=True)
    tll = jnp.sum(l * l, axis=axes, keepdims=True)
    num = tpl + SMOOTH
    denum = 0.0
    for d in range(FTDEPTH):
        a = 2.0 ** d
        b = -(2.0 * a - 1.0)
        denum = denum + 1.0 / (a * (tpp + tll) + b * tpl + SMOOTH)
    return num * denum * (1.0 / FTDEPTH)


def _ftanimoto_ref(p, l, axes):
    return 0.5 * (_ft_base_ref(p, l, axes) + _ft_base_ref(1.0 - p, 1.0 - l, axes))


def _conv_bn_act_ref(x, w, scale, bias, act):
    y = jax.lax.conv_general_dilated(
        x, w, window_strides=(1, 1), padding=((1, 1), (1, 1)),
        dimension_numbers=("NCHW", "HWIO", "NCHW"),
        precision=jax.lax.Precision.HIGHEST)
    y = y * scale.reshape(1, -1, 1, 1) + bias.reshape(1, -1, 1, 1)
    if act == "sigmoid":
        y = jax.nn.sigmoid(y)
    elif act == "relu":
        y = jnp.maximum(y, 0.0)
    return y


def _relatt_ref(p, in1, in2, in3):
    q = _conv_bn_act_ref(in1, *p["q"], act="sigmoid")
    k = _conv_bn_act_ref(in2, *p["k"], act="sigmoid")
    v = _conv_bn_act_ref(in3, *p["v"], act="sigmoid")
    att_spat = _ftanimoto_ref(q, k, axes=(1,))      # torch axis=1 (channels)
    att_chan = _ftanimoto_ref(q, k, axes=(2, 3))    # torch axis=[2,3] (spatial)
    v_cspat = 0.5 * (att_chan * v) * (att_spat * v)
    scale, bias = p["norm"]
    return v_cspat * scale.reshape(1, -1, 1, 1) + bias.reshape(1, -1, 1, 1)


def catfusion_ref(params, x1, x2):
    a12 = params["gamma1"] * _relatt_ref(params["att12"], x1, x2, x2)
    a21 = params["gamma2"] * _relatt_ref(params["att21"], x2, x1, x1)
    out12 = x1 * (1.0 + a12)
    out21 = x2 * (1.0 + a21)
    cat = jnp.concatenate([out12, out21], axis=1)
    return _conv_bn_act_ref(cat, *params["fuse"], act="relu")


# ----------------------------- deterministic parameter init ------------------

def _fold_conv_bn(key, cin, cout):
    k1, k2, k3, k4, k5, k6 = jax.random.split(key, 6)
    w = 0.2 * jax.random.normal(k1, (3, 3, cin, cout), jnp.float32)   # HWIO
    b = 0.1 * jax.random.normal(k2, (cout,), jnp.float32)
    bn_g = 1.0 + 0.1 * jax.random.normal(k3, (cout,), jnp.float32)
    bn_b = 0.1 * jax.random.normal(k4, (cout,), jnp.float32)
    bn_m = 0.1 * jax.random.normal(k5, (cout,), jnp.float32)
    bn_v = jax.random.uniform(k6, (cout,), jnp.float32, 0.5, 1.5)
    scale = bn_g / jnp.sqrt(bn_v + BN_EPS)
    bias = (b - bn_m) * scale + bn_b
    return w, scale, bias


def _fold_bn(key, c):
    k3, k4, k5, k6 = jax.random.split(key, 4)
    bn_g = 1.0 + 0.1 * jax.random.normal(k3, (c,), jnp.float32)
    bn_b = 0.1 * jax.random.normal(k4, (c,), jnp.float32)
    bn_m = 0.1 * jax.random.normal(k5, (c,), jnp.float32)
    bn_v = jax.random.uniform(k6, (c,), jnp.float32, 0.5, 1.5)
    scale = bn_g / jnp.sqrt(bn_v + BN_EPS)
    bias = bn_b - bn_m * scale
    return scale, bias


def init_params(key, nfilters_in, nfilters_out):
    ks = jax.random.split(key, 9)
    return {
        "att12": {"q": _fold_conv_bn(ks[0], nfilters_in, nfilters_in),
                  "k": _fold_conv_bn(ks[1], nfilters_in, nfilters_in),
                  "v": _fold_conv_bn(ks[2], nfilters_in, nfilters_in),
                  "norm": _fold_bn(ks[3], nfilters_in)},
        "att21": {"q": _fold_conv_bn(ks[4], nfilters_in, nfilters_in),
                  "k": _fold_conv_bn(ks[5], nfilters_in, nfilters_in),
                  "v": _fold_conv_bn(ks[6], nfilters_in, nfilters_in),
                  "norm": _fold_bn(ks[7], nfilters_in)},
        "fuse": _fold_conv_bn(ks[8], 2 * nfilters_in, nfilters_out),
        # torch __init__ sets gamma1/gamma2 to zero; use nonzero deterministic
        # values so the attention path actually contributes to the output.
        "gamma1": jnp.float32(0.15),
        "gamma2": jnp.float32(-0.25),
    }


# ----------------------------- main ------------------------------------------

if __name__ == "__main__":
    N, C_IN, C_OUT, H, W = 2, 4, 8, 16, 16
    key = jax.random.PRNGKey(0)
    kx1, kx2, kp = jax.random.split(key, 3)
    # NCHW inputs, identical to the PyTorch module input [2, 4, 16, 16].
    x1 = jax.random.normal(kx1, (N, C_IN, H, W), jnp.float32)
    x2 = jax.random.normal(kx2, (N, C_IN, H, W), jnp.float32)
    params = init_params(kp, C_IN, C_OUT)

    out = jax.jit(catfusion_forward)(params, x1, x2)
    out = jax.block_until_ready(out)
    assert out.shape == (N, C_OUT, H, W), out.shape

    ref = catfusion_ref(params, x1, x2)
    if not bool(jnp.allclose(out, ref, atol=1e-3, rtol=1e-3)):
        max_err = float(jnp.max(jnp.abs(out - ref)))
        raise AssertionError(f"Pallas output mismatch vs reference, max err {max_err}")

    print("KERNEL_OK")
</pallas_src>

<mosaic_0001>
module attributes {stable_mosaic.version = 11 : i64} {
  func.func @kernel(%arg0: i32, %arg1: memref<1x4x256xf32, #tpu.memory_space<vmem>>, %arg2: memref<1x4x256xf32, #tpu.memory_space<vmem>>, %arg3: memref<9x256xf32, #tpu.memory_space<vmem>>, %arg4: memref<12x36xf32, #tpu.memory_space<vmem>>, %arg5: memref<12x1xf32, #tpu.memory_space<vmem>>, %arg6: memref<12x1xf32, #tpu.memory_space<vmem>>, %arg7: memref<12x36xf32, #tpu.memory_space<vmem>>, %arg8: memref<12x1xf32, #tpu.memory_space<vmem>>, %arg9: memref<12x1xf32, #tpu.memory_space<vmem>>, %arg10: memref<4x1xf32, #tpu.memory_space<vmem>>, %arg11: memref<4x1xf32, #tpu.memory_space<vmem>>, %arg12: memref<4x1xf32, #tpu.memory_space<vmem>>, %arg13: memref<4x1xf32, #tpu.memory_space<vmem>>, %arg14: memref<8x72xf32, #tpu.memory_space<vmem>>, %arg15: memref<8x1xf32, #tpu.memory_space<vmem>>, %arg16: memref<8x1xf32, #tpu.memory_space<vmem>>, %arg17: memref<1x8x256xf32, #tpu.memory_space<vmem>>) attributes {dimension_semantics = [#tpu.dimension_semantics<parallel>], iteration_bounds = array<i64: 2>, scalar_prefetch = 0 : i64, scratch_operands = 0 : i64, tpu.core_type = #tpu.core_type<tc>, window_params = [{transform_indices = @transform_0, window_bounds = array<i64: 1, 4, 256>}, {transform_indices = @transform_1, window_bounds = array<i64: 1, 4, 256>}, {pipeline_mode = #tpu.pipeline_mode<synchronous>, transform_indices = @transform_2, window_bounds = array<i64: 9, 256>}, {pipeline_mode = #tpu.pipeline_mode<synchronous>, transform_indices = @transform_3, window_bounds = array<i64: 12, 36>}, {pipeline_mode = #tpu.pipeline_mode<synchronous>, transform_indices = @transform_4, window_bounds = array<i64: 12, 1>}, {pipeline_mode = #tpu.pipeline_mode<synchronous>, transform_indices = @transform_5, window_bounds = array<i64: 12, 1>}, {pipeline_mode = #tpu.pipeline_mode<synchronous>, transform_indices = @transform_6, window_bounds = array<i64: 12, 36>}, {pipeline_mode = #tpu.pipeline_mode<synchronous>, transform_indices = @transform_7, window_bounds = array<i64: 12, 1>}, {pipeline_mode = #tpu.pipeline_mode<synchronous>, transform_indices = @transform_8, window_bounds = array<i64: 12, 1>}, {pipeline_mode = #tpu.pipeline_mode<synchronous>, transform_indices = @transform_9, window_bounds = array<i64: 4, 1>}, {pipeline_mode = #tpu.pipeline_mode<synchronous>, transform_indices = @transform_10, window_bounds = array<i64: 4, 1>}, {pipeline_mode = #tpu.pipeline_mode<synchronous>, transform_indices = @transform_11, window_bounds = array<i64: 4, 1>}, {pipeline_mode = #tpu.pipeline_mode<synchronous>, transform_indices = @transform_12, window_bounds = array<i64: 4, 1>}, {pipeline_mode = #tpu.pipeline_mode<synchronous>, transform_indices = @transform_13, window_bounds = array<i64: 8, 72>}, {pipeline_mode = #tpu.pipeline_mode<synchronous>, transform_indices = @transform_14, window_bounds = array<i64: 8, 1>}, {pipeline_mode = #tpu.pipeline_mode<synchronous>, transform_indices = @transform_15, window_bounds = array<i64: 8, 1>}, {transform_indices = @transform_16, window_bounds = array<i64: 1, 8, 256>}]} {
    %c0 = arith.constant 0 : index
    %c0_0 = arith.constant 0 : index
    %c0_1 = arith.constant 0 : index
    %0 = vector.load %arg1[%c0, %c0_0, %c0_1] : memref<1x4x256xf32, #tpu.memory_space<vmem>>, vector<1x4x256xf32>
    %1 = vector.shape_cast %0 : vector<1x4x256xf32> to vector<4x256xf32>
    %c0_2 = arith.constant 0 : index
    %c0_3 = arith.constant 0 : index
    %c0_4 = arith.constant 0 : index
    %2 = vector.load %arg2[%c0_2, %c0_3, %c0_4] : memref<1x4x256xf32, #tpu.memory_space<vmem>>, vector<1x4x256xf32>
    %3 = vector.shape_cast %2 : vector<1x4x256xf32> to vector<4x256xf32>
    %c0_5 = arith.constant 0 : index
    %c0_6 = arith.constant 0 : index
    %4 = vector.load %arg3[%c0_5, %c0_6] : memref<9x256xf32, #tpu.memory_space<vmem>>, vector<9x256xf32>
    %c0_7 = arith.constant 0 : index
    %c0_8 = arith.constant 0 : index
    %5 = vector.load %arg4[%c0_7, %c0_8] : memref<12x36xf32, #tpu.memory_space<vmem>>, vector<12x36xf32>
    %c17_i32 = arith.constant 17 : i32
    %6 = tpu.dynamic_rotate %1 by %c17_i32 dim 1 : vector<4x256xf32>, i32 -> vector<4x256xf32>
    %7 = vector.extract_strided_slice %4 {offsets = [0, 0], sizes = [1, 256], strides = [1, 1]} : vector<9x256xf32> to vector<1x256xf32>
    %8 = vector.broadcast %7 : vector<1x256xf32> to vector<4x256xf32>
    %9 = arith.mulf %6, %8 : vector<4x256xf32>
    %c16_i32 = arith.constant 16 : i32
    %10 = tpu.dynamic_rotate %1 by %c16_i32 dim 1 : vector<4x256xf32>, i32 -> vector<4x256xf32>
    %11 = vector.extract_strided_slice %4 {offsets = [1, 0], sizes = [1, 256], strides = [1, 1]} : vector<9x256xf32> to vector<1x256xf32>
    %12 = vector.broadcast %11 : vector<1x256xf32> to vector<4x256xf32>
    %13 = arith.mulf %10, %12 : vector<4x256xf32>
    %c15_i32 = arith.constant 15 : i32
    %14 = tpu.dynamic_rotate %1 by %c15_i32 dim 1 : vector<4x256xf32>, i32 -> vector<4x256xf32>
    %15 = vector.extract_strided_slice %4 {offsets = [2, 0], sizes = [1, 256], strides = [1, 1]} : vector<9x256xf32> to vector<1x256xf32>
    %16 = vector.broadcast %15 : vector<1x256xf32> to vector<4x256xf32>
    %17 = arith.mulf %14, %16 : vector<4x256xf32>
    %c1_i32 = arith.constant 1 : i32
    %18 = tpu.dynamic_rotate %1 by %c1_i32 dim 1 : vector<4x256xf32>, i32 -> vector<4x256xf32>
    %19 = vector.extract_strided_slice %4 {offsets = [3, 0], sizes = [1, 256], strides = [1, 1]} : vector<9x256xf32> to vector<1x256xf32>
    %20 = vector.broadcast %19 : vector<1x256xf32> to vector<4x256xf32>
    %21 = arith.mulf %18, %20 : vector<4x256xf32>
    %22 = vector.extract_strided_slice %4 {offsets = [4, 0], sizes = [1, 256], strides = [1, 1]} : vector<9x256xf32> to vector<1x256xf32>
    %23 = vector.broadcast %22 : vector<1x256xf32> to vector<4x256xf32>
    %24 = arith.mulf %1, %23 : vector<4x256xf32>
    %c255_i32 = arith.constant 255 : i32
    %25 = tpu.dynamic_rotate %1 by %c255_i32 dim 1 : vector<4x256xf32>, i32 -> vector<4x256xf32>
    %26 = vector.extract_strided_slice %4 {offsets = [5, 0], sizes = [1, 256], strides = [1, 1]} : vector<9x256xf32> to vector<1x256xf32>
    %27 = vector.broadcast %26 : vector<1x256xf32> to vector<4x256xf32>
    %28 = arith.mulf %25, %27 : vector<4x256xf32>
    %c241_i32 = arith.constant 241 : i32
    %29 = tpu.dynamic_rotate %1 by %c241_i32 dim 1 : vector<4x256xf32>, i32 -> vector<4x256xf32>
    %30 = vector.extract_strided_slice %4 {offsets = [6, 0], sizes = [1, 256], strides = [1, 1]} : vector<9x256xf32> to vector<1x256xf32>
    %31 = vector.broadcast %30 : vector<1x256xf32> to vector<4x256xf32>
    %32 = arith.mulf %29, %31 : vector<4x256xf32>
    %c240_i32 = arith.constant 240 : i32
    %33 = tpu.dynamic_rotate %1 by %c240_i32 dim 1 : vector<4x256xf32>, i32 -> vector<4x256xf32>
    %34 = vector.extract_strided_slice %4 {offsets = [7, 0], sizes = [1, 256], strides = [1, 1]} : vector<9x256xf32> to vector<1x256xf32>
    %35 = vector.broadcast %34 : vector<1x256xf32> to vector<4x256xf32>
    %36 = arith.mulf %33, %35 : vector<4x256xf32>
    %c239_i32 = arith.constant 239 : i32
    %37 = tpu.dynamic_rotate %1 by %c239_i32 dim 1 : vector<4x256xf32>, i32 -> vector<4x256xf32>
    %38 = vector.extract_strided_slice %4 {offsets = [8, 0], sizes = [1, 256], strides = [1, 1]} : vector<9x256xf32> to vector<1x256xf32>
    %39 = vector.broadcast %38 : vector<1x256xf32> to vector<4x256xf32>
    %40 = arith.mulf %37, %39 : vector<4x256xf32>
    %41 = tpu.concatenate %9, %13, %17, %21, %24, %28, %32, %36, %40 in 0 : vector<4x256xf32>, vector<4x256xf32>, vector<4x256xf32>, vector<4x256xf32>, vector<4x256xf32>, vector<4x256xf32>, vector<4x256xf32>, vector<4x256xf32>, vector<4x256xf32> -> vector<36x256xf32>
    %cst = arith.constant dense<0.000000e+00> : vector<12x256xf32>
    %42 = tpu.matmul %5, %41, %cst {dimension_numbers = #tpu.dot_dimension_numbers<[1], [0], [0], [1], [0, 0, 1, 1], [], []>} : vector<12x36xf32>, vector<36x256xf32>, vector<12x256xf32> -> vector<12x256xf32>
    %c0_9 = arith.constant 0 : index
    %c0_10 = arith.constant 0 : index
    %43 = vector.load %arg7[%c0_9, %c0_10] : memref<12x36xf32, #tpu.memory_space<vmem>>, vector<12x36xf32>
    %c17_i32_11 = arith.constant 17 : i32
    %44 = tpu.dynamic_rotate %3 by %c17_i32_11 dim 1 : vector<4x256xf32>, i32 -> vector<4x256xf32>
    %45 = vector.extract_strided_slice %4 {offsets = [0, 0], sizes = [1, 256], strides = [1, 1]} : vector<9x256xf32> to vector<1x256xf32>
    %46 = vector.broadcast %45 : vector<1x256xf32> to vector<4x256xf32>
    %47 = arith.mulf %44, %46 : vector<4x256xf32>
    %c16_i32_12 = arith.constant 16 : i32
    %48 = tpu.dynamic_rotate %3 by %c16_i32_12 dim 1 : vector<4x256xf32>, i32 -> vector<4x256xf32>
    %49 = vector.extract_strided_slice %4 {offsets = [1, 0], sizes = [1, 256], strides = [1, 1]} : vector<9x256xf32> to vector<1x256xf32>
    %50 = vector.broadcast %49 : vector<1x256xf32> to vector<4x256xf32>
    %51 = arith.mulf %48, %50 : vector<4x256xf32>
    %c15_i32_13 = arith.constant 15 : i32
    %52 = tpu.dynamic_rotate %3 by %c15_i32_13 dim 1 : vector<4x256xf32>, i32 -> vector<4x256xf32>
    %53 = vector.extract_strided_slice %4 {offsets = [2, 0], sizes = [1, 256], strides = [1, 1]} : vector<9x256xf32> to vector<1x256xf32>
    %54 = vector.broadcast %53 : vector<1x256xf32> to vector<4x256xf32>
    %55 = arith.mulf %52, %54 : vector<4x256xf32>
    %c1_i32_14 = arith.constant 1 : i32
    %56 = tpu.dynamic_rotate %3 by %c1_i32_14 dim 1 : vector<4x256xf32>, i32 -> vector<4x256xf32>
    %57 = vector.extract_strided_slice %4 {offsets = [3, 0], sizes = [1, 256], strides = [1, 1]} : vector<9x256xf32> to vector<1x256xf32>
    %58 = vector.broadcast %57 : vector<1x256xf32> to vector<4x256xf32>
    %59 = arith.mulf %56, %58 : vector<4x256xf32>
    %60 = vector.extract_strided_slice %4 {offsets = [4, 0], sizes = [1, 256], strides = [1, 1]} : vector<9x256xf32> to vector<1x256xf32>
    %61 = vector.broadcast %60 : vector<1x256xf32> to vector<4x256xf32>
    %62 = arith.mulf %3, %61 : vector<4x256xf32>
    %c255_i32_15 = arith.constant 255 : i32
    %63 = tpu.dynamic_rotate %3 by %c255_i32_15 dim 1 : vector<4x256xf32>, i32 -> vector<4x256xf32>
    %64 = vector.extract_strided_slice %4 {offsets = [5, 0], sizes = [1, 256], strides = [1, 1]} : vector<9x256xf32> to vector<1x256xf32>
    %65 = vector.broadcast %64 : vector<1x256xf32> to vector<4x256xf32>
    %66 = arith.mulf %63, %65 : vector<4x256xf32>
    %c241_i32_16 = arith.constant 241 : i32
    %67 = tpu.dynamic_rotate %3 by %c241_i32_16 dim 1 : vector<4x256xf32>, i32 -> vector<4x256xf32>
    %68 = vector.extract_strided_slice %4 {offsets = [6, 0], sizes = [1, 256], strides = [1, 1]} : vector<9x256xf32> to vector<1x256xf32>
    %69 = vector.broadcast %68 : vector<1x256xf32> to vector<4x256xf32>
    %70 = arith.mulf %67, %69 : vector<4x256xf32>
    %c240_i32_17 = arith.constant 240 : i32
    %71 = tpu.dynamic_rotate %3 by %c240_i32_17 dim 1 : vector<4x256xf32>, i32 -> vector<4x256xf32>
    %72 = vector.extract_strided_slice %4 {offsets = [7, 0], sizes = [1, 256], strides = [1, 1]} : vector<9x256xf32> to vector<1x256xf32>
    %73 = vector.broadcast %72 : vector<1x256xf32> to vector<4x256xf32>
    %74 = arith.mulf %71, %73 : vector<4x256xf32>
    %c239_i32_18 = arith.constant 239 : i32
    %75 = tpu.dynamic_rotate %3 by %c239_i32_18 dim 1 : vector<4x256xf32>, i32 -> vector<4x256xf32>
    %76 = vector.extract_strided_slice %4 {offsets = [8, 0], sizes = [1, 256], strides = [1, 1]} : vector<9x256xf32> to vector<1x256xf32>
    %77 = vector.broadcast %76 : vector<1x256xf32> to vector<4x256xf32>
    %78 = arith.mulf %75, %77 : vector<4x256xf32>
    %79 = tpu.concatenate %47, %51, %55, %59, %62, %66, %70, %74, %78 in 0 : vector<4x256xf32>, vector<4x256xf32>, vector<4x256xf32>, vector<4x256xf32>, vector<4x256xf32>, vector<4x256xf32>, vector<4x256xf32>, vector<4x256xf32>, vector<4x256xf32> -> vector<36x256xf32>
    %cst_19 = arith.constant dense<0.000000e+00> : vector<12x256xf32>
    %80 = tpu.matmul %43, %79, %cst_19 {dimension_numbers = #tpu.dot_dimension_numbers<[1], [0], [0], [1], [0, 0, 1, 1], [], []>} : vector<12x36xf32>, vector<36x256xf32>, vector<12x256xf32> -> vector<12x256xf32>
    %c0_20 = arith.constant 0 : index
    %c0_21 = arith.constant 0 : index
    %81 = vector.load %arg5[%c0_20, %c0_21] : memref<12x1xf32, #tpu.memory_space<vmem>>, vector<12x1xf32>
    %82 = vector.broadcast %81 : vector<12x1xf32> to vector<12x256xf32>
    %83 = arith.mulf %42, %82 : vector<12x256xf32>
    %c0_22 = arith.constant 0 : index
    %c0_23 = arith.constant 0 : index
    %84 = vector.load %arg6[%c0_22, %c0_23] : memref<12x1xf32, #tpu.memory_space<vmem>>, vector<12x1xf32>
    %85 = vector.broadcast %84 : vector<12x1xf32> to vector<12x256xf32>
    %86 = arith.addf %83, %85 : vector<12x256xf32>
    %87 = arith.negf %86 : vector<12x256xf32>
    %88 = math.exp %87 : vector<12x256xf32>
    %cst_24 = arith.constant 1.000000e+00 : f32
    %89 = vector.broadcast %cst_24 : f32 to vector<12x256xf32>
    %90 = arith.addf %89, %88 : vector<12x256xf32>
    %91 = arith.divf %89, %90 : vector<12x256xf32>
    %c0_25 = arith.constant 0 : index
    %c0_26 = arith.constant 0 : index
    %92 = vector.load %arg8[%c0_25, %c0_26] : memref<12x1xf32, #tpu.memory_space<vmem>>, vector<12x1xf32>
    %93 = vector.broadcast %92 : vector<12x1xf32> to vector<12x256xf32>
    %94 = arith.mulf %80, %93 : vector<12x256xf32>
    %c0_27 = arith.constant 0 : index
    %c0_28 = arith.constant 0 : index
    %95 = vector.load %arg9[%c0_27, %c0_28] : memref<12x1xf32, #tpu.memory_space<vmem>>, vector<12x1xf32>
    %96 = vector.broadcast %95 : vector<12x1xf32> to vector<12x256xf32>
    %97 = arith.addf %94, %96 : vector<12x256xf32>
    %98 = arith.negf %97 : vector<12x256xf32>
    %99 = math.exp %98 : vector<12x256xf32>
    %cst_29 = arith.constant 1.000000e+00 : f32
    %100 = vector.broadcast %cst_29 : f32 to vector<12x256xf32>
    %101 = arith.addf %100, %99 : vector<12x256xf32>
    %102 = arith.divf %100, %101 : vector<12x256xf32>
    %103 = vector.extract_strided_slice %91 {offsets = [0, 0], sizes = [4, 256], strides = [1, 1]} : vector<12x256xf32> to vector<4x256xf32>
    %104 = vector.extract_strided_slice %91 {offsets = [4, 0], sizes = [4, 256], strides = [1, 1]} : vector<12x256xf32> to vector<4x256xf32>
    %105 = vector.extract_strided_slice %91 {offsets = [8, 0], sizes = [4, 256], strides = [1, 1]} : vector<12x256xf32> to vector<4x256xf32>
    %106 = vector.extract_strided_slice %102 {offsets = [0, 0], sizes = [4, 256], strides = [1, 1]} : vector<12x256xf32> to vector<4x256xf32>
    %107 = vector.extract_strided_slice %102 {offsets = [4, 0], sizes = [4, 256], strides = [1, 1]} : vector<12x256xf32> to vector<4x256xf32>
    %108 = vector.extract_strided_slice %102 {offsets = [8, 0], sizes = [4, 256], strides = [1, 1]} : vector<12x256xf32> to vector<4x256xf32>
    %109 = arith.mulf %103, %106 : vector<4x256xf32>
    %110 = arith.mulf %103, %103 : vector<4x256xf32>
    %111 = arith.mulf %106, %106 : vector<4x256xf32>
    %cst_30 = arith.constant dense<0.000000e+00> : vector<256xf32>
    %112 = vector.multi_reduction <add>, %109, %cst_30 [0] : vector<4x256xf32> to vector<256xf32>
    %113 = vector.shape_cast %112 : vector<256xf32> to vector<1x256xf32>
    %cst_31 = arith.constant dense<0.000000e+00> : vector<256xf32>
    %114 = vector.multi_reduction <add>, %110, %cst_31 [0] : vector<4x256xf32> to vector<256xf32>
    %115 = vector.shape_cast %114 : vector<256xf32> to vector<1x256xf32>
    %cst_32 = arith.constant dense<0.000000e+00> : vector<256xf32>
    %116 = vector.multi_reduction <add>, %111, %cst_32 [0] : vector<4x256xf32> to vector<256xf32>
    %117 = vector.shape_cast %116 : vector<256xf32> to vector<1x256xf32>
    %cst_33 = arith.constant dense<0.000000e+00> : vector<256xf32>
    %118 = vector.multi_reduction <add>, %103, %cst_33 [0] : vector<4x256xf32> to vector<256xf32>
    %119 = vector.shape_cast %118 : vector<256xf32> to vector<1x256xf32>
    %cst_34 = arith.constant dense<0.000000e+00> : vector<256xf32>
    %120 = vector.multi_reduction <add>, %106, %cst_34 [0] : vector<4x256xf32> to vector<256xf32>
    %121 = vector.shape_cast %120 : vector<256xf32> to vector<1x256xf32>
    %122 = arith.addf %115, %117 : vector<1x256xf32>
    %cst_35 = arith.constant 1.000000e+00 : f32
    %123 = vector.broadcast %cst_35 : f32 to vector<1x256xf32>
    %124 = arith.mulf %123, %122 : vector<1x256xf32>
    %cst_36 = arith.constant -1.000000e+00 : f32
    %125 = vector.broadcast %cst_36 : f32 to vector<1x256xf32>
    %126 = arith.mulf %125, %113 : vector<1x256xf32>
    %127 = arith.addf %124, %126 : vector<1x256xf32>
    %cst_37 = arith.constant 9.99999974E-6 : f32
    %128 = vector.broadcast %cst_37 : f32 to vector<1x256xf32>
    %129 = arith.addf %127, %128 : vector<1x256xf32>
    %cst_38 = arith.constant 1.000000e+00 : f32
    %130 = vector.broadcast %cst_38 : f32 to vector<1x256xf32>
    %131 = arith.divf %130, %129 : vector<1x256xf32>
    %cst_39 = arith.constant 0.000000e+00 : f32
    %132 = vector.broadcast %cst_39 : f32 to vector<1x256xf32>
    %133 = arith.addf %132, %131 : vector<1x256xf32>
    %134 = arith.addf %115, %117 : vector<1x256xf32>
    %cst_40 = arith.constant 2.000000e+00 : f32
    %135 = vector.broadcast %cst_40 : f32 to vector<1x256xf32>
    %136 = arith.mulf %135, %134 : vector<1x256xf32>
    %cst_41 = arith.constant -3.000000e+00 : f32
    %137 = vector.broadcast %cst_41 : f32 to vector<1x256xf32>
    %138 = arith.mulf %137, %113 : vector<1x256xf32>
    %139 = arith.addf %136, %138 : vector<1x256xf32>
    %cst_42 = arith.constant 9.99999974E-6 : f32
    %140 = vector.broadcast %cst_42 : f32 to vector<1x256xf32>
    %141 = arith.addf %139, %140 : vector<1x256xf32>
    %cst_43 = arith.constant 1.000000e+00 : f32
    %142 = vector.broadcast %cst_43 : f32 to vector<1x256xf32>
    %143 = arith.divf %142, %141 : vector<1x256xf32>
    %144 = arith.addf %133, %143 : vector<1x256xf32>
    %145 = arith.addf %115, %117 : vector<1x256xf32>
    %cst_44 = arith.constant 4.000000e+00 : f32
    %146 = vector.broadcast %cst_44 : f32 to vector<1x256xf32>
    %147 = arith.mulf %146, %145 : vector<1x256xf32>
    %cst_45 = arith.constant -7.000000e+00 : f32
    %148 = vector.broadcast %cst_45 : f32 to vector<1x256xf32>
    %149 = arith.mulf %148, %113 : vector<1x256xf32>
    %150 = arith.addf %147, %149 : vector<1x256xf32>
    %cst_46 = arith.constant 9.99999974E-6 : f32
    %151 = vector.broadcast %cst_46 : f32 to vector<1x256xf32>
    %152 = arith.addf %150, %151 : vector<1x256xf32>
    %cst_47 = arith.constant 1.000000e+00 : f32
    %153 = vector.broadcast %cst_47 : f32 to vector<1x256xf32>
    %154 = arith.divf %153, %152 : vector<1x256xf32>
    %155 = arith.addf %144, %154 : vector<1x256xf32>
    %156 = arith.addf %115, %117 : vector<1x256xf32>
    %cst_48 = arith.constant 8.000000e+00 : f32
    %157 = vector.broadcast %cst_48 : f32 to vector<1x256xf32>
    %158 = arith.mulf %157, %156 : vector<1x256xf32>
    %cst_49 = arith.constant -1.500000e+01 : f32
    %159 = vector.broadcast %cst_49 : f32 to vector<1x256xf32>
    %160 = arith.mulf %159, %113 : vector<1x256xf32>
    %161 = arith.addf %158, %160 : vector<1x256xf32>
    %cst_50 = arith.constant 9.99999974E-6 : f32
    %162 = vector.broadcast %cst_50 : f32 to vector<1x256xf32>
    %163 = arith.addf %161, %162 : vector<1x256xf32>
    %cst_51 = arith.constant 1.000000e+00 : f32
    %164 = vector.broadcast %cst_51 : f32 to vector<1x256xf32>
    %165 = arith.divf %164, %163 : vector<1x256xf32>
    %166 = arith.addf %155, %165 : vector<1x256xf32>
    %167 = arith.addf %115, %117 : vector<1x256xf32>
    %cst_52 = arith.constant 1.600000e+01 : f32
    %168 = vector.broadcast %cst_52 : f32 to vector<1x256xf32>
    %169 = arith.mulf %168, %167 : vector<1x256xf32>
    %cst_53 = arith.constant -3.100000e+01 : f32
    %170 = vector.broadcast %cst_53 : f32 to vector<1x256xf32>
    %171 = arith.mulf %170, %113 : vector<1x256xf32>
    %172 = arith.addf %169, %171 : vector<1x256xf32>
    %cst_54 = arith.constant 9.99999974E-6 : f32
    %173 = vector.broadcast %cst_54 : f32 to vector<1x256xf32>
    %174 = arith.addf %172, %173 : vector<1x256xf32>
    %cst_55 = arith.constant 1.000000e+00 : f32
    %175 = vector.broadcast %cst_55 : f32 to vector<1x256xf32>
    %176 = arith.divf %175, %174 : vector<1x256xf32>
    %177 = arith.addf %166, %176 : vector<1x256xf32>
    %cst_56 = arith.constant 9.99999974E-6 : f32
    %178 = vector.broadcast %cst_56 : f32 to vector<1x256xf32>
    %179 = arith.addf %113, %178 : vector<1x256xf32>
    %180 = arith.mulf %179, %177 : vector<1x256xf32>
    %cst_57 = arith.constant 2.000000e-01 : f32
    %181 = vector.broadcast %cst_57 : f32 to vector<1x256xf32>
    %182 = arith.mulf %180, %181 : vector<1x256xf32>
    %cst_58 = arith.constant 4.000000e+00 : f32
    %183 = vector.broadcast %cst_58 : f32 to vector<1x256xf32>
    %184 = arith.subf %183, %119 : vector<1x256xf32>
    %185 = arith.subf %184, %121 : vector<1x256xf32>
    %186 = arith.addf %185, %113 : vector<1x256xf32>
    %cst_59 = arith.constant 2.000000e+00 : f32
    %187 = vector.broadcast %cst_59 : f32 to vector<1x256xf32>
    %188 = arith.mulf %187, %119 : vector<1x256xf32>
    %cst_60 = arith.constant 4.000000e+00 : f32
    %189 = vector.broadcast %cst_60 : f32 to vector<1x256xf32>
    %190 = arith.subf %189, %188 : vector<1x256xf32>
    %191 = arith.addf %190, %115 : vector<1x256xf32>
    %cst_61 = arith.constant 2.000000e+00 : f32
    %192 = vector.broadcast %cst_61 : f32 to vector<1x256xf32>
    %193 = arith.mulf %192, %121 : vector<1x256xf32>
    %cst_62 = arith.constant 4.000000e+00 : f32
    %194 = vector.broadcast %cst_62 : f32 to vector<1x256xf32>
    %195 = arith.subf %194, %193 : vector<1x256xf32>
    %196 = arith.addf %195, %117 : vector<1x256xf32>
    %197 = arith.addf %191, %196 : vector<1x256xf32>
    %cst_63 = arith.constant 1.000000e+00 : f32
    %198 = vector.broadcast %cst_63 : f32 to vector<1x256xf32>
    %199 = arith.mulf %198, %197 : vector<1x256xf32>
    %cst_64 = arith.constant -1.000000e+00 : f32
    %200 = vector.broadcast %cst_64 : f32 to vector<1x256xf32>
    %201 = arith.mulf %200, %186 : vector<1x256xf32>
    %202 = arith.addf %199, %201 : vector<1x256xf32>
    %cst_65 = arith.constant 9.99999974E-6 : f32
    %203 = vector.broadcast %cst_65 : f32 to vector<1x256xf32>
    %204 = arith.addf %202, %203 : vector<1x256xf32>
    %cst_66 = arith.constant 1.000000e+00 : f32
    %205 = vector.broadcast %cst_66 : f32 to vector<1x256xf32>
    %206 = arith.divf %205, %204 : vector<1x256xf32>
    %cst_67 = arith.constant 0.000000e+00 : f32
    %207 = vector.broadcast %cst_67 : f32 to vector<1x256xf32>
    %208 = arith.addf %207, %206 : vector<1x256xf32>
    %209 = arith.addf %191, %196 : vector<1x256xf32>
    %cst_68 = arith.constant 2.000000e+00 : f32
    %210 = vector.broadcast %cst_68 : f32 to vector<1x256xf32>
    %211 = arith.mulf %210, %209 : vector<1x256xf32>
    %cst_69 = arith.constant -3.000000e+00 : f32
    %212 = vector.broadcast %cst_69 : f32 to vector<1x256xf32>
    %213 = arith.mulf %212, %186 : vector<1x256xf32>
    %214 = arith.addf %211, %213 : vector<1x256xf32>
    %cst_70 = arith.constant 9.99999974E-6 : f32
    %215 = vector.broadcast %cst_70 : f32 to vector<1x256xf32>
    %216 = arith.addf %214, %215 : vector<1x256xf32>
    %cst_71 = arith.constant 1.000000e+00 : f32
    %217 = vector.broadcast %cst_71 : f32 to vector<1x256xf32>
    %218 = arith.divf %217, %216 : vector<1x256xf32>
    %219 = arith.addf %208, %218 : vector<1x256xf32>
    %220 = arith.addf %191, %196 : vector<1x256xf32>
    %cst_72 = arith.constant 4.000000e+00 : f32
    %221 = vector.broadcast %cst_72 : f32 to vector<1x256xf32>
    %222 = arith.mulf %221, %220 : vector<1x256xf32>
    %cst_73 = arith.constant -7.000000e+00 : f32
    %223 = vector.broadcast %cst_73 : f32 to vector<1x256xf32>
    %224 = arith.mulf %223, %186 : vector<1x256xf32>
    %225 = arith.addf %222, %224 : vector<1x256xf32>
    %cst_74 = arith.constant 9.99999974E-6 : f32
    %226 = vector.broadcast %cst_74 : f32 to vector<1x256xf32>
    %227 = arith.addf %225, %226 : vector<1x256xf32>
    %cst_75 = arith.constant 1.000000e+00 : f32
    %228 = vector.broadcast %cst_75 : f32 to vector<1x256xf32>
    %229 = arith.divf %228, %227 : vector<1x256xf32>
    %230 = arith.addf %219, %229 : vector<1x256xf32>
    %231 = arith.addf %191, %196 : vector<1x256xf32>
    %cst_76 = arith.constant 8.000000e+00 : f32
    %232 = vector.broadcast %cst_76 : f32 to vector<1x256xf32>
    %233 = arith.mulf %232, %231 : vector<1x256xf32>
    %cst_77 = arith.constant -1.500000e+01 : f32
    %234 = vector.broadcast %cst_77 : f32 to vector<1x256xf32>
    %235 = arith.mulf %234, %186 : vector<1x256xf32>
    %236 = arith.addf %233, %235 : vector<1x256xf32>
    %cst_78 = arith.constant 9.99999974E-6 : f32
    %237 = vector.broadcast %cst_78 : f32 to vector<1x256xf32>
    %238 = arith.addf %236, %237 : vector<1x256xf32>
    %cst_79 = arith.constant 1.000000e+00 : f32
    %239 = vector.broadcast %cst_79 : f32 to vector<1x256xf32>
    %240 = arith.divf %239, %238 : vector<1x256xf32>
    %241 = arith.addf %230, %240 : vector<1x256xf32>
    %242 = arith.addf %191, %196 : vector<1x256xf32>
    %cst_80 = arith.constant 1.600000e+01 : f32
    %243 = vector.broadcast %cst_80 : f32 to vector<1x256xf32>
    %244 = arith.mulf %243, %242 : vector<1x256xf32>
    %cst_81 = arith.constant -3.100000e+01 : f32
    %245 = vector.broadcast %cst_81 : f32 to vector<1x256xf32>
    %246 = arith.mulf %245, %186 : vector<1x256xf32>
    %247 = arith.addf %244, %246 : vector<1x256xf32>
    %cst_82 = arith.constant 9.99999974E-6 : f32
    %248 = vector.broadcast %cst_82 : f32 to vector<1x256xf32>
    %249 = arith.addf %247, %248 : vector<1x256xf32>
    %cst_83 = arith.constant 1.000000e+00 : f32
    %250 = vector.broadcast %cst_83 : f32 to vector<1x256xf32>
    %251 = arith.divf %250, %249 : vector<1x256xf32>
    %252 = arith.addf %241, %251 : vector<1x256xf32>
    %cst_84 = arith.constant 9.99999974E-6 : f32
    %253 = vector.broadcast %cst_84 : f32 to vector<1x256xf32>
    %254 = arith.addf %186, %253 : vector<1x256xf32>
    %255 = arith.mulf %254, %252 : vector<1x256xf32>
    %cst_85 = arith.constant 2.000000e-01 : f32
    %256 = vector.broadcast %cst_85 : f32 to vector<1x256xf32>
    %257 = arith.mulf %255, %256 : vector<1x256xf32>
    %258 = arith.addf %182, %257 : vector<1x256xf32>
    %cst_86 = arith.constant 5.000000e-01 : f32
    %259 = vector.broadcast %cst_86 : f32 to vector<1x256xf32>
    %260 = arith.mulf %259, %258 : vector<1x256xf32>
    %cst_87 = arith.constant dense<0.000000e+00> : vector<4xf32>
    %261 = vector.multi_reduction <add>, %109, %cst_87 [1] : vector<4x256xf32> to vector<4xf32>
    %262 = vector.shape_cast %261 : vector<4xf32> to vector<4x1xf32>
    %cst_88 = arith.constant dense<0.000000e+00> : vector<4xf32>
    %263 = vector.multi_reduction <add>, %110, %cst_88 [1] : vector<4x256xf32> to vector<4xf32>
    %264 = vector.shape_cast %263 : vector<4xf32> to vector<4x1xf32>
    %cst_89 = arith.constant dense<0.000000e+00> : vector<4xf32>
    %265 = vector.multi_reduction <add>, %111, %cst_89 [1] : vector<4x256xf32> to vector<4xf32>
    %266 = vector.shape_cast %265 : vector<4xf32> to vector<4x1xf32>
    %cst_90 = arith.constant dense<0.000000e+00> : vector<4xf32>
    %267 = vector.multi_reduction <add>, %103, %cst_90 [1] : vector<4x256xf32> to vector<4xf32>
    %268 = vector.shape_cast %267 : vector<4xf32> to vector<4x1xf32>
    %cst_91 = arith.constant dense<0.000000e+00> : vector<4xf32>
    %269 = vector.multi_reduction <add>, %106, %cst_91 [1] : vector<4x256xf32> to vector<4xf32>
    %270 = vector.shape_cast %269 : vector<4xf32> to vector<4x1xf32>
    %271 = arith.addf %264, %266 : vector<4x1xf32>
    %cst_92 = arith.constant 1.000000e+00 : f32
    %272 = vector.broadcast %cst_92 : f32 to vector<4x1xf32>
    %273 = arith.mulf %272, %271 : vector<4x1xf32>
    %cst_93 = arith.constant -1.000000e+00 : f32
    %274 = vector.broadcast %cst_93 : f32 to vector<4x1xf32>
    %275 = arith.mulf %274, %262 : vector<4x1xf32>
    %276 = arith.addf %273, %275 : vector<4x1xf32>
    %cst_94 = arith.constant 9.99999974E-6 : f32
    %277 = vector.broadcast %cst_94 : f32 to vector<4x1xf32>
    %278 = arith.addf %276, %277 : vector<4x1xf32>
    %cst_95 = arith.constant 1.000000e+00 : f32
    %279 = vector.broadcast %cst_95 : f32 to vector<4x1xf32>
    %280 = arith.divf %279, %278 : vector<4x1xf32>
    %cst_96 = arith.constant 0.000000e+00 : f32
    %281 = vector.broadcast %cst_96 : f32 to vector<4x1xf32>
    %282 = arith.addf %281, %280 : vector<4x1xf32>
    %283 = arith.addf %264, %266 : vector<4x1xf32>
    %cst_97 = arith.constant 2.000000e+00 : f32
    %284 = vector.broadcast %cst_97 : f32 to vector<4x1xf32>
    %285 = arith.mulf %284, %283 : vector<4x1xf32>
    %cst_98 = arith.constant -3.000000e+00 : f32
    %286 = vector.broadcast %cst_98 : f32 to vector<4x1xf32>
    %287 = arith.mulf %286, %262 : vector<4x1xf32>
    %288 = arith.addf %285, %287 : vector<4x1xf32>
    %cst_99 = arith.constant 9.99999974E-6 : f32
    %289 = vector.broadcast %cst_99 : f32 to vector<4x1xf32>
    %290 = arith.addf %288, %289 : vector<4x1xf32>
    %cst_100 = arith.constant 1.000000e+00 : f32
    %291 = vector.broadcast %cst_100 : f32 to vector<4x1xf32>
    %292 = arith.divf %291, %290 : vector<4x1xf32>
    %293 = arith.addf %282, %292 : vector<4x1xf32>
    %294 = arith.addf %264, %266 : vector<4x1xf32>
    %cst_101 = arith.constant 4.000000e+00 : f32
    %295 = vector.broadcast %cst_101 : f32 to vector<4x1xf32>
    %296 = arith.mulf %295, %294 : vector<4x1xf32>
    %cst_102 = arith.constant -7.000000e+00 : f32
    %297 = vector.broadcast %cst_102 : f32 to vector<4x1xf32>
    %298 = arith.mulf %297, %262 : vector<4x1xf32>
    %299 = arith.addf %296, %298 : vector<4x1xf32>
    %cst_103 = arith.constant 9.99999974E-6 : f32
    %300 = vector.broadcast %cst_103 : f32 to vector<4x1xf32>
    %301 = arith.addf %299, %300 : vector<4x1xf32>
    %cst_104 = arith.constant 1.000000e+00 : f32
    %302 = vector.broadcast %cst_104 : f32 to vector<4x1xf32>
    %303 = arith.divf %302, %301 : vector<4x1xf32>
    %304 = arith.addf %293, %303 : vector<4x1xf32>
    %305 = arith.addf %264, %266 : vector<4x1xf32>
    %cst_105 = arith.constant 8.000000e+00 : f32
    %306 = vector.broadcast %cst_105 : f32 to vector<4x1xf32>
    %307 = arith.mulf %306, %305 : vector<4x1xf32>
    %cst_106 = arith.constant -1.500000e+01 : f32
    %308 = vector.broadcast %cst_106 : f32 to vector<4x1xf32>
    %309 = arith.mulf %308, %262 : vector<4x1xf32>
    %310 = arith.addf %307, %309 : vector<4x1xf32>
    %cst_107 = arith.constant 9.99999974E-6 : f32
    %311 = vector.broadcast %cst_107 : f32 to vector<4x1xf32>
    %312 = arith.addf %310, %311 : vector<4x1xf32>
    %cst_108 = arith.constant 1.000000e+00 : f32
    %313 = vector.broadcast %cst_108 : f32 to vector<4x1xf32>
    %314 = arith.divf %313, %312 : vector<4x1xf32>
    %315 = arith.addf %304, %314 : vector<4x1xf32>
    %316 = arith.addf %264, %266 : vector<4x1xf32>
    %cst_109 = arith.constant 1.600000e+01 : f32
    %317 = vector.broadcast %cst_109 : f32 to vector<4x1xf32>
    %318 = arith.mulf %317, %316 : vector<4x1xf32>
    %cst_110 = arith.constant -3.100000e+01 : f32
    %319 = vector.broadcast %cst_110 : f32 to vector<4x1xf32>
    %320 = arith.mulf %319, %262 : vector<4x1xf32>
    %321 = arith.addf %318, %320 : vector<4x1xf32>
    %cst_111 = arith.constant 9.99999974E-6 : f32
    %322 = vector.broadcast %cst_111 : f32 to vector<4x1xf32>
    %323 = arith.addf %321, %322 : vector<4x1xf32>
    %cst_112 = arith.constant 1.000000e+00 : f32
    %324 = vector.broadcast %cst_112 : f32 to vector<4x1xf32>
    %325 = arith.divf %324, %323 : vector<4x1xf32>
    %326 = arith.addf %315, %325 : vector<4x1xf32>
    %cst_113 = arith.constant 9.99999974E-6 : f32
    %327 = vector.broadcast %cst_113 : f32 to vector<4x1xf32>
    %328 = arith.addf %262, %327 : vector<4x1xf32>
    %329 = arith.mulf %328, %326 : vector<4x1xf32>
    %cst_114 = arith.constant 2.000000e-01 : f32
    %330 = vector.broadcast %cst_114 : f32 to vector<4x1xf32>
    %331 = arith.mulf %329, %330 : vector<4x1xf32>
    %cst_115 = arith.constant 2.560000e+02 : f32
    %332 = vector.broadcast %cst_115 : f32 to vector<4x1xf32>
    %333 = arith.subf %332, %268 : vector<4x1xf32>
    %334 = arith.subf %333, %270 : vector<4x1xf32>
    %335 = arith.addf %334, %262 : vector<4x1xf32>
    %cst_116 = arith.constant 2.000000e+00 : f32
    %336 = vector.broadcast %cst_116 : f32 to vector<4x1xf32>
    %337 = arith.mulf %336, %268 : vector<4x1xf32>
    %cst_117 = arith.constant 2.560000e+02 : f32
    %338 = vector.broadcast %cst_117 : f32 to vector<4x1xf32>
    %339 = arith.subf %338, %337 : vector<4x1xf32>
    %340 = arith.addf %339, %264 : vector<4x1xf32>
    %cst_118 = arith.constant 2.000000e+00 : f32
    %341 = vector.broadcast %cst_118 : f32 to vector<4x1xf32>
    %342 = arith.mulf %341, %270 : vector<4x1xf32>
    %cst_119 = arith.constant 2.560000e+02 : f32
    %343 = vector.broadcast %cst_119 : f32 to vector<4x1xf32>
    %344 = arith.subf %343, %342 : vector<4x1xf32>
    %345 = arith.addf %344, %266 : vector<4x1xf32>
    %346 = arith.addf %340, %345 : vector<4x1xf32>
    %cst_120 = arith.constant 1.000000e+00 : f32
    %347 = vector.broadcast %cst_120 : f32 to vector<4x1xf32>
    %348 = arith.mulf %347, %346 : vector<4x1xf32>
    %cst_121 = arith.constant -1.000000e+00 : f32
    %349 = vector.broadcast %cst_121 : f32 to vector<4x1xf32>
    %350 = arith.mulf %349, %335 : vector<4x1xf32>
    %351 = arith.addf %348, %350 : vector<4x1xf32>
    %cst_122 = arith.constant 9.99999974E-6 : f32
    %352 = vector.broadcast %cst_122 : f32 to vector<4x1xf32>
    %353 = arith.addf %351, %352 : vector<4x1xf32>
    %cst_123 = arith.constant 1.000000e+00 : f32
    %354 = vector.broadcast %cst_123 : f32 to vector<4x1xf32>
    %355 = arith.divf %354, %353 : vector<4x1xf32>
    %cst_124 = arith.constant 0.000000e+00 : f32
    %356 = vector.broadcast %cst_124 : f32 to vector<4x1xf32>
    %357 = arith.addf %356, %355 : vector<4x1xf32>
    %358 = arith.addf %340, %345 : vector<4x1xf32>
    %cst_125 = arith.constant 2.000000e+00 : f32
    %359 = vector.broadcast %cst_125 : f32 to vector<4x1xf32>
    %360 = arith.mulf %359, %358 : vector<4x1xf32>
    %cst_126 = arith.constant -3.000000e+00 : f32
    %361 = vector.broadcast %cst_126 : f32 to vector<4x1xf32>
    %362 = arith.mulf %361, %335 : vector<4x1xf32>
    %363 = arith.addf %360, %362 : vector<4x1xf32>
    %cst_127 = arith.constant 9.99999974E-6 : f32
    %364 = vector.broadcast %cst_127 : f32 to vector<4x1xf32>
    %365 = arith.addf %363, %364 : vector<4x1xf32>
    %cst_128 = arith.constant 1.000000e+00 : f32
    %366 = vector.broadcast %cst_128 : f32 to vector<4x1xf32>
    %367 = arith.divf %366, %365 : vector<4x1xf32>
    %368 = arith.addf %357, %367 : vector<4x1xf32>
    %369 = arith.addf %340, %345 : vector<4x1xf32>
    %cst_129 = arith.constant 4.000000e+00 : f32
    %370 = vector.broadcast %cst_129 : f32 to vector<4x1xf32>
    %371 = arith.mulf %370, %369 : vector<4x1xf32>
    %cst_130 = arith.constant -7.000000e+00 : f32
    %372 = vector.broadcast %cst_130 : f32 to vector<4x1xf32>
    %373 = arith.mulf %372, %335 : vector<4x1xf32>
    %374 = arith.addf %371, %373 : vector<4x1xf32>
    %cst_131 = arith.constant 9.99999974E-6 : f32
    %375 = vector.broadcast %cst_131 : f32 to vector<4x1xf32>
    %376 = arith.addf %374, %375 : vector<4x1xf32>
    %cst_132 = arith.constant 1.000000e+00 : f32
    %377 = vector.broadcast %cst_132 : f32 to vector<4x1xf32>
    %378 = arith.divf %377, %376 : vector<4x1xf32>
    %379 = arith.addf %368, %378 : vector<4x1xf32>
    %380 = arith.addf %340, %345 : vector<4x1xf32>
    %cst_133 = arith.constant 8.000000e+00 : f32
    %381 = vector.broadcast %cst_133 : f32 to vector<4x1xf32>
    %382 = arith.mulf %381, %380 : vector<4x1xf32>
    %cst_134 = arith.constant -1.500000e+01 : f32
    %383 = vector.broadcast %cst_134 : f32 to vector<4x1xf32>
    %384 = arith.mulf %383, %335 : vector<4x1xf32>
    %385 = arith.addf %382, %384 : vector<4x1xf32>
    %cst_135 = arith.constant 9.99999974E-6 : f32
    %386 = vector.broadcast %cst_135 : f32 to vector<4x1xf32>
    %387 = arith.addf %385, %386 : vector<4x1xf32>
    %cst_136 = arith.constant 1.000000e+00 : f32
    %388 = vector.broadcast %cst_136 : f32 to vector<4x1xf32>
    %389 = arith.divf %388, %387 : vector<4x1xf32>
    %390 = arith.addf %379, %389 : vector<4x1xf32>
    %391 = arith.addf %340, %345 : vector<4x1xf32>
    %cst_137 = arith.constant 1.600000e+01 : f32
    %392 = vector.broadcast %cst_137 : f32 to vector<4x1xf32>
    %393 = arith.mulf %392, %391 : vector<4x1xf32>
    %cst_138 = arith.constant -3.100000e+01 : f32
    %394 = vector.broadcast %cst_138 : f32 to vector<4x1xf32>
    %395 = arith.mulf %394, %335 : vector<4x1xf32>
    %396 = arith.addf %393, %395 : vector<4x1xf32>
    %cst_139 = arith.constant 9.99999974E-6 : f32
    %397 = vector.broadcast %cst_139 : f32 to vector<4x1xf32>
    %398 = arith.addf %396, %397 : vector<4x1xf32>
    %cst_140 = arith.constant 1.000000e+00 : f32
    %399 = vector.broadcast %cst_140 : f32 to vector<4x1xf32>
    %400 = arith.divf %399, %398 : vector<4x1xf32>
    %401 = arith.addf %390, %400 : vector<4x1xf32>
    %cst_141 = arith.constant 9.99999974E-6 : f32
    %402 = vector.broadcast %cst_141 : f32 to vector<4x1xf32>
    %403 = arith.addf %335, %402 : vector<4x1xf32>
    %404 = arith.mulf %403, %401 : vector<4x1xf32>
    %cst_142 = arith.constant 2.000000e-01 : f32
    %405 = vector.broadcast %cst_142 : f32 to vector<4x1xf32>
    %406 = arith.mulf %404, %405 : vector<4x1xf32>
    %407 = arith.addf %331, %406 : vector<4x1xf32>
    %cst_143 = arith.constant 5.000000e-01 : f32
    %408 = vector.broadcast %cst_143 : f32 to vector<4x1xf32>
    %409 = arith.mulf %408, %407 : vector<4x1xf32>
    %410 = vector.broadcast %409 : vector<4x1xf32> to vector<4x256xf32>
    %411 = arith.mulf %410, %107 : vector<4x256xf32>
    %cst_144 = arith.constant 5.000000e-01 : f32
    %412 = vector.broadcast %cst_144 : f32 to vector<4x256xf32>
    %413 = arith.mulf %412, %411 : vector<4x256xf32>
    %414 = vector.broadcast %260 : vector<1x256xf32> to vector<4x256xf32>
    %415 = arith.mulf %414, %107 : vector<4x256xf32>
    %416 = arith.mulf %413, %415 : vector<4x256xf32>
    %c0_145 = arith.constant 0 : index
    %c0_146 = arith.constant 0 : index
    %417 = vector.load %arg10[%c0_145, %c0_146] : memref<4x1xf32, #tpu.memory_space<vmem>>, vector<4x1xf32>
    %418 = vector.broadcast %417 : vector<4x1xf32> to vector<4x256xf32>
    %419 = arith.mulf %416, %418 : vector<4x256xf32>
    %c0_147 = arith.constant 0 : index
    %c0_148 = arith.constant 0 : index
    %420 = vector.load %arg11[%c0_147, %c0_148] : memref<4x1xf32, #tpu.memory_space<vmem>>, vector<4x1xf32>
    %421 = vector.broadcast %420 : vector<4x1xf32> to vector<4x256xf32>
    %422 = arith.addf %419, %421 : vector<4x256xf32>
    %423 = arith.mulf %108, %104 : vector<4x256xf32>
    %424 = arith.mulf %108, %108 : vector<4x256xf32>
    %425 = arith.mulf %104, %104 : vector<4x256xf32>
    %cst_149 = arith.constant dense<0.000000e+00> : vector<256xf32>
    %426 = vector.multi_reduction <add>, %423, %cst_149 [0] : vector<4x256xf32> to vector<256xf32>
    %427 = vector.shape_cast %426 : vector<256xf32> to vector<1x256xf32>
    %cst_150 = arith.constant dense<0.000000e+00> : vector<256xf32>
    %428 = vector.multi_reduction <add>, %424, %cst_150 [0] : vector<4x256xf32> to vector<256xf32>
    %429 = vector.shape_cast %428 : vector<256xf32> to vector<1x256xf32>
    %cst_151 = arith.constant dense<0.000000e+00> : vector<256xf32>
    %430 = vector.multi_reduction <add>, %425, %cst_151 [0] : vector<4x256xf32> to vector<256xf32>
    %431 = vector.shape_cast %430 : vector<256xf32> to vector<1x256xf32>
    %cst_152 = arith.constant dense<0.000000e+00> : vector<256xf32>
    %432 = vector.multi_reduction <add>, %108, %cst_152 [0] : vector<4x256xf32> to vector<256xf32>
    %433 = vector.shape_cast %432 : vector<256xf32> to vector<1x256xf32>
    %cst_153 = arith.constant dense<0.000000e+00> : vector<256xf32>
    %434 = vector.multi_reduction <add>, %104, %cst_153 [0] : vector<4x256xf32> to vector<256xf32>
    %435 = vector.shape_cast %434 : vector<256xf32> to vector<1x256xf32>
    %436 = arith.addf %429, %431 : vector<1x256xf32>
    %cst_154 = arith.constant 1.000000e+00 : f32
    %437 = vector.broadcast %cst_154 : f32 to vector<1x256xf32>
    %438 = arith.mulf %437, %436 : vector<1x256xf32>
    %cst_155 = arith.constant -1.000000e+00 : f32
    %439 = vector.broadcast %cst_155 : f32 to vector<1x256xf32>
    %440 = arith.mulf %439, %427 : vector<1x256xf32>
    %441 = arith.addf %438, %440 : vector<1x256xf32>
    %cst_156 = arith.constant 9.99999974E-6 : f32
    %442 = vector.broadcast %cst_156 : f32 to vector<1x256xf32>
    %443 = arith.addf %441, %442 : vector<1x256xf32>
    %cst_157 = arith.constant 1.000000e+00 : f32
    %444 = vector.broadcast %cst_157 : f32 to vector<1x256xf32>
    %445 = arith.divf %444, %443 : vector<1x256xf32>
    %cst_158 = arith.constant 0.000000e+00 : f32
    %446 = vector.broadcast %cst_158 : f32 to vector<1x256xf32>
    %447 = arith.addf %446, %445 : vector<1x256xf32>
    %448 = arith.addf %429, %431 : vector<1x256xf32>
    %cst_159 = arith.constant 2.000000e+00 : f32
    %449 = vector.broadcast %cst_159 : f32 to vector<1x256xf32>
    %450 = arith.mulf %449, %448 : vector<1x256xf32>
    %cst_160 = arith.constant -3.000000e+00 : f32
    %451 = vector.broadcast %cst_160 : f32 to vector<1x256xf32>
    %452 = arith.mulf %451, %427 : vector<1x256xf32>
    %453 = arith.addf %450, %452 : vector<1x256xf32>
    %cst_161 = arith.constant 9.99999974E-6 : f32
    %454 = vector.broadcast %cst_161 : f32 to vector<1x256xf32>
    %455 = arith.addf %453, %454 : vector<1x256xf32>
    %cst_162 = arith.constant 1.000000e+00 : f32
    %456 = vector.broadcast %cst_162 : f32 to vector<1x256xf32>
    %457 = arith.divf %456, %455 : vector<1x256xf32>
    %458 = arith.addf %447, %457 : vector<1x256xf32>
    %459 = arith.addf %429, %431 : vector<1x256xf32>
    %cst_163 = arith.constant 4.000000e+00 : f32
    %460 = vector.broadcast %cst_163 : f32 to vector<1x256xf32>
    %461 = arith.mulf %460, %459 : vector<1x256xf32>
    %cst_164 = arith.constant -7.000000e+00 : f32
    %462 = vector.broadcast %cst_164 : f32 to vector<1x256xf32>
    %463 = arith.mulf %462, %427 : vector<1x256xf32>
    %464 = arith.addf %461, %463 : vector<1x256xf32>
    %cst_165 = arith.constant 9.99999974E-6 : f32
    %465 = vector.broadcast %cst_165 : f32 to vector<1x256xf32>
    %466 = arith.addf %464, %465 : vector<1x256xf32>
    %cst_166 = arith.constant 1.000000e+00 : f32
    %467 = vector.broadcast %cst_166 : f32 to vector<1x256xf32>
    %468 = arith.divf %467, %466 : vector<1x256xf32>
    %469 = arith.addf %458, %468 : vector<1x256xf32>
    %470 = arith.addf %429, %431 : vector<1x256xf32>
    %cst_167 = arith.constant 8.000000e+00 : f32
    %471 = vector.broadcast %cst_167 : f32 to vector<1x256xf32>
    %472 = arith.mulf %471, %470 : vector<1x256xf32>
    %cst_168 = arith.constant -1.500000e+01 : f32
    %473 = vector.broadcast %cst_168 : f32 to vector<1x256xf32>
    %474 = arith.mulf %473, %427 : vector<1x256xf32>
    %475 = arith.addf %472, %474 : vector<1x256xf32>
    %cst_169 = arith.constant 9.99999974E-6 : f32
    %476 = vector.broadcast %cst_169 : f32 to vector<1x256xf32>
    %477 = arith.addf %475, %476 : vector<1x256xf32>
    %cst_170 = arith.constant 1.000000e+00 : f32
    %478 = vector.broadcast %cst_170 : f32 to vector<1x256xf32>
    %479 = arith.divf %478, %477 : vector<1x256xf32>
    %480 = arith.addf %469, %479 : vector<1x256xf32>
    %481 = arith.addf %429, %431 : vector<1x256xf32>
    %cst_171 = arith.constant 1.600000e+01 : f32
    %482 = vector.broadcast %cst_171 : f32 to vector<1x256xf32>
    %483 = arith.mulf %482, %481 : vector<1x256xf32>
    %cst_172 = arith.constant -3.100000e+01 : f32
    %484 = vector.broadcast %cst_172 : f32 to vector<1x256xf32>
    %485 = arith.mulf %484, %427 : vector<1x256xf32>
    %486 = arith.addf %483, %485 : vector<1x256xf32>
    %cst_173 = arith.constant 9.99999974E-6 : f32
    %487 = vector.broadcast %cst_173 : f32 to vector<1x256xf32>
    %488 = arith.addf %486, %487 : vector<1x256xf32>
    %cst_174 = arith.constant 1.000000e+00 : f32
    %489 = vector.broadcast %cst_174 : f32 to vector<1x256xf32>
    %490 = arith.divf %489, %488 : vector<1x256xf32>
    %491 = arith.addf %480, %490 : vector<1x256xf32>
    %cst_175 = arith.constant 9.99999974E-6 : f32
    %492 = vector.broadcast %cst_175 : f32 to vector<1x256xf32>
    %493 = arith.addf %427, %492 : vector<1x256xf32>
    %494 = arith.mulf %493, %491 : vector<1x256xf32>
    %cst_176 = arith.constant 2.000000e-01 : f32
    %495 = vector.broadcast %cst_176 : f32 to vector<1x256xf32>
    %496 = arith.mulf %494, %495 : vector<1x256xf32>
    %cst_177 = arith.constant 4.000000e+00 : f32
    %497 = vector.broadcast %cst_177 : f32 to vector<1x256xf32>
    %498 = arith.subf %497, %433 : vector<1x256xf32>
    %499 = arith.subf %498, %435 : vector<1x256xf32>
    %500 = arith.addf %499, %427 : vector<1x256xf32>
    %cst_178 = arith.constant 2.000000e+00 : f32
    %501 = vector.broadcast %cst_178 : f32 to vector<1x256xf32>
    %502 = arith.mulf %501, %433 : vector<1x256xf32>
    %cst_179 = arith.constant 4.000000e+00 : f32
    %503 = vector.broadcast %cst_179 : f32 to vector<1x256xf32>
    %504 = arith.subf %503, %502 : vector<1x256xf32>
    %505 = arith.addf %504, %429 : vector<1x256xf32>
    %cst_180 = arith.constant 2.000000e+00 : f32
    %506 = vector.broadcast %cst_180 : f32 to vector<1x256xf32>
    %507 = arith.mulf %506, %435 : vector<1x256xf32>
    %cst_181 = arith.constant 4.000000e+00 : f32
    %508 = vector.broadcast %cst_181 : f32 to vector<1x256xf32>
    %509 = arith.subf %508, %507 : vector<1x256xf32>
    %510 = arith.addf %509, %431 : vector<1x256xf32>
    %511 = arith.addf %505, %510 : vector<1x256xf32>
    %cst_182 = arith.constant 1.000000e+00 : f32
    %512 = vector.broadcast %cst_182 : f32 to vector<1x256xf32>
    %513 = arith.mulf %512, %511 : vector<1x256xf32>
    %cst_183 = arith.constant -1.000000e+00 : f32
    %514 = vector.broadcast %cst_183 : f32 to vector<1x256xf32>
    %515 = arith.mulf %514, %500 : vector<1x256xf32>
    %516 = arith.addf %513, %515 : vector<1x256xf32>
    %cst_184 = arith.constant 9.99999974E-6 : f32
    %517 = vector.broadcast %cst_184 : f32 to vector<1x256xf32>
    %518 = arith.addf %516, %517 : vector<1x256xf32>
    %cst_185 = arith.constant 1.000000e+00 : f32
    %519 = vector.broadcast %cst_185 : f32 to vector<1x256xf32>
    %520 = arith.divf %519, %518 : vector<1x256xf32>
    %cst_186 = arith.constant 0.000000e+00 : f32
    %521 = vector.broadcast %cst_186 : f32 to vector<1x256xf32>
    %522 = arith.addf %521, %520 : vector<1x256xf32>
    %523 = arith.addf %505, %510 : vector<1x256xf32>
    %cst_187 = arith.constant 2.000000e+00 : f32
    %524 = vector.broadcast %cst_187 : f32 to vector<1x256xf32>
    %525 = arith.mulf %524, %523 : vector<1x256xf32>
    %cst_188 = arith.constant -3.000000e+00 : f32
    %526 = vector.broadcast %cst_188 : f32 to vector<1x256xf32>
    %527 = arith.mulf %526, %500 : vector<1x256xf32>
    %528 = arith.addf %525, %527 : vector<1x256xf32>
    %cst_189 = arith.constant 9.99999974E-6 : f32
    %529 = vector.broadcast %cst_189 : f32 to vector<1x256xf32>
    %530 = arith.addf %528, %529 : vector<1x256xf32>
    %cst_190 = arith.constant 1.000000e+00 : f32
    %531 = vector.broadcast %cst_190 : f32 to vector<1x256xf32>
    %532 = arith.divf %531, %530 : vector<1x256xf32>
    %533 = arith.addf %522, %532 : vector<1x256xf32>
    %534 = arith.addf %505, %510 : vector<1x256xf32>
    %cst_191 = arith.constant 4.000000e+00 : f32
    %535 = vector.broadcast %cst_191 : f32 to vector<1x256xf32>
    %536 = arith.mulf %535, %534 : vector<1x256xf32>
    %cst_192 = arith.constant -7.000000e+00 : f32
    %537 = vector.broadcast %cst_192 : f32 to vector<1x256xf32>
    %538 = arith.mulf %537, %500 : vector<1x256xf32>
    %539 = arith.addf %536, %538 : vector<1x256xf32>
    %cst_193 = arith.constant 9.99999974E-6 : f32
    %540 = vector.broadcast %cst_193 : f32 to vector<1x256xf32>
    %541 = arith.addf %539, %540 : vector<1x256xf32>
    %cst_194 = arith.constant 1.000000e+00 : f32
    %542 = vector.broadcast %cst_194 : f32 to vector<1x256xf32>
    %543 = arith.divf %542, %541 : vector<1x256xf32>
    %544 = arith.addf %533, %543 : vector<1x256xf32>
    %545 = arith.addf %505, %510 : vector<1x256xf32>
    %cst_195 = arith.constant 8.000000e+00 : f32
    %546 = vector.broadcast %cst_195 : f32 to vector<1x256xf32>
    %547 = arith.mulf %546, %545 : vector<1x256xf32>
    %cst_196 = arith.constant -1.500000e+01 : f32
    %548 = vector.broadcast %cst_196 : f32 to vector<1x256xf32>
    %549 = arith.mulf %548, %500 : vector<1x256xf32>
    %550 = arith.addf %547, %549 : vector<1x256xf32>
    %cst_197 = arith.constant 9.99999974E-6 : f32
    %551 = vector.broadcast %cst_197 : f32 to vector<1x256xf32>
    %552 = arith.addf %550, %551 : vector<1x256xf32>
    %cst_198 = arith.constant 1.000000e+00 : f32
    %553 = vector.broadcast %cst_198 : f32 to vector<1x256xf32>
    %554 = arith.divf %553, %552 : vector<1x256xf32>
    %555 = arith.addf %544, %554 : vector<1x256xf32>
    %556 = arith.addf %505, %510 : vector<1x256xf32>
    %cst_199 = arith.constant 1.600000e+01 : f32
    %557 = vector.broadcast %cst_199 : f32 to vector<1x256xf32>
    %558 = arith.mulf %557, %556 : vector<1x256xf32>
    %cst_200 = arith.constant -3.100000e+01 : f32
    %559 = vector.broadcast %cst_200 : f32 to vector<1x256xf32>
    %560 = arith.mulf %559, %500 : vector<1x256xf32>
    %561 = arith.addf %558, %560 : vector<1x256xf32>
    %cst_201 = arith.constant 9.99999974E-6 : f32
    %562 = vector.broadcast %cst_201 : f32 to vector<1x256xf32>
    %563 = arith.addf %561, %562 : vector<1x256xf32>
    %cst_202 = arith.constant 1.000000e+00 : f32
    %564 = vector.broadcast %cst_202 : f32 to vector<1x256xf32>
    %565 = arith.divf %564, %563 : vector<1x256xf32>
    %566 = arith.addf %555, %565 : vector<1x256xf32>
    %cst_203 = arith.constant 9.99999974E-6 : f32
    %567 = vector.broadcast %cst_203 : f32 to vector<1x256xf32>
    %568 = arith.addf %500, %567 : vector<1x256xf32>
    %569 = arith.mulf %568, %566 : vector<1x256xf32>
    %cst_204 = arith.constant 2.000000e-01 : f32
    %570 = vector.broadcast %cst_204 : f32 to vector<1x256xf32>
    %571 = arith.mulf %569, %570 : vector<1x256xf32>
    %572 = arith.addf %496, %571 : vector<1x256xf32>
    %cst_205 = arith.constant 5.000000e-01 : f32
    %573 = vector.broadcast %cst_205 : f32 to vector<1x256xf32>
    %574 = arith.mulf %573, %572 : vector<1x256xf32>
    %cst_206 = arith.constant dense<0.000000e+00> : vector<4xf32>
    %575 = vector.multi_reduction <add>, %423, %cst_206 [1] : vector<4x256xf32> to vector<4xf32>
    %576 = vector.shape_cast %575 : vector<4xf32> to vector<4x1xf32>
    %cst_207 = arith.constant dense<0.000000e+00> : vector<4xf32>
    %577 = vector.multi_reduction <add>, %424, %cst_207 [1] : vector<4x256xf32> to vector<4xf32>
    %578 = vector.shape_cast %577 : vector<4xf32> to vector<4x1xf32>
    %cst_208 = arith.constant dense<0.000000e+00> : vector<4xf32>
    %579 = vector.multi_reduction <add>, %425, %cst_208 [1] : vector<4x256xf32> to vector<4xf32>
    %580 = vector.shape_cast %579 : vector<4xf32> to vector<4x1xf32>
    %cst_209 = arith.constant dense<0.000000e+00> : vector<4xf32>
    %581 = vector.multi_reduction <add>, %108, %cst_209 [1] : vector<4x256xf32> to vector<4xf32>
    %582 = vector.shape_cast %581 : vector<4xf32> to vector<4x1xf32>
    %cst_210 = arith.constant dense<0.000000e+00> : vector<4xf32>
    %583 = vector.multi_reduction <add>, %104, %cst_210 [1] : vector<4x256xf32> to vector<4xf32>
    %584 = vector.shape_cast %583 : vector<4xf32> to vector<4x1xf32>
    %585 = arith.addf %578, %580 : vector<4x1xf32>
    %cst_211 = arith.constant 1.000000e+00 : f32
    %586 = vector.broadcast %cst_211 : f32 to vector<4x1xf32>
    %587 = arith.mulf %586, %585 : vector<4x1xf32>
    %cst_212 = arith.constant -1.000000e+00 : f32
    %588 = vector.broadcast %cst_212 : f32 to vector<4x1xf32>
    %589 = arith.mulf %588, %576 : vector<4x1xf32>
    %590 = arith.addf %587, %589 : vector<4x1xf32>
    %cst_213 = arith.constant 9.99999974E-6 : f32
    %591 = vector.broadcast %cst_213 : f32 to vector<4x1xf32>
    %592 = arith.addf %590, %591 : vector<4x1xf32>
    %cst_214 = arith.constant 1.000000e+00 : f32
    %593 = vector.broadcast %cst_214 : f32 to vector<4x1xf32>
    %594 = arith.divf %593, %592 : vector<4x1xf32>
    %cst_215 = arith.constant 0.000000e+00 : f32
    %595 = vector.broadcast %cst_215 : f32 to vector<4x1xf32>
    %596 = arith.addf %595, %594 : vector<4x1xf32>
    %597 = arith.addf %578, %580 : vector<4x1xf32>
    %cst_216 = arith.constant 2.000000e+00 : f32
    %598 = vector.broadcast %cst_216 : f32 to vector<4x1xf32>
    %599 = arith.mulf %598, %597 : vector<4x1xf32>
    %cst_217 = arith.constant -3.000000e+00 : f32
    %600 = vector.broadcast %cst_217 : f32 to vector<4x1xf32>
    %601 = arith.mulf %600, %576 : vector<4x1xf32>
    %602 = arith.addf %599, %601 : vector<4x1xf32>
    %cst_218 = arith.constant 9.99999974E-6 : f32
    %603 = vector.broadcast %cst_218 : f32 to vector<4x1xf32>
    %604 = arith.addf %602, %603 : vector<4x1xf32>
    %cst_219 = arith.constant 1.000000e+00 : f32
    %605 = vector.broadcast %cst_219 : f32 to vector<4x1xf32>
    %606 = arith.divf %605, %604 : vector<4x1xf32>
    %607 = arith.addf %596, %606 : vector<4x1xf32>
    %608 = arith.addf %578, %580 : vector<4x1xf32>
    %cst_220 = arith.constant 4.000000e+00 : f32
    %609 = vector.broadcast %cst_220 : f32 to vector<4x1xf32>
    %610 = arith.mulf %609, %608 : vector<4x1xf32>
    %cst_221 = arith.constant -7.000000e+00 : f32
    %611 = vector.broadcast %cst_221 : f32 to vector<4x1xf32>
    %612 = arith.mulf %611, %576 : vector<4x1xf32>
    %613 = arith.addf %610, %612 : vector<4x1xf32>
    %cst_222 = arith.constant 9.99999974E-6 : f32
    %614 = vector.broadcast %cst_222 : f32 to vector<4x1xf32>
    %615 = arith.addf %613, %614 : vector<4x1xf32>
    %cst_223 = arith.constant 1.000000e+00 : f32
    %616 = vector.broadcast %cst_223 : f32 to vector<4x1xf32>
    %617 = arith.divf %616, %615 : vector<4x1xf32>
    %618 = arith.addf %607, %617 : vector<4x1xf32>
    %619 = arith.addf %578, %580 : vector<4x1xf32>
    %cst_224 = arith.constant 8.000000e+00 : f32
    %620 = vector.broadcast %cst_224 : f32 to vector<4x1xf32>
    %621 = arith.mulf %620, %619 : vector<4x1xf32>
    %cst_225 = arith.constant -1.500000e+01 : f32
    %622 = vector.broadcast %cst_225 : f32 to vector<4x1xf32>
    %623 = arith.mulf %622, %576 : vector<4x1xf32>
    %624 = arith.addf %621, %623 : vector<4x1xf32>
    %cst_226 = arith.constant 9.99999974E-6 : f32
    %625 = vector.broadcast %cst_226 : f32 to vector<4x1xf32>
    %626 = arith.addf %624, %625 : vector<4x1xf32>
    %cst_227 = arith.constant 1.000000e+00 : f32
    %627 = vector.broadcast %cst_227 : f32 to vector<4x1xf32>
    %628 = arith.divf %627, %626 : vector<4x1xf32>
    %629 = arith.addf %618, %628 : vector<4x1xf32>
    %630 = arith.addf %578, %580 : vector<4x1xf32>
    %cst_228 = arith.constant 1.600000e+01 : f32
    %631 = vector.broadcast %cst_228 : f32 to vector<4x1xf32>
    %632 = arith.mulf %631, %630 : vector<4x1xf32>
    %cst_229 = arith.constant -3.100000e+01 : f32
    %633 = vector.broadcast %cst_229 : f32 to vector<4x1xf32>
    %634 = arith.mulf %633, %576 : vector<4x1xf32>
    %635 = arith.addf %632, %634 : vector<4x1xf32>
    %cst_230 = arith.constant 9.99999974E-6 : f32
    %636 = vector.broadcast %cst_230 : f32 to vector<4x1xf32>
    %637 = arith.addf %635, %636 : vector<4x1xf32>
    %cst_231 = arith.constant 1.000000e+00 : f32
    %638 = vector.broadcast %cst_231 : f32 to vector<4x1xf32>
    %639 = arith.divf %638, %637 : vector<4x1xf32>
    %640 = arith.addf %629, %639 : vector<4x1xf32>
    %cst_232 = arith.constant 9.99999974E-6 : f32
    %641 = vector.broadcast %cst_232 : f32 to vector<4x1xf32>
    %642 = arith.addf %576, %641 : vector<4x1xf32>
    %643 = arith.mulf %642, %640 : vector<4x1xf32>
    %cst_233 = arith.constant 2.000000e-01 : f32
    %644 = vector.broadcast %cst_233 : f32 to vector<4x1xf32>
    %645 = arith.mulf %643, %644 : vector<4x1xf32>
    %cst_234 = arith.constant 2.560000e+02 : f32
    %646 = vector.broadcast %cst_234 : f32 to vector<4x1xf32>
    %647 = arith.subf %646, %582 : vector<4x1xf32>
    %648 = arith.subf %647, %584 : vector<4x1xf32>
    %649 = arith.addf %648, %576 : vector<4x1xf32>
    %cst_235 = arith.constant 2.000000e+00 : f32
    %650 = vector.broadcast %cst_235 : f32 to vector<4x1xf32>
    %651 = arith.mulf %650, %582 : vector<4x1xf32>
    %cst_236 = arith.constant 2.560000e+02 : f32
    %652 = vector.broadcast %cst_236 : f32 to vector<4x1xf32>
    %653 = arith.subf %652, %651 : vector<4x1xf32>
    %654 = arith.addf %653, %578 : vector<4x1xf32>
    %cst_237 = arith.constant 2.000000e+00 : f32
    %655 = vector.broadcast %cst_237 : f32 to vector<4x1xf32>
    %656 = arith.mulf %655, %584 : vector<4x1xf32>
    %cst_238 = arith.constant 2.560000e+02 : f32
    %657 = vector.broadcast %cst_238 : f32 to vector<4x1xf32>
    %658 = arith.subf %657, %656 : vector<4x1xf32>
    %659 = arith.addf %658, %580 : vector<4x1xf32>
    %660 = arith.addf %654, %659 : vector<4x1xf32>
    %cst_239 = arith.constant 1.000000e+00 : f32
    %661 = vector.broadcast %cst_239 : f32 to vector<4x1xf32>
    %662 = arith.mulf %661, %660 : vector<4x1xf32>
    %cst_240 = arith.constant -1.000000e+00 : f32
    %663 = vector.broadcast %cst_240 : f32 to vector<4x1xf32>
    %664 = arith.mulf %663, %649 : vector<4x1xf32>
    %665 = arith.addf %662, %664 : vector<4x1xf32>
    %cst_241 = arith.constant 9.99999974E-6 : f32
    %666 = vector.broadcast %cst_241 : f32 to vector<4x1xf32>
    %667 = arith.addf %665, %666 : vector<4x1xf32>
    %cst_242 = arith.constant 1.000000e+00 : f32
    %668 = vector.broadcast %cst_242 : f32 to vector<4x1xf32>
    %669 = arith.divf %668, %667 : vector<4x1xf32>
    %cst_243 = arith.constant 0.000000e+00 : f32
    %670 = vector.broadcast %cst_243 : f32 to vector<4x1xf32>
    %671 = arith.addf %670, %669 : vector<4x1xf32>
    %672 = arith.addf %654, %659 : vector<4x1xf32>
    %cst_244 = arith.constant 2.000000e+00 : f32
    %673 = vector.broadcast %cst_244 : f32 to vector<4x1xf32>
    %674 = arith.mulf %673, %672 : vector<4x1xf32>
    %cst_245 = arith.constant -3.000000e+00 : f32
    %675 = vector.broadcast %cst_245 : f32 to vector<4x1xf32>
    %676 = arith.mulf %675, %649 : vector<4x1xf32>
    %677 = arith.addf %674, %676 : vector<4x1xf32>
    %cst_246 = arith.constant 9.99999974E-6 : f32
    %678 = vector.broadcast %cst_246 : f32 to vector<4x1xf32>
    %679 = arith.addf %677, %678 : vector<4x1xf32>
    %cst_247 = arith.constant 1.000000e+00 : f32
    %680 = vector.broadcast %cst_247 : f32 to vector<4x1xf32>
    %681 = arith.divf %680, %679 : vector<4x1xf32>
    %682 = arith.addf %671, %681 : vector<4x1xf32>
    %683 = arith.addf %654, %659 : vector<4x1xf32>
    %cst_248 = arith.constant 4.000000e+00 : f32
    %684 = vector.broadcast %cst_248 : f32 to vector<4x1xf32>
    %685 = arith.mulf %684, %683 : vector<4x1xf32>
    %cst_249 = arith.constant -7.000000e+00 : f32
    %686 = vector.broadcast %cst_249 : f32 to vector<4x1xf32>
    %687 = arith.mulf %686, %649 : vector<4x1xf32>
    %688 = arith.addf %685, %687 : vector<4x1xf32>
    %cst_250 = arith.constant 9.99999974E-6 : f32
    %689 = vector.broadcast %cst_250 : f32 to vector<4x1xf32>
    %690 = arith.addf %688, %689 : vector<4x1xf32>
    %cst_251 = arith.constant 1.000000e+00 : f32
    %691 = vector.broadcast %cst_251 : f32 to vector<4x1xf32>
    %692 = arith.divf %691, %690 : vector<4x1xf32>
    %693 = arith.addf %682, %692 : vector<4x1xf32>
    %694 = arith.addf %654, %659 : vector<4x1xf32>
    %cst_252 = arith.constant 8.000000e+00 : f32
    %695 = vector.broadcast %cst_252 : f32 to vector<4x1xf32>
    %696 = arith.mulf %695, %694 : vector<4x1xf32>
    %cst_253 = arith.constant -1.500000e+01 : f32
    %697 = vector.broadcast %cst_253 : f32 to vector<4x1xf32>
    %698 = arith.mulf %697, %649 : vector<4x1xf32>
    %699 = arith.addf %696, %698 : vector<4x1xf32>
    %cst_254 = arith.constant 9.99999974E-6 : f32
    %700 = vector.broadcast %cst_254 : f32 to vector<4x1xf32>
    %701 = arith.addf %699, %700 : vector<4x1xf32>
    %cst_255 = arith.constant 1.000000e+00 : f32
    %702 = vector.broadcast %cst_255 : f32 to vector<4x1xf32>
    %703 = arith.divf %702, %701 : vector<4x1xf32>
    %704 = arith.addf %693, %703 : vector<4x1xf32>
    %705 = arith.addf %654, %659 : vector<4x1xf32>
    %cst_256 = arith.constant 1.600000e+01 : f32
    %706 = vector.broadcast %cst_256 : f32 to vector<4x1xf32>
    %707 = arith.mulf %706, %705 : vector<4x1xf32>
    %cst_257 = arith.constant -3.100000e+01 : f32
    %708 = vector.broadcast %cst_257 : f32 to vector<4x1xf32>
    %709 = arith.mulf %708, %649 : vector<4x1xf32>
    %710 = arith.addf %707, %709 : vector<4x1xf32>
    %cst_258 = arith.constant 9.99999974E-6 : f32
    %711 = vector.broadcast %cst_258 : f32 to vector<4x1xf32>
    %712 = arith.addf %710, %711 : vector<4x1xf32>
    %cst_259 = arith.constant 1.000000e+00 : f32
    %713 = vector.broadcast %cst_259 : f32 to vector<4x1xf32>
    %714 = arith.divf %713, %712 : vector<4x1xf32>
    %715 = arith.addf %704, %714 : vector<4x1xf32>
    %cst_260 = arith.constant 9.99999974E-6 : f32
    %716 = vector.broadcast %cst_260 : f32 to vector<4x1xf32>
    %717 = arith.addf %649, %716 : vector<4x1xf32>
    %718 = arith.mulf %717, %715 : vector<4x1xf32>
    %cst_261 = arith.constant 2.000000e-01 : f32
    %719 = vector.broadcast %cst_261 : f32 to vector<4x1xf32>
    %720 = arith.mulf %718, %719 : vector<4x1xf32>
    %721 = arith.addf %645, %720 : vector<4x1xf32>
    %cst_262 = arith.constant 5.000000e-01 : f32
    %722 = vector.broadcast %cst_262 : f32 to vector<4x1xf32>
    %723 = arith.mulf %722, %721 : vector<4x1xf32>
    %724 = vector.broadcast %723 : vector<4x1xf32> to vector<4x256xf32>
    %725 = arith.mulf %724, %105 : vector<4x256xf32>
    %cst_263 = arith.constant 5.000000e-01 : f32
    %726 = vector.broadcast %cst_263 : f32 to vector<4x256xf32>
    %727 = arith.mulf %726, %725 : vector<4x256xf32>
    %728 = vector.broadcast %574 : vector<1x256xf32> to vector<4x256xf32>
    %729 = arith.mulf %728, %105 : vector<4x256xf32>
    %730 = arith.mulf %727, %729 : vector<4x256xf32>
    %c0_264 = arith.constant 0 : index
    %c0_265 = arith.constant 0 : index
    %731 = vector.load %arg12[%c0_264, %c0_265] : memref<4x1xf32, #tpu.memory_space<vmem>>, vector<4x1xf32>
    %732 = vector.broadcast %731 : vector<4x1xf32> to vector<4x256xf32>
    %733 = arith.mulf %730, %732 : vector<4x256xf32>
    %c0_266 = arith.constant 0 : index
    %c0_267 = arith.constant 0 : index
    %734 = vector.load %arg13[%c0_266, %c0_267] : memref<4x1xf32, #tpu.memory_space<vmem>>, vector<4x1xf32>
    %735 = vector.broadcast %734 : vector<4x1xf32> to vector<4x256xf32>
    %736 = arith.addf %733, %735 : vector<4x256xf32>
    %cst_268 = arith.constant 1.000000e+00 : f32
    %737 = vector.broadcast %cst_268 : f32 to vector<4x256xf32>
    %738 = arith.addf %737, %422 : vector<4x256xf32>
    %739 = arith.mulf %1, %738 : vector<4x256xf32>
    %cst_269 = arith.constant 1.000000e+00 : f32
    %740 = vector.broadcast %cst_269 : f32 to vector<4x256xf32>
    %741 = arith.addf %740, %736 : vector<4x256xf32>
    %742 = arith.mulf %3, %741 : vector<4x256xf32>
    %c17_i32_270 = arith.constant 17 : i32
    %743 = tpu.dynamic_rotate %739 by %c17_i32_270 dim 1 : vector<4x256xf32>, i32 -> vector<4x256xf32>
    %744 = vector.extract_strided_slice %4 {offsets = [0, 0], sizes = [1, 256], strides = [1, 1]} : vector<9x256xf32> to vector<1x256xf32>
    %745 = vector.broadcast %744 : vector<1x256xf32> to vector<4x256xf32>
    %746 = arith.mulf %743, %745 : vector<4x256xf32>
    %c16_i32_271 = arith.constant 16 : i32
    %747 = tpu.dynamic_rotate %739 by %c16_i32_271 dim 1 : vector<4x256xf32>, i32 -> vector<4x256xf32>
    %748 = vector.extract_strided_slice %4 {offsets = [1, 0], sizes = [1, 256], strides = [1, 1]} : vector<9x256xf32> to vector<1x256xf32>
    %749 = vector.broadcast %748 : vector<1x256xf32> to vector<4x256xf32>
    %750 = arith.mulf %747, %749 : vector<4x256xf32>
    %c15_i32_272 = arith.constant 15 : i32
    %751 = tpu.dynamic_rotate %739 by %c15_i32_272 dim 1 : vector<4x256xf32>, i32 -> vector<4x256xf32>
    %752 = vector.extract_strided_slice %4 {offsets = [2, 0], sizes = [1, 256], strides = [1, 1]} : vector<9x256xf32> to vector<1x256xf32>
    %753 = vector.broadcast %752 : vector<1x256xf32> to vector<4x256xf32>
    %754 = arith.mulf %751, %753 : vector<4x256xf32>
    %c1_i32_273 = arith.constant 1 : i32
    %755 = tpu.dynamic_rotate %739 by %c1_i32_273 dim 1 : vector<4x256xf32>, i32 -> vector<4x256xf32>
    %756 = vector.extract_strided_slice %4 {offsets = [3, 0], sizes = [1, 256], strides = [1, 1]} : vector<9x256xf32> to vector<1x256xf32>
    %757 = vector.broadcast %756 : vector<1x256xf32> to vector<4x256xf32>
    %758 = arith.mulf %755, %757 : vector<4x256xf32>
    %759 = vector.extract_strided_slice %4 {offsets = [4, 0], sizes = [1, 256], strides = [1, 1]} : vector<9x256xf32> to vector<1x256xf32>
    %760 = vector.broadcast %759 : vector<1x256xf32> to vector<4x256xf32>
    %761 = arith.mulf %739, %760 : vector<4x256xf32>
    %c255_i32_274 = arith.constant 255 : i32
    %762 = tpu.dynamic_rotate %739 by %c255_i32_274 dim 1 : vector<4x256xf32>, i32 -> vector<4x256xf32>
    %763 = vector.extract_strided_slice %4 {offsets = [5, 0], sizes = [1, 256], strides = [1, 1]} : vector<9x256xf32> to vector<1x256xf32>
    %764 = vector.broadcast %763 : vector<1x256xf32> to vector<4x256xf32>
    %765 = arith.mulf %762, %764 : vector<4x256xf32>
    %c241_i32_275 = arith.constant 241 : i32
    %766 = tpu.dynamic_rotate %739 by %c241_i32_275 dim 1 : vector<4x256xf32>, i32 -> vector<4x256xf32>
    %767 = vector.extract_strided_slice %4 {offsets = [6, 0], sizes = [1, 256], strides = [1, 1]} : vector<9x256xf32> to vector<1x256xf32>
    %768 = vector.broadcast %767 : vector<1x256xf32> to vector<4x256xf32>
    %769 = arith.mulf %766, %768 : vector<4x256xf32>
    %c240_i32_276 = arith.constant 240 : i32
    %770 = tpu.dynamic_rotate %739 by %c240_i32_276 dim 1 : vector<4x256xf32>, i32 -> vector<4x256xf32>
    %771 = vector.extract_strided_slice %4 {offsets = [7, 0], sizes = [1, 256], strides = [1, 1]} : vector<9x256xf32> to vector<1x256xf32>
    %772 = vector.broadcast %771 : vector<1x256xf32> to vector<4x256xf32>
    %773 = arith.mulf %770, %772 : vector<4x256xf32>
    %c239_i32_277 = arith.constant 239 : i32
    %774 = tpu.dynamic_rotate %739 by %c239_i32_277 dim 1 : vector<4x256xf32>, i32 -> vector<4x256xf32>
    %775 = vector.extract_strided_slice %4 {offsets = [8, 0], sizes = [1, 256], strides = [1, 1]} : vector<9x256xf32> to vector<1x256xf32>
    %776 = vector.broadcast %775 : vector<1x256xf32> to vector<4x256xf32>
    %777 = arith.mulf %774, %776 : vector<4x256xf32>
    %778 = tpu.concatenate %746, %750, %754, %758, %761, %765, %769, %773, %777 in 0 : vector<4x256xf32>, vector<4x256xf32>, vector<4x256xf32>, vector<4x256xf32>, vector<4x256xf32>, vector<4x256xf32>, vector<4x256xf32>, vector<4x256xf32>, vector<4x256xf32> -> vector<36x256xf32>
    %c17_i32_278 = arith.constant 17 : i32
    %779 = tpu.dynamic_rotate %742 by %c17_i32_278 dim 1 : vector<4x256xf32>, i32 -> vector<4x256xf32>
    %780 = vector.extract_strided_slice %4 {offsets = [0, 0], sizes = [1, 256], strides = [1, 1]} : vector<9x256xf32> to vector<1x256xf32>
    %781 = vector.broadcast %780 : vector<1x256xf32> to vector<4x256xf32>
    %782 = arith.mulf %779, %781 : vector<4x256xf32>
    %c16_i32_279 = arith.constant 16 : i32
    %783 = tpu.dynamic_rotate %742 by %c16_i32_279 dim 1 : vector<4x256xf32>, i32 -> vector<4x256xf32>
    %784 = vector.extract_strided_slice %4 {offsets = [1, 0], sizes = [1, 256], strides = [1, 1]} : vector<9x256xf32> to vector<1x256xf32>
    %785 = vector.broadcast %784 : vector<1x256xf32> to vector<4x256xf32>
    %786 = arith.mulf %783, %785 : vector<4x256xf32>
    %c15_i32_280 = arith.constant 15 : i32
    %787 = tpu.dynamic_rotate %742 by %c15_i32_280 dim 1 : vector<4x256xf32>, i32 -> vector<4x256xf32>
    %788 = vector.extract_strided_slice %4 {offsets = [2, 0], sizes = [1, 256], strides = [1, 1]} : vector<9x256xf32> to vector<1x256xf32>
    %789 = vector.broadcast %788 : vector<1x256xf32> to vector<4x256xf32>
    %790 = arith.mulf %787, %789 : vector<4x256xf32>
    %c1_i32_281 = arith.constant 1 : i32
    %791 = tpu.dynamic_rotate %742 by %c1_i32_281 dim 1 : vector<4x256xf32>, i32 -> vector<4x256xf32>
    %792 = vector.extract_strided_slice %4 {offsets = [3, 0], sizes = [1, 256], strides = [1, 1]} : vector<9x256xf32> to vector<1x256xf32>
    %793 = vector.broadcast %792 : vector<1x256xf32> to vector<4x256xf32>
    %794 = arith.mulf %791, %793 : vector<4x256xf32>
    %795 = vector.extract_strided_slice %4 {offsets = [4, 0], sizes = [1, 256], strides = [1, 1]} : vector<9x256xf32> to vector<1x256xf32>
    %796 = vector.broadcast %795 : vector<1x256xf32> to vector<4x256xf32>
    %797 = arith.mulf %742, %796 : vector<4x256xf32>
    %c255_i32_282 = arith.constant 255 : i32
    %798 = tpu.dynamic_rotate %742 by %c255_i32_282 dim 1 : vector<4x256xf32>, i32 -> vector<4x256xf32>
    %799 = vector.extract_strided_slice %4 {offsets = [5, 0], sizes = [1, 256], strides = [1, 1]} : vector<9x256xf32> to vector<1x256xf32>
    %800 = vector.broadcast %799 : vector<1x256xf32> to vector<4x256xf32>
    %801 = arith.mulf %798, %800 : vector<4x256xf32>
    %c241_i32_283 = arith.constant 241 : i32
    %802 = tpu.dynamic_rotate %742 by %c241_i32_283 dim 1 : vector<4x256xf32>, i32 -> vector<4x256xf32>
    %803 = vector.extract_strided_slice %4 {offsets = [6, 0], sizes = [1, 256], strides = [1, 1]} : vector<9x256xf32> to vector<1x256xf32>
    %804 = vector.broadcast %803 : vector<1x256xf32> to vector<4x256xf32>
    %805 = arith.mulf %802, %804 : vector<4x256xf32>
    %c240_i32_284 = arith.constant 240 : i32
    %806 = tpu.dynamic_rotate %742 by %c240_i32_284 dim 1 : vector<4x256xf32>, i32 -> vector<4x256xf32>
    %807 = vector.extract_strided_slice %4 {offsets = [7, 0], sizes = [1, 256], strides = [1, 1]} : vector<9x256xf32> to vector<1x256xf32>
    %808 = vector.broadcast %807 : vector<1x256xf32> to vector<4x256xf32>
    %809 = arith.mulf %806, %808 : vector<4x256xf32>
    %c239_i32_285 = arith.constant 239 : i32
    %810 = tpu.dynamic_rotate %742 by %c239_i32_285 dim 1 : vector<4x256xf32>, i32 -> vector<4x256xf32>
    %811 = vector.extract_strided_slice %4 {offsets = [8, 0], sizes = [1, 256], strides = [1, 1]} : vector<9x256xf32> to vector<1x256xf32>
    %812 = vector.broadcast %811 : vector<1x256xf32> to vector<4x256xf32>
    %813 = arith.mulf %810, %812 : vector<4x256xf32>
    %814 = tpu.concatenate %782, %786, %790, %794, %797, %801, %805, %809, %813 in 0 : vector<4x256xf32>, vector<4x256xf32>, vector<4x256xf32>, vector<4x256xf32>, vector<4x256xf32>, vector<4x256xf32>, vector<4x256xf32>, vector<4x256xf32>, vector<4x256xf32> -> vector<36x256xf32>
    %815 = tpu.concatenate %778, %814 in 0 : vector<36x256xf32>, vector<36x256xf32> -> vector<72x256xf32>
    %c0_286 = arith.constant 0 : index
    %c0_287 = arith.constant 0 : index
    %816 = vector.load %arg14[%c0_286, %c0_287] : memref<8x72xf32, #tpu.memory_space<vmem>>, vector<8x72xf32>
    %cst_288 = arith.constant dense<0.000000e+00> : vector<8x256xf32>
    %817 = tpu.matmul %816, %815, %cst_288 {dimension_numbers = #tpu.dot_dimension_numbers<[1], [0], [0], [1], [0, 0, 1, 1], [], []>} : vector<8x72xf32>, vector<72x256xf32>, vector<8x256xf32> -> vector<8x256xf32>
    %c0_289 = arith.constant 0 : index
    %c0_290 = arith.constant 0 : index
    %818 = vector.load %arg15[%c0_289, %c0_290] : memref<8x1xf32, #tpu.memory_space<vmem>>, vector<8x1xf32>
    %819 = vector.broadcast %818 : vector<8x1xf32> to vector<8x256xf32>
    %820 = arith.mulf %817, %819 : vector<8x256xf32>
    %c0_291 = arith.constant 0 : index
    %c0_292 = arith.constant 0 : index
    %821 = vector.load %arg16[%c0_291, %c0_292] : memref<8x1xf32, #tpu.memory_space<vmem>>, vector<8x1xf32>
    %822 = vector.broadcast %821 : vector<8x1xf32> to vector<8x256xf32>
    %823 = arith.addf %820, %822 : vector<8x256xf32>
    %cst_293 = arith.constant 0.000000e+00 : f32
    %824 = vector.broadcast %cst_293 : f32 to vector<8x256xf32>
    %825 = arith.maximumf %823, %824 : vector<8x256xf32>
    %826 = vector.shape_cast %825 : vector<8x256xf32> to vector<1x8x256xf32>
    %c0_294 = arith.constant 0 : index
    %c0_295 = arith.constant 0 : index
    %c0_296 = arith.constant 0 : index
    %827 = vector.load %arg17[%c0_294, %c0_295, %c0_296] : memref<1x8x256xf32, #tpu.memory_space<vmem>>, vector<1x8x256xf32>
    tpu.vector_store %arg17[%c0_294, %c0_295, %c0_296], %826 {strides = array<i32>} : memref<1x8x256xf32, #tpu.memory_space<vmem>>, vector<1x8x256xf32>,
    return
  }
  func.func @transform_0(%arg0: i32) -> (i32, i32, i32) {
    %c0_i32 = arith.constant 0 : i32
    %c0_i32_0 = arith.constant 0 : i32
    %c0_i32_1 = arith.constant 0 : i32
    return %arg0, %c0_i32, %c0_i32_0 : i32, i32, i32
  }
  func.func @transform_1(%arg0: i32) -> (i32, i32, i32) {
    %c0_i32 = arith.constant 0 : i32
    %c0_i32_0 = arith.constant 0 : i32
    %c0_i32_1 = arith.constant 0 : i32
    return %arg0, %c0_i32, %c0_i32_0 : i32, i32, i32
  }
  func.func @transform_2(%arg0: i32) -> (i32, i32) {
    %c0_i32 = arith.constant 0 : i32
    %c0_i32_0 = arith.constant 0 : i32
    %c0_i32_1 = arith.constant 0 : i32
    return %c0_i32, %c0_i32_0 : i32, i32
  }
  func.func @transform_3(%arg0: i32) -> (i32, i32) {
    %c0_i32 = arith.constant 0 : i32
    %c0_i32_0 = arith.constant 0 : i32
    %c0_i32_1 = arith.constant 0 : i32
    return %c0_i32, %c0_i32_0 : i32, i32
  }
  func.func @transform_4(%arg0: i32) -> (i32, i32) {
    %c0_i32 = arith.constant 0 : i32
    %c0_i32_0 = arith.constant 0 : i32
    %c0_i32_1 = arith.constant 0 : i32
    return %c0_i32, %c0_i32_0 : i32, i32
  }
  func.func @transform_5(%arg0: i32) -> (i32, i32) {
    %c0_i32 = arith.constant 0 : i32
    %c0_i32_0 = arith.constant 0 : i32
    %c0_i32_1 = arith.constant 0 : i32
    return %c0_i32, %c0_i32_0 : i32, i32
  }
  func.func @transform_6(%arg0: i32) -> (i32, i32) {
    %c0_i32 = arith.constant 0 : i32
    %c0_i32_0 = arith.constant 0 : i32
    %c0_i32_1 = arith.constant 0 : i32
    return %c0_i32, %c0_i32_0 : i32, i32
  }
  func.func @transform_7(%arg0: i32) -> (i32, i32) {
    %c0_i32 = arith.constant 0 : i32
    %c0_i32_0 = arith.constant 0 : i32
    %c0_i32_1 = arith.constant 0 : i32
    return %c0_i32, %c0_i32_0 : i32, i32
  }
  func.func @transform_8(%arg0: i32) -> (i32, i32) {
    %c0_i32 = arith.constant 0 : i32
    %c0_i32_0 = arith.constant 0 : i32
    %c0_i32_1 = arith.constant 0 : i32
    return %c0_i32, %c0_i32_0 : i32, i32
  }
  func.func @transform_9(%arg0: i32) -> (i32, i32) {
    %c0_i32 = arith.constant 0 : i32
    %c0_i32_0 = arith.constant 0 : i32
    %c0_i32_1 = arith.constant 0 : i32
    return %c0_i32, %c0_i32_0 : i32, i32
  }
  func.func @transform_10(%arg0: i32) -> (i32, i32) {
    %c0_i32 = arith.constant 0 : i32
    %c0_i32_0 = arith.constant 0 : i32
    %c0_i32_1 = arith.constant 0 : i32
    return %c0_i32, %c0_i32_0 : i32, i32
  }
  func.func @transform_11(%arg0: i32) -> (i32, i32) {
    %c0_i32 = arith.constant 0 : i32
    %c0_i32_0 = arith.constant 0 : i32
    %c0_i32_1 = arith.constant 0 : i32
    return %c0_i32, %c0_i32_0 : i32, i32
  }
  func.func @transform_12(%arg0: i32) -> (i32, i32) {
    %c0_i32 = arith.constant 0 : i32
    %c0_i32_0 = arith.constant 0 : i32
    %c0_i32_1 = arith.constant 0 : i32
    return %c0_i32, %c0_i32_0 : i32, i32
  }
  func.func @transform_13(%arg0: i32) -> (i32, i32) {
    %c0_i32 = arith.constant 0 : i32
    %c0_i32_0 = arith.constant 0 : i32
    %c0_i32_1 = arith.constant 0 : i32
    return %c0_i32, %c0_i32_0 : i32, i32
  }
  func.func @transform_14(%arg0: i32) -> (i32, i32) {
    %c0_i32 = arith.constant 0 : i32
    %c0_i32_0 = arith.constant 0 : i32
    %c0_i32_1 = arith.constant 0 : i32
    return %c0_i32, %c0_i32_0 : i32, i32
  }
  func.func @transform_15(%arg0: i32) -> (i32, i32) {
    %c0_i32 = arith.constant 0 : i32
    %c0_i32_0 = arith.constant 0 : i32
    %c0_i32_1 = arith.constant 0 : i32
    return %c0_i32, %c0_i32_0 : i32, i32
  }
  func.func @transform_16(%arg0: i32) -> (i32, i32, i32) {
    %c0_i32 = arith.constant 0 : i32
    %c0_i32_0 = arith.constant 0 : i32
    %c0_i32_1 = arith.constant 0 : i32
    return %arg0, %c0_i32, %c0_i32_0 : i32, i32, i32
  }
}

</mosaic_0001>

<llo_original>
// kernel: catfusion_forward.1
$region0: #{catfusion_forward.1}
  #allocation0 [shape = 'u32[]', space=smem, size = 0x4, offset = 0x4, fixed_abs, tag = 'smem constant byte address 0x4 - core index']
  #allocation1 [shape = 'u32[72,128]{1,0:T(1,128)}', space=vmem, size = 0x9000, scoped, tag = 'internal scratch']
  %s0 = inlined_call_operand.vmem [shape: f32[2,4,256], index: 0, kind: input, shape index: {}]
  %s1 = inlined_call_operand.vmem [shape: f32[2,4,256], index: 1, kind: input, shape index: {}]
  %s2 = inlined_call_operand.vmem [shape: f32[9,256], index: 2, kind: input, shape index: {}]
  %s3 = inlined_call_operand.vmem [shape: f32[12,36], index: 3, kind: input, shape index: {}]
  %s4 = inlined_call_operand.vmem [shape: f32[12,1], index: 4, kind: input, shape index: {}]
  %s5 = inlined_call_operand.vmem [shape: f32[12,1], index: 5, kind: input, shape index: {}]
  %s6 = inlined_call_operand.vmem [shape: f32[12,36], index: 6, kind: input, shape index: {}]
  %s7 = inlined_call_operand.vmem [shape: f32[12,1], index: 7, kind: input, shape index: {}]
  %s8 = inlined_call_operand.vmem [shape: f32[12,1], index: 8, kind: input, shape index: {}]
  %s9 = inlined_call_operand.vmem [shape: f32[4,1], index: 9, kind: input, shape index: {}]
  %s10 = inlined_call_operand.vmem [shape: f32[4,1], index: 10, kind: input, shape index: {}]
  %s11 = inlined_call_operand.vmem [shape: f32[4,1], index: 11, kind: input, shape index: {}]
  %s12 = inlined_call_operand.vmem [shape: f32[4,1], index: 12, kind: input, shape index: {}]
  %s13 = inlined_call_operand.vmem [shape: f32[8,72], index: 13, kind: input, shape index: {}]
  %s14 = inlined_call_operand.vmem [shape: f32[8,1], index: 14, kind: input, shape index: {}]
  %s15 = inlined_call_operand.vmem [shape: f32[8,1], index: 15, kind: input, shape index: {}]
  %s16 = inlined_call_operand.vmem [shape: f32[2,8,256], index: 16, kind: output, shape index: {}]
  %s17 = sld [smem:[#allocation0]]
  $region97: #{catfusion_forward.1} parent=0
    _
  %s19 = ssub.s32 1, %s17
  %s20 = scalar_select 0, %s19, %s17
  loop: start=0, step=1, limit=4
  $region2: #{catfusion_forward.1} parent=0 // loop_pre_header
    _
  $region3: #{catfusion_forward.1} parent=0 // loop_header
    %s22 = sphi 0, %s26
    %p23 = scmp.ge.s32.totalorder %s22, 4
    %s32 = sphi 0, %s34
    %s35 = sphi 0, %s32
    %s36 = sphi 0, %s35
    %s52 = sphi 0, %s36
    %s58 = sphi 0, %s60
    %s61 = sphi 0, %s58
    %s62 = sphi 0, %s61
    %s78 = sphi 0, %s62
    %s82 = sphi 0, %s82
    %s84 = sphi 0, %s82
    %s85 = sphi 0, %s84
    %s99 = sphi 0, %s85
    %s103 = sphi 0, %s103
    %s105 = sphi 0, %s103
    %s106 = sphi 0, %s105
    %s120 = sphi 0, %s106
    %s124 = sphi 0, %s124
    %s126 = sphi 0, %s124
    %s127 = sphi 0, %s126
    %s141 = sphi 0, %s127
    %s145 = sphi 0, %s145
    %s147 = sphi 0, %s145
    %s148 = sphi 0, %s147
    %s162 = sphi 0, %s148
    %s166 = sphi 0, %s166
    %s168 = sphi 0, %s166
    %s169 = sphi 0, %s168
    %s183 = sphi 0, %s169
    %s187 = sphi 0, %s187
    %s189 = sphi 0, %s187
    %s190 = sphi 0, %s189
    %s204 = sphi 0, %s190
    %s208 = sphi 0, %s208
    %s210 = sphi 0, %s208
    %s211 = sphi 0, %s210
    %s225 = sphi 0, %s211
    %s229 = sphi 0, %s229
    %s231 = sphi 0, %s229
    %s232 = sphi 0, %s231
    %s246 = sphi 0, %s232
    %s250 = sphi 0, %s250
    %s252 = sphi 0, %s250
    %s253 = sphi 0, %s252
    %s267 = sphi 0, %s253
    %s271 = sphi 0, %s271
    %s273 = sphi 0, %s271
    %s274 = sphi 0, %s273
    %s288 = sphi 0, %s274
    %s292 = sphi 0, %s292
    %s294 = sphi 0, %s292
    %s295 = sphi 0, %s294
    %s309 = sphi 0, %s295
    %s313 = sphi 0, %s313
    %s315 = sphi 0, %s313
    %s316 = sphi 0, %s315
    %s330 = sphi 0, %s316
    %s334 = sphi 0, %s334
    %s336 = sphi 0, %s334
    %s337 = sphi 0, %s336
    %s351 = sphi 0, %s337
    %s355 = sphi 0, %s355
    %s357 = sphi 0, %s355
    %s358 = sphi 0, %s357
    %s372 = sphi 0, %s358
    %s378 = sphi 0, %s380
    %s381 = sphi 0, %s378
    %s382 = sphi 0, %s381
    %s398 = sphi 0, %s382
  $region4: #{catfusion_forward.1} parent=0 // loop_header_branch
    %25 = sbr.rel (%p23) target = $region8
  $region5: #{catfusion_forward.1} parent=0 // loop_body
    %s27 = ssub.s32 %s22, 1
    %s28 = ssub.s32 %s22, 2
    %s29 = sadd.s32 %s22, 1
    %s30 = ssub.s32 %s22, %s29
    %p31 = scmp.eq.s32.totalorder %s30, 0
    %s33 = sadd.s32 %s32, 1
    %s34 = scalar_select %p31, %s32, %s33
    %p37 = pneg %p31
    %p38 = scmp.eq.s32.totalorder %s22, 1
    %p39 = por %p37, %p38
    %p40 = scmp.ne.s32.totalorder %s32, %s35
    %p41 = scmp.eq.s32.totalorder %s22, 0
    %p42 = por %p40, %p41
    %p43 = scmp.ne.s32.totalorder %s32, %s35
    %p44 = scmp.eq.s32.totalorder %s27, 1
    %p45 = por %p43, %p44
    %p46 = scmp.ne.s32.totalorder %s35, %s36
    %p47 = scmp.eq.s32.totalorder %s27, 0
    %p48 = por %p46, %p47
    %p49 = scmp.ne.s32.totalorder %s35, %s36
    %p50 = scmp.eq.s32.totalorder %s28, 1
    %p51 = por %p49, %p50
    %p53 = scmp.ne.s32.totalorder %s36, %s52
    %p54 = scmp.eq.s32.totalorder %s28, 0
    %p55 = por %p53, %p54
    %s56 = ssub.s32 %s22, %s29
    %p57 = scmp.eq.s32.totalorder %s56, 0
    %s59 = sadd.s32 %s58, 1
    %s60 = scalar_select %p57, %s58, %s59
    %p63 = pneg %p57
    %p64 = scmp.eq.s32.totalorder %s22, 1
    %p65 = por %p63, %p64
    %p66 = scmp.ne.s32.totalorder %s58, %s61
    %p67 = scmp.eq.s32.totalorder %s22, 0
    %p68 = por %p66, %p67
    %p69 = scmp.ne.s32.totalorder %s58, %s61
    %p70 = scmp.eq.s32.totalorder %s27, 1
    %p71 = por %p69, %p70
    %p72 = scmp.ne.s32.totalorder %s61, %s62
    %p73 = scmp.eq.s32.totalorder %s27, 0
    %p74 = por %p72, %p73
    %p75 = scmp.ne.s32.totalorder %s61, %s62
    %p76 = scmp.eq.s32.totalorder %s28, 1
    %p77 = por %p75, %p76
    %p79 = scmp.ne.s32.totalorder %s62, %s78
    %p80 = scmp.eq.s32.totalorder %s28, 0
    %p81 = por %p79, %p80
    %s83 = sadd.s32 %s82, 1
    %p86 = scmp.eq.s32.totalorder %s22, 1
    %p87 = scmp.ne.s32.totalorder %s82, %s84
    %p88 = scmp.eq.s32.totalorder %s22, 0
    %p89 = por %p87, %p88
    %p90 = scmp.ne.s32.totalorder %s82, %s84
    %p91 = scmp.eq.s32.totalorder %s27, 1
    %p92 = por %p90, %p91
    %p93 = scmp.ne.s32.totalorder %s84, %s85
    %p94 = scmp.eq.s32.totalorder %s27, 0
    %p95 = por %p93, %p94
    %p96 = scmp.ne.s32.totalorder %s84, %s85
    %p97 = scmp.eq.s32.totalorder %s28, 1
    %p98 = por %p96, %p97
    %p100 = scmp.ne.s32.totalorder %s85, %s99
    %p101 = scmp.eq.s32.totalorder %s28, 0
    %p102 = por %p100, %p101
    %s104 = sadd.s32 %s103, 1
    %p107 = scmp.eq.s32.totalorder %s22, 1
    %p108 = scmp.ne.s32.totalorder %s103, %s105
    %p109 = scmp.eq.s32.totalorder %s22, 0
    %p110 = por %p108, %p109
    %p111 = scmp.ne.s32.totalorder %s103, %s105
    %p112 = scmp.eq.s32.totalorder %s27, 1
    %p113 = por %p111, %p112
    %p114 = scmp.ne.s32.totalorder %s105, %s106
    %p115 = scmp.eq.s32.totalorder %s27, 0
    %p116 = por %p114, %p115
    %p117 = scmp.ne.s32.totalorder %s105, %s106
    %p118 = scmp.eq.s32.totalorder %s28, 1
    %p119 = por %p117, %p118
    %p121 = scmp.ne.s32.totalorder %s106, %s120
    %p122 = scmp.eq.s32.totalorder %s28, 0
    %p123 = por %p121, %p122
    %s125 = sadd.s32 %s124, 1
    %p128 = scmp.eq.s32.totalorder %s22, 1
    %p129 = scmp.ne.s32.totalorder %s124, %s126
    %p130 = scmp.eq.s32.totalorder %s22, 0
    %p131 = por %p129, %p130
    %p132 = scmp.ne.s32.totalorder %s124, %s126
    %p133 = scmp.eq.s32.totalorder %s27, 1
    %p134 = por %p132, %p133
    %p135 = scmp.ne.s32.totalorder %s126, %s127
    %p136 = scmp.eq.s32.totalorder %s27, 0
    %p137 = por %p135, %p136
    %p138 = scmp.ne.s32.totalorder %s126, %s127
    %p139 = scmp.eq.s32.totalorder %s28, 1
    %p140 = por %p138, %p139
    %p142 = scmp.ne.s32.totalorder %s127, %s141
    %p143 = scmp.eq.s32.totalorder %s28, 0
    %p144 = por %p142, %p143
    %s146 = sadd.s32 %s145, 1
    %p149 = scmp.eq.s32.totalorder %s22, 1
    %p150 = scmp.ne.s32.totalorder %s145, %s147
    %p151 = scmp.eq.s32.totalorder %s22, 0
    %p152 = por %p150, %p151
    %p153 = scmp.ne.s32.totalorder %s145, %s147
    %p154 = scmp.eq.s32.totalorder %s27, 1
    %p155 = por %p153, %p154
    %p156 = scmp.ne.s32.totalorder %s147, %s148
    %p157 = scmp.eq.s32.totalorder %s27, 0
    %p158 = por %p156, %p157
    %p159 = scmp.ne.s32.totalorder %s147, %s148
    %p160 = scmp.eq.s32.totalorder %s28, 1
    %p161 = por %p159, %p160
    %p163 = scmp.ne.s32.totalorder %s148, %s162
    %p164 = scmp.eq.s32.totalorder %s28, 0
    %p165 = por %p163, %p164
    %s167 = sadd.s32 %s166, 1
    %p170 = scmp.eq.s32.totalorder %s22, 1
    %p171 = scmp.ne.s32.totalorder %s166, %s168
    %p172 = scmp.eq.s32.totalorder %s22, 0
    %p173 = por %p171, %p172
    %p174 = scmp.ne.s32.totalorder %s166, %s168
    %p175 = scmp.eq.s32.totalorder %s27, 1
    %p176 = por %p174, %p175
    %p177 = scmp.ne.s32.totalorder %s168, %s169
    %p178 = scmp.eq.s32.totalorder %s27, 0
    %p179 = por %p177, %p178
    %p180 = scmp.ne.s32.totalorder %s168, %s169
    %p181 = scmp.eq.s32.totalorder %s28, 1
    %p182 = por %p180, %p181
    %p184 = scmp.ne.s32.totalorder %s169, %s183
    %p185 = scmp.eq.s32.totalorder %s28, 0
    %p186 = por %p184, %p185
    %s188 = sadd.s32 %s187, 1
    %p191 = scmp.eq.s32.totalorder %s22, 1
    %p192 = scmp.ne.s32.totalorder %s187, %s189
    %p193 = scmp.eq.s32.totalorder %s22, 0
    %p194 = por %p192, %p193
    %p195 = scmp.ne.s32.totalorder %s187, %s189
    %p196 = scmp.eq.s32.totalorder %s27, 1
    %p197 = por %p195, %p196
    %p198 = scmp.ne.s32.totalorder %s189, %s190
    %p199 = scmp.eq.s32.totalorder %s27, 0
    %p200 = por %p198, %p199
    %p201 = scmp.ne.s32.totalorder %s189, %s190
    %p202 = scmp.eq.s32.totalorder %s28, 1
    %p203 = por %p201, %p202
    %p205 = scmp.ne.s32.totalorder %s190, %s204
    %p206 = scmp.eq.s32.totalorder %s28, 0
    %p207 = por %p205, %p206
    %s209 = sadd.s32 %s208, 1
    %p212 = scmp.eq.s32.totalorder %s22, 1
    %p213 = scmp.ne.s32.totalorder %s208, %s210
    %p214 = scmp.eq.s32.totalorder %s22, 0
    %p215 = por %p213, %p214
    %p216 = scmp.ne.s32.totalorder %s208, %s210
    %p217 = scmp.eq.s32.totalorder %s27, 1
    %p218 = por %p216, %p217
    %p219 = scmp.ne.s32.totalorder %s210, %s211
    %p220 = scmp.eq.s32.totalorder %s27, 0
    %p221 = por %p219, %p220
    %p222 = scmp.ne.s32.totalorder %s210, %s211
    %p223 = scmp.eq.s32.totalorder %s28, 1
    %p224 = por %p222, %p223
    %p226 = scmp.ne.s32.totalorder %s211, %s225
    %p227 = scmp.eq.s32.totalorder %s28, 0
    %p228 = por %p226, %p227
    %s230 = sadd.s32 %s229, 1
    %p233 = scmp.eq.s32.totalorder %s22, 1
    %p234 = scmp.ne.s32.totalorder %s229, %s231
    %p235 = scmp.eq.s32.totalorder %s22, 0
    %p236 = por %p234, %p235
    %p237 = scmp.ne.s32.totalorder %s229, %s231
    %p238 = scmp.eq.s32.totalorder %s27, 1
    %p239 = por %p237, %p238
    %p240 = scmp.ne.s32.totalorder %s231, %s232
    %p241 = scmp.eq.s32.totalorder %s27, 0
    %p242 = por %p240, %p241
    %p243 = scmp.ne.s32.totalorder %s231, %s232
    %p244 = scmp.eq.s32.totalorder %s28, 1
    %p245 = por %p243, %p244
    %p247 = scmp.ne.s32.totalorder %s232, %s246
    %p248 = scmp.eq.s32.totalorder %s28, 0
    %p249 = por %p247, %p248
    %s251 = sadd.s32 %s250, 1
    %p254 = scmp.eq.s32.totalorder %s22, 1
    %p255 = scmp.ne.s32.totalorder %s250, %s252
    %p256 = scmp.eq.s32.totalorder %s22, 0
    %p257 = por %p255, %p256
    %p258 = scmp.ne.s32.totalorder %s250, %s252
    %p259 = scmp.eq.s32.totalorder %s27, 1
    %p260 = por %p258, %p259
    %p261 = scmp.ne.s32.totalorder %s252, %s253
    %p262 = scmp.eq.s32.totalorder %s27, 0
    %p263 = por %p261, %p262
    %p264 = scmp.ne.s32.totalorder %s252, %s253
    %p265 = scmp.eq.s32.totalorder %s28, 1
    %p266 = por %p264, %p265
    %p268 = scmp.ne.s32.totalorder %s253, %s267
    %p269 = scmp.eq.s32.totalorder %s28, 0
    %p270 = por %p268, %p269
    %s272 = sadd.s32 %s271, 1
    %p275 = scmp.eq.s32.totalorder %s22, 1
    %p276 = scmp.ne.s32.totalorder %s271, %s273
    %p277 = scmp.eq.s32.totalorder %s22, 0
    %p278 = por %p276, %p277
    %p279 = scmp.ne.s32.totalorder %s271, %s273
    %p280 = scmp.eq.s32.totalorder %s27, 1
    %p281 = por %p279, %p280
    %p282 = scmp.ne.s32.totalorder %s273, %s274
    %p283 = scmp.eq.s32.totalorder %s27, 0
    %p284 = por %p282, %p283
    %p285 = scmp.ne.s32.totalorder %s273, %s274
    %p286 = scmp.eq.s32.totalorder %s28, 1
    %p287 = por %p285, %p286
    %p289 = scmp.ne.s32.totalorder %s274, %s288
    %p290 = scmp.eq.s32.totalorder %s28, 0
    %p291 = por %p289, %p290
    %s293 = sadd.s32 %s292, 1
    %p296 = scmp.eq.s32.totalorder %s22, 1
    %p297 = scmp.ne.s32.totalorder %s292, %s294
    %p298 = scmp.eq.s32.totalorder %s22, 0
    %p299 = por %p297, %p298
    %p300 = scmp.ne.s32.totalorder %s292, %s294
    %p301 = scmp.eq.s32.totalorder %s27, 1
    %p302 = por %p300, %p301
    %p303 = scmp.ne.s32.totalorder %s294, %s295
    %p304 = scmp.eq.s32.totalorder %s27, 0
    %p305 = por %p303, %p304
    %p306 = scmp.ne.s32.totalorder %s294, %s295
    %p307 = scmp.eq.s32.totalorder %s28, 1
    %p308 = por %p306, %p307
    %p310 = scmp.ne.s32.totalorder %s295, %s309
    %p311 = scmp.eq.s32.totalorder %s28, 0
    %p312 = por %p310, %p311
    %s314 = sadd.s32 %s313, 1
    %p317 = scmp.eq.s32.totalorder %s22, 1
    %p318 = scmp.ne.s32.totalorder %s313, %s315
    %p319 = scmp.eq.s32.totalorder %s22, 0
    %p320 = por %p318, %p319
    %p321 = scmp.ne.s32.totalorder %s313, %s315
    %p322 = scmp.eq.s32.totalorder %s27, 1
    %p323 = por %p321, %p322
    %p324 = scmp.ne.s32.totalorder %s315, %s316
    %p325 = scmp.eq.s32.totalorder %s27, 0
    %p326 = por %p324, %p325
    %p327 = scmp.ne.s32.totalorder %s315, %s316
    %p328 = scmp.eq.s32.totalorder %s28, 1
    %p329 = por %p327, %p328
    %p331 = scmp.ne.s32.totalorder %s316, %s330
    %p332 = scmp.eq.s32.totalorder %s28, 0
    %p333 = por %p331, %p332
    %s335 = sadd.s32 %s334, 1
    %p338 = scmp.eq.s32.totalorder %s22, 1
    %p339 = scmp.ne.s32.totalorder %s334, %s336
    %p340 = scmp.eq.s32.totalorder %s22, 0
    %p341 = por %p339, %p340
    %p342 = scmp.ne.s32.totalorder %s334, %s336
    %p343 = scmp.eq.s32.totalorder %s27, 1
    %p344 = por %p342, %p343
    %p345 = scmp.ne.s32.totalorder %s336, %s337
    %p346 = scmp.eq.s32.totalorder %s27, 0
    %p347 = por %p345, %p346
    %p348 = scmp.ne.s32.totalorder %s336, %s337
    %p349 = scmp.eq.s32.totalorder %s28, 1
    %p350 = por %p348, %p349
    %p352 = scmp.ne.s32.totalorder %s337, %s351
    %p353 = scmp.eq.s32.totalorder %s28, 0
    %p354 = por %p352, %p353
    %s356 = sadd.s32 %s355, 1
    %p359 = scmp.eq.s32.totalorder %s22, 1
    %p360 = scmp.ne.s32.totalorder %s355, %s357
    %p361 = scmp.eq.s32.totalorder %s22, 0
    %p362 = por %p360, %p361
    %p363 = scmp.ne.s32.totalorder %s355, %s357
    %p364 = scmp.eq.s32.totalorder %s27, 1
    %p365 = por %p363, %p364
    %p366 = scmp.ne.s32.totalorder %s357, %s358
    %p367 = scmp.eq.s32.totalorder %s27, 0
    %p368 = por %p366, %p367
    %p369 = scmp.ne.s32.totalorder %s357, %s358
    %p370 = scmp.eq.s32.totalorder %s28, 1
    %p371 = por %p369, %p370
    %p373 = scmp.ne.s32.totalorder %s358, %s372
    %p374 = scmp.eq.s32.totalorder %s28, 0
    %p375 = por %p373, %p374
    %s376 = ssub.s32 %s22, %s29
    %p377 = scmp.eq.s32.totalorder %s376, 0
    %s379 = sadd.s32 %s378, 1
    %s380 = scalar_select %p377, %s378, %s379
    %p383 = pneg %p377
    %p384 = scmp.eq.s32.totalorder %s22, 1
    %p385 = por %p383, %p384
    %p386 = scmp.ne.s32.totalorder %s378, %s381
    %p387 = scmp.eq.s32.totalorder %s22, 0
    %p388 = por %p386, %p387
    %p389 = scmp.ne.s32.totalorder %s378, %s381
    %p390 = scmp.eq.s32.totalorder %s27, 1
    %p391 = por %p389, %p390
    %p392 = scmp.ne.s32.totalorder %s381, %s382
    %p393 = scmp.eq.s32.totalorder %s27, 0
    %p394 = por %p392, %p393
    %p395 = scmp.ne.s32.totalorder %s381, %s382
    %p396 = scmp.eq.s32.totalorder %s28, 1
    %p397 = por %p395, %p396
    %p399 = scmp.ne.s32.totalorder %s382, %s398
    %p400 = scmp.eq.s32.totalorder %s28, 0
    %p401 = por %p399, %p400
    %p402 = scmp.le.s32.totalorder 1, %s22
    %p403 = scmp.lt.s32.totalorder %s22, 3
    %p404 = pnand %p402, %p403
    %p405 = pneg %p404
    // Predicated region
    $region9: #{catfusion_forward.1} parent=5 // pred_check
      _
    $region10: #{catfusion_forward.1} parent=5 // pred_check_branch
      %407 = sbr.rel (%p404) target = $region12
    $region11: #{catfusion_forward.1} parent=5 // pred_region
      %s408 = ssub.s32 %s22, 1
      // Predicated region
      $region13: #{catfusion_forward.1} parent=11 // pred_check
        %p409 = pneg %p95
      $region14: #{catfusion_forward.1} parent=11 // pred_check_branch
        %411 = sbr.rel (%p409) target = $region16
      $region15: #{catfusion_forward.1} parent=11 // pred_region
        _
      $region16: #{catfusion_forward.1} parent=11 // pred_fallthru
        _
      // Predicated region
      $region17: #{catfusion_forward.1} parent=11 // pred_check
        %p412 = pneg %p116
      $region18: #{catfusion_forward.1} parent=11 // pred_check_branch
        %414 = sbr.rel (%p412) target = $region20
      $region19: #{catfusion_forward.1} parent=11 // pred_region
        _
      $region20: #{catfusion_forward.1} parent=11 // pred_fallthru
        _
      // Predicated region
      $region21: #{catfusion_forward.1} parent=11 // pred_check
        %p415 = pneg %p137
      $region22: #{catfusion_forward.1} parent=11 // pred_check_branch
        %417 = sbr.rel (%p415) target = $region24
      $region23: #{catfusion_forward.1} parent=11 // pred_region
        _
      $region24: #{catfusion_forward.1} parent=11 // pred_fallthru
        _
      // Predicated region
      $region25: #{catfusion_forward.1} parent=11 // pred_check
        %p418 = pneg %p158
      $region26: #{catfusion_forward.1} parent=11 // pred_check_branch
        %420 = sbr.rel (%p418) target = $region28
      $region27: #{catfusion_forward.1} parent=11 // pred_region
        _
      $region28: #{catfusion_forward.1} parent=11 // pred_fallthru
        _
      // Predicated region
      $region29: #{catfusion_forward.1} parent=11 // pred_check
        %p421 = pneg %p179
      $region30: #{catfusion_forward.1} parent=11 // pred_check_branch
        %423 = sbr.rel (%p421) target = $region32
      $region31: #{catfusion_forward.1} parent=11 // pred_region
        _
      $region32: #{catfusion_forward.1} parent=11 // pred_fallthru
        _
      // Predicated region
      $region33: #{catfusion_forward.1} parent=11 // pred_check
        %p424 = pneg %p200
      $region34: #{catfusion_forward.1} parent=11 // pred_check_branch
        %426 = sbr.rel (%p424) target = $region36
      $region35: #{catfusion_forward.1} parent=11 // pred_region
        _
      $region36: #{catfusion_forward.1} parent=11 // pred_fallthru
        _
      // Predicated region
      $region37: #{catfusion_forward.1} parent=11 // pred_check
        %p427 = pneg %p221
      $region38: #{catfusion_forward.1} parent=11 // pred_check_branch
        %429 = sbr.rel (%p427) target = $region40
      $region39: #{catfusion_forward.1} parent=11 // pred_region
        _
      $region40: #{catfusion_forward.1} parent=11 // pred_fallthru
        _
      // Predicated region
      $region41: #{catfusion_forward.1} parent=11 // pred_check
        %p430 = pneg %p242
      $region42: #{catfusion_forward.1} parent=11 // pred_check_branch
        %432 = sbr.rel (%p430) target = $region44
      $region43: #{catfusion_forward.1} parent=11 // pred_region
        _
      $region44: #{catfusion_forward.1} parent=11 // pred_fallthru
        _
      // Predicated region
      $region45: #{catfusion_forward.1} parent=11 // pred_check
        %p433 = pneg %p263
      $region46: #{catfusion_forward.1} parent=11 // pred_check_branch
        %435 = sbr.rel (%p433) target = $region48
      $region47: #{catfusion_forward.1} parent=11 // pred_region
        _
      $region48: #{catfusion_forward.1} parent=11 // pred_fallthru
        _
      // Predicated region
      $region49: #{catfusion_forward.1} parent=11 // pred_check
        %p436 = pneg %p284
      $region50: #{catfusion_forward.1} parent=11 // pred_check_branch
        %438 = sbr.rel (%p436) target = $region52
      $region51: #{catfusion_forward.1} parent=11 // pred_region
        _
      $region52: #{catfusion_forward.1} parent=11 // pred_fallthru
        _
      // Predicated region
      $region53: #{catfusion_forward.1} parent=11 // pred_check
        %p439 = pneg %p305
      $region54: #{catfusion_forward.1} parent=11 // pred_check_branch
        %441 = sbr.rel (%p439) target = $region56
      $region55: #{catfusion_forward.1} parent=11 // pred_region
        _
      $region56: #{catfusion_forward.1} parent=11 // pred_fallthru
        _
      // Predicated region
      $region57: #{catfusion_forward.1} parent=11 // pred_check
        %p442 = pneg %p326
      $region58: #{catfusion_forward.1} parent=11 // pred_check_branch
        %444 = sbr.rel (%p442) target = $region60
      $region59: #{catfusion_forward.1} parent=11 // pred_region
        _
      $region60: #{catfusion_forward.1} parent=11 // pred_fallthru
        _
      // Predicated region
      $region61: #{catfusion_forward.1} parent=11 // pred_check
        %p445 = pneg %p347
      $region62: #{catfusion_forward.1} parent=11 // pred_check_branch
        %447 = sbr.rel (%p445) target = $region64
      $region63: #{catfusion_forward.1} parent=11 // pred_region
        _
      $region64: #{catfusion_forward.1} parent=11 // pred_fallthru
        _
      // Predicated region
      $region65: #{catfusion_forward.1} parent=11 // pred_check
        %p448 = pneg %p368
      $region66: #{catfusion_forward.1} parent=11 // pred_check_branch
        %450 = sbr.rel (%p448) target = $region68
      $region67: #{catfusion_forward.1} parent=11 // pred_region
        _
      $region68: #{catfusion_forward.1} parent=11 // pred_fallthru
        _
    $region12: #{catfusion_forward.1} parent=5 // pred_fallthru
      _
    %p451 = scmp.lt.s32.totalorder %s22, 2
    // Predicated region
    $region69: #{catfusion_forward.1} parent=5 // pred_check
      %p452 = pneg %p451
    $region70: #{catfusion_forward.1} parent=5 // pred_check_branch
      %454 = sbr.rel (%p452) target = $region72
    $region71: #{catfusion_forward.1} parent=5 // pred_region
      // Predicated region
      $region73: #{catfusion_forward.1} parent=71 // pred_check
        %p455 = pneg %p42
      $region74: #{catfusion_forward.1} parent=71 // pred_check_branch
        %457 = sbr.rel (%p455) target = $region76
      $region75: #{catfusion_forward.1} parent=71 // pred_region
        %p458 = scmp.lt.s32.totalorder %s22, 1
        %s459 = scalar_select %p458, %s22, 1
        %s460 = smul.addr %s459, 2
        %s461 = smul.addr %s460, 4
        %s462 = scalar_lea.vmem %s0, %s461
      $region76: #{catfusion_forward.1} parent=71 // pred_fallthru
        _
      // Predicated region
      $region77: #{catfusion_forward.1} parent=71 // pred_check
        %p463 = pneg %p68
      $region78: #{catfusion_forward.1} parent=71 // pred_check_branch
        %465 = sbr.rel (%p463) target = $region80
      $region79: #{catfusion_forward.1} parent=71 // pred_region
        %p466 = scmp.lt.s32.totalorder %s22, 1
        %s467 = scalar_select %p466, %s22, 1
        %s468 = smul.addr %s467, 2
        %s469 = smul.addr %s468, 4
        %s470 = scalar_lea.vmem %s1, %s469
      $region80: #{catfusion_forward.1} parent=71 // pred_fallthru
        _
    $region72: #{catfusion_forward.1} parent=5 // pred_fallthru
      _
    %p471 = scmp.le.s32.totalorder 1, %s22
    %p472 = scmp.lt.s32.totalorder %s22, 3
    %p473 = pnand %p471, %p472
    %p474 = pneg %p473
    // Predicated region
    $region81: #{catfusion_forward.1} parent=5 // pred_check
      _
    $region82: #{catfusion_forward.1} parent=5 // pred_check_branch
      %476 = sbr.rel (%p473) target = $region84
    $region83: #{catfusion_forward.1} parent=5 // pred_region
      %s477 = ssub.s32 %s22, 1
      %p478 = scmp.lt.s32.totalorder %s27, 1
      %s479 = scalar_select %p478, %s27, 1
      %s480 = smul.addr %s479, 2
      %s481 = smul.addr %s480, 4
      %s482 = scalar_lea.vmem %s0, %s481
      %p483 = pneg %p48
      %p484 = pneg %p45
      %p485 = scmp.lt.s32.totalorder %s27, 1
      %s486 = scalar_select %p485, %s27, 1
      %s487 = smul.addr %s486, 2
      %s488 = smul.addr %s487, 4
      %s489 = scalar_lea.vmem %s1, %s488
      %p490 = pneg %p74
      %p491 = pneg %p71
      %p492 = pneg %p95
      %p493 = pneg %p92
      %p494 = pneg %p116
      %p495 = pneg %p113
      %p496 = pneg %p137
      %p497 = pneg %p134
      %p498 = pneg %p158
      %p499 = pneg %p155
      %p500 = pneg %p179
      %p501 = pneg %p176
      %p502 = pneg %p200
      %p503 = pneg %p197
      %p504 = pneg %p221
      %p505 = pneg %p218
      %p506 = pneg %p242
      %p507 = pneg %p239
      %p508 = pneg %p263
      %p509 = pneg %p260
      %p510 = pneg %p284
      %p511 = pneg %p281
      %p512 = pneg %p305
      %p513 = pneg %p302
      %p514 = pneg %p326
      %p515 = pneg %p323
      %p516 = pneg %p347
      %p517 = pneg %p344
      %p518 = pneg %p368
      %p519 = pneg %p365
      %p520 = pneg %p394
      %p521 = pneg %p391
      %p522 = scmp.lt.s32.totalorder %s27, 1
      %s523 = scalar_select %p522, %s27, 1
      %s524 = smul.addr %s523, 2
      %s525 = smul.addr %s524, 8
      %s526 = scalar_lea.vmem %s16, %s525
      %p527 = scmp.lt.s32.totalorder %s27, 1
      %s528 = scalar_select %p527, %s27, 1
      %s529 = smul.addr %s528, 2
      %s530 = smul.addr %s529, 4
      %s531 = scalar_lea.vmem %s0, %s530
      %p532 = scmp.lt.s32.totalorder %s27, 1
      %s533 = scalar_select %p532, %s27, 1
      %s534 = smul.addr %s533, 2
      %s535 = smul.addr %s534, 4
      %s536 = scalar_lea.vmem %s1, %s535
      %p537 = scmp.lt.s32.totalorder %s27, 1
      %s538 = scalar_select %p537, %s27, 1
      %s539 = smul.addr %s538, 2
      %s540 = smul.addr %s539, 8
      %s541 = scalar_lea.vmem %s16, %s540
      %v542 = vld [vmem:[%s531] sm:$0xff]
      %v543 = vld [vmem:[%s536] sm:$0xff]
      %v544 = vld [vmem:[%s2] sm:$0xff]
      %v545 = vld [vmem:[%s2 + $0x8] sm:$0xff]
      %v546 = vld [vmem:[%s2 + $0x10] sm:$0x1]
      %v547 = vld [vmem:[%s2 + $0x18] sm:$0x1]
      %v548 = vld [vmem:[%s3] sm:$0xff]
      %v549 = vld [vmem:[%s3 + $0x8] sm:$0xf]
      %551 = vst [vmem:[#allocation1] ss:$2 sm:$0xff] %v542
      %v552 = vld.sshfl [vmem:[#allocation1] sm:$0xff pattern:$0x75316420]
      %v553 = vld.sshfl [vmem:[#allocation1 + $0x8] sm:$0xff pattern:$0x75316420]
      %556 = vrot.lane.b32.xlu0 %v552, 17
      %v557 = vpop.permute.xlu0 %556
      %558 = vrot.lane.b32.xlu0 %v553, 17
      %v559 = vpop.permute.xlu0 %558
      %v560 = vlaneseq
      %v561 = vand.u32 %v560, 127
      %vm562 = vcmp.lt.s32.totalorder %v561, 17
      %v563 = vsel %vm562, %v557, %v559
      %v564 = vsel %vm562, %v559, %v557
      %v565 = vperm.slane %v544, 0
      %v566 = vperm.slane %v545, 0
      %v567 = vmul.f32 %v564, %v565
      %v568 = vmul.f32 %v563, %v566
      %569 = vst [vmem:[#allocation1] ss:$2 sm:$0xff] %v542
      %v570 = vld.sshfl [vmem:[#allocation1] sm:$0xff pattern:$0x75316420]
      %v571 = vld.sshfl [vmem:[#allocation1 + $0x8] sm:$0xff pattern:$0x75316420]
      %574 = vrot.lane.b32.xlu0 %v570, 16
      %v575 = vpop.permute.xlu0 %574
      %576 = vrot.lane.b32.xlu0 %v571, 16
      %v577 = vpop.permute.xlu0 %576
      %vm578 = vcmp.lt.s32.totalorder %v561, 16
      %v579 = vsel %vm578, %v575, %v577
      %v580 = vsel %vm578, %v577, %v575
      %v581 = vperm.slane %v544, 1
      %v582 = vperm.slane %v545, 1
      %v583 = vmul.f32 %v580, %v581
      %v584 = vmul.f32 %v579, %v582
      %585 = vst [vmem:[#allocation1] ss:$2 sm:$0xff] %v542
      %v586 = vld.sshfl [vmem:[#allocation1] sm:$0xff pattern:$0x75316420]
      %v587 = vld.sshfl [vmem:[#allocation1 + $0x8] sm:$0xff pattern:$0x75316420]
      %590 = vrot.lane.b32.xlu0 %v586, 15
      %v591 = vpop.permute.xlu0 %590
      %592 = vrot.lane.b32.xlu0 %v587, 15
      %v593 = vpop.permute.xlu0 %592
      %vm594 = vcmp.lt.s32.totalorder %v561, 15
      %v595 = vsel %vm594, %v591, %v593
      %v596 = vsel %vm594, %v593, %v591
      %v597 = vperm.slane %v544, 2
      %v598 = vperm.slane %v545, 2
      %v599 = vmul.f32 %v596, %v597
      %v600 = vmul.f32 %v595, %v598
      %601 = vst [vmem:[#allocation1] ss:$2 sm:$0xff] %v542
      %v602 = vld.sshfl [vmem:[#allocation1] sm:$0xff pattern:$0x75316420]
      %v603 = vld.sshfl [vmem:[#allocation1 + $0x8] sm:$0xff pattern:$0x75316420]
      %606 = vrot.lane.b32.xlu0 %v602, 1
      %v607 = vpop.permute.xlu0 %606
      %608 = vrot.lane.b32.xlu0 %v603, 1
      %v609 = vpop.permute.xlu0 %608
      %vm610 = vcmp.lt.s32.totalorder %v561, 1
      %v611 = vsel %vm610, %v607, %v609
      %v612 = vsel %vm610, %v609, %v607
      %v613 = vperm.slane %v544, 3
      %v614 = vperm.slane %v545, 3
      %v615 = vmul.f32 %v612, %v613
      %v616 = vmul.f32 %v611, %v614
      %v617 = vperm.slane %v544, 4
      %v618 = vperm.slane %v545, 4
      %v621 = vrot.slane %v618, 4
      %vm622 = vcmask 1043456
      %v623 = vsel %vm622, %v617, %v621
      %v625 = vmul.f32 %v542, %v623
      %626 = vst [vmem:[#allocation1] ss:$2 sm:$0xff] %v542
      %v627 = vld.sshfl [vmem:[#allocation1] sm:$0xff pattern:$0x75316420]
      %v628 = vld.sshfl [vmem:[#allocation1 + $0x8] sm:$0xff pattern:$0x75316420]
      %631 = vrot.lane.b32.xlu0 %v627, 127
      %v632 = vpop.permute.xlu0 %631
      %633 = vrot.lane.b32.xlu0 %v628, 127
      %v634 = vpop.permute.xlu0 %633
      %vm635 = vcmp.lt.s32.totalorder %v561, 127
      %v636 = vsel %vm635, %v632, %v634
      %v637 = vsel %vm635, %v634, %v632
      %v638 = vperm.slane %v544, 5
      %v639 = vperm.slane %v545, 5
      %v640 = vmul.f32 %v636, %v638
      %v641 = vmul.f32 %v637, %v639
      %642 = vst [vmem:[#allocation1] ss:$2 sm:$0xff] %v542
      %v643 = vld.sshfl [vmem:[#allocation1] sm:$0xff pattern:$0x75316420]
      %v644 = vld.sshfl [vmem:[#allocation1 + $0x8] sm:$0xff pattern:$0x75316420]
      %647 = vrot.lane.b32.xlu0 %v643, 113
      %v648 = vpop.permute.xlu0 %647
      %649 = vrot.lane.b32.xlu0 %v644, 113
      %v650 = vpop.permute.xlu0 %649
      %vm651 = vcmp.lt.s32.totalorder %v561, 113
      %v652 = vsel %vm651, %v648, %v650
      %v653 = vsel %vm651, %v650, %v648
      %v654 = vperm.slane %v544, 6
      %v655 = vperm.slane %v545, 6
      %v656 = vmul.f32 %v652, %v654
      %v657 = vmul.f32 %v653, %v655
      %658 = vst [vmem:[#allocation1] ss:$2 sm:$0xff] %v542
      %v659 = vld.sshfl [vmem:[#allocation1] sm:$0xff pattern:$0x75316420]
      %v660 = vld.sshfl [vmem:[#allocation1 + $0x8] sm:$0xff pattern:$0x75316420]
      %663 = vrot.lane.b32.xlu0 %v659, 112
      %v664 = vpop.permute.xlu0 %663
      %665 = vrot.lane.b32.xlu0 %v660, 112
      %v666 = vpop.permute.xlu0 %665
      %vm667 = vcmp.lt.s32.totalorder %v561, 112
      %v668 = vsel %vm667, %v664, %v666
      %v669 = vsel %vm667, %v666, %v664
      %v670 = vperm.slane %v544, 7
      %v671 = vperm.slane %v545, 7
      %v672 = vmul.f32 %v668, %v670
      %v673 = vmul.f32 %v669, %v671
      %674 = vst [vmem:[#allocation1] ss:$2 sm:$0xff] %v542
      %v675 = vld.sshfl [vmem:[#allocation1] sm:$0xff pattern:$0x75316420]
      %v676 = vld.sshfl [vmem:[#allocation1 + $0x8] sm:$0xff pattern:$0x75316420]
      %679 = vrot.lane.b32.xlu0 %v675, 111
      %v680 = vpop.permute.xlu0 %679
      %681 = vrot.lane.b32.xlu0 %v676, 111
      %v682 = vpop.permute.xlu0 %681
      %vm683 = vcmp.lt.s32.totalorder %v561, 111
      %v684 = vsel %vm683, %v680, %v682
      %v685 = vsel %vm683, %v682, %v680
      %v686 = vperm.slane %v546, 0
      %v687 = vperm.slane %v547, 0
      %v688 = vmul.f32 %v684, %v686
      %v689 = vmul.f32 %v685, %v687
      %v692 = vrot.slane %v583, 4
      %v693 = vrot.slane %v584, 4
      %v698 = vrot.slane %v615, 4
      %v699 = vrot.slane %v616, 4
      %703 = vst [vmem:[#allocation1] ss:$2 sm:$0xff] %v625
      %v704 = vld.sshfl [vmem:[#allocation1] sm:$0xff pattern:$0x75316420]
      %v705 = vld.sshfl [vmem:[#allocation1 + $0x8] sm:$0xff pattern:$0x75316420]
      %v710 = vrot.slane %v640, 4
      %v711 = vrot.slane %v641, 4
      %v716 = vrot.slane %v672, 4
      %v717 = vrot.slane %v673, 4
      %v720 = vsel %vm622, %v567, %v692
      %v721 = vsel %vm622, %v568, %v693
      %v722 = vsel %vm622, %v599, %v698
      %v723 = vsel %vm622, %v600, %v699
      %v724 = vsel %vm622, %v704, %v710
      %v725 = vsel %vm622, %v705, %v711
      %v726 = vsel %vm622, %v656, %v716
      %v727 = vsel %vm622, %v657, %v717
      %vm728 = vcmask 293888
      %v730 = vsel %vm728, %v548, 0
      %v733 = vsel %vm728, %v549, 0
      %v736 = vsel %vm622, %v688, 0
      %v739 = vsel %vm622, %v689, 0
      %741 = vmatpush.msra.mxu0 0.0
      %742 = vmatpush.msra.mxu0 0.0
      %743 = vmatpush.msra.mxu0 0.0
      %744 = vmatpush.msra.mxu0 0.0
      %745 = vmatpush.msra.mxu0 0.0
      %746 = vmatpush.msra.mxu0 0.0
      %747 = vmatpush.msra.mxu0 0.0
      %748 = vmatpush.msra.mxu0 0.0
      %749 = vmatpush.msra.mxu0 0.0
      %750 = vmatpush.msra.mxu0 0.0
      %751 = vmatpush.msra.mxu0 0.0
      %752 = vmatpush.msra.mxu0 %v736
      %753 = vmatpush.msra.mxu0 %v726
      %754 = vmatpush.msra.mxu0 %v724
      %755 = vmatpush.msra.mxu0 %v722
      %756 = vmatpush.msra.mxu0 %v720
      %757 = vmatmul.f32.gmra.mxu0 %v730
      %v758 = vpop.f32.mrf.mxu0
      %v759 = vadd.f32 0.0, %v758
      %760 = vmatmul.f32.gmra.mxu0 %v733
      %v761 = vpop.f32.mrf.mxu0
      %v762 = vadd.f32 0.0, %v761
      %763 = vdwg.mxu0
      %764 = vmatpush.msra.mxu0 0.0
      %765 = vmatpush.msra.mxu0 0.0
      %766 = vmatpush.msra.mxu0 0.0
      %767 = vmatpush.msra.mxu0 0.0
      %768 = vmatpush.msra.mxu0 0.0
      %769 = vmatpush.msra.mxu0 0.0
      %770 = vmatpush.msra.mxu0 0.0
      %771 = vmatpush.msra.mxu0 0.0
      %772 = vmatpush.msra.mxu0 0.0
      %773 = vmatpush.msra.mxu0 0.0
      %774 = vmatpush.msra.mxu0 0.0
      %775 = vmatpush.msra.mxu0 %v739
      %776 = vmatpush.msra.mxu0 %v727
      %777 = vmatpush.msra.mxu0 %v725
      %778 = vmatpush.msra.mxu0 %v723
      %779 = vmatpush.msra.mxu0 %v721
      %780 = vmatmul.f32.gmra.mxu0 %v730
      %v781 = vpop.f32.mrf.mxu0
      %v782 = vadd.f32 0.0, %v781
      %783 = vmatmul.f32.gmra.mxu0 %v733
      %v784 = vpop.f32.mrf.mxu0
      %v785 = vadd.f32 0.0, %v784
      %786 = vdwg.mxu0
      %v787 = vld [vmem:[%s6] sm:$0xff]
      %v788 = vld [vmem:[%s6 + $0x8] sm:$0xf]
      %790 = vst [vmem:[#allocation1] ss:$2 sm:$0xff] %v543
      %v791 = vld.sshfl [vmem:[#allocation1] sm:$0xff pattern:$0x75316420]
      %v792 = vld.sshfl [vmem:[#allocation1 + $0x8] sm:$0xff pattern:$0x75316420]
      %795 = vrot.lane.b32.xlu0 %v791, 17
      %v796 = vpop.permute.xlu0 %795
      %797 = vrot.lane.b32.xlu0 %v792, 17
      %v798 = vpop.permute.xlu0 %797
      %v799 = vsel %vm562, %v796, %v798
      %v800 = vsel %vm562, %v798, %v796
      %v801 = vmul.f32 %v800, %v565
      %v802 = vmul.f32 %v799, %v566
      %803 = vst [vmem:[#allocation1] ss:$2 sm:$0xff] %v543
      %v804 = vld.sshfl [vmem:[#allocation1] sm:$0xff pattern:$0x75316420]
      %v805 = vld.sshfl [vmem:[#allocation1 + $0x8] sm:$0xff pattern:$0x75316420]
      %808 = vrot.lane.b32.xlu0 %v804, 16
      %v809 = vpop.permute.xlu0 %808
      %810 = vrot.lane.b32.xlu0 %v805, 16
      %v811 = vpop.permute.xlu0 %810
      %v812 = vsel %vm578, %v809, %v811
      %v813 = vsel %vm578, %v811, %v809
      %v814 = vmul.f32 %v813, %v581
      %v815 = vmul.f32 %v812, %v582
      %816 = vst [vmem:[#allocation1] ss:$2 sm:$0xff] %v543
      %v817 = vld.sshfl [vmem:[#allocation1] sm:$0xff pattern:$0x75316420]
      %v818 = vld.sshfl [vmem:[#allocation1 + $0x8] sm:$0xff pattern:$0x75316420]
      %821 = vrot.lane.b32.xlu0 %v817, 15
      %v822 = vpop.permute.xlu0 %821
      %823 = vrot.lane.b32.xlu0 %v818, 15
      %v824 = vpop.permute.xlu0 %823
      %v825 = vsel %vm594, %v822, %v824
      %v826 = vsel %vm594, %v824, %v822
      %v827 = vmul.f32 %v826, %v597
      %v828 = vmul.f32 %v825, %v598
      %829 = vst [vmem:[#allocation1] ss:$2 sm:$0xff] %v543
      %v830 = vld.sshfl [vmem:[#allocation1] sm:$0xff pattern:$0x75316420]
      %v831 = vld.sshfl [vmem:[#allocation1 + $0x8] sm:$0xff pattern:$0x75316420]
      %834 = vrot.lane.b32.xlu0 %v830, 1
      %v835 = vpop.permute.xlu0 %834
      %836 = vrot.lane.b32.xlu0 %v831, 1
      %v837 = vpop.permute.xlu0 %836
      %v838 = vsel %vm610, %v835, %v837
      %v839 = vsel %vm610, %v837, %v835
      %v840 = vmul.f32 %v839, %v613
      %v841 = vmul.f32 %v838, %v614
      %v842 = vmul.f32 %v543, %v623
      %843 = vst [vmem:[#allocation1] ss:$2 sm:$0xff] %v543
      %v844 = vld.sshfl [vmem:[#allocation1] sm:$0xff pattern:$0x75316420]
      %v845 = vld.sshfl [vmem:[#allocation1 + $0x8] sm:$0xff pattern:$0x75316420]
      %848 = vrot.lane.b32.xlu0 %v844, 127
      %v849 = vpop.permute.xlu0 %848
      %850 = vrot.lane.b32.xlu0 %v845, 127
      %v851 = vpop.permute.xlu0 %850
      %v852 = vsel %vm635, %v849, %v851
      %v853 = vsel %vm635, %v851, %v849
      %v854 = vmul.f32 %v852, %v638
      %v855 = vmul.f32 %v853, %v639
      %856 = vst [vmem:[#allocation1] ss:$2 sm:$0xff] %v543
      %v857 = vld.sshfl [vmem:[#allocation1] sm:$0xff pattern:$0x75316420]
      %v858 = vld.sshfl [vmem:[#allocation1 + $0x8] sm:$0xff pattern:$0x75316420]
      %861 = vrot.lane.b32.xlu0 %v857, 113
      %v862 = vpop.permute.xlu0 %861
      %863 = vrot.lane.b32.xlu0 %v858, 113
      %v864 = vpop.permute.xlu0 %863
      %v865 = vsel %vm651, %v862, %v864
      %v866 = vsel %vm651, %v864, %v862
      %v867 = vmul.f32 %v865, %v654
      %v868 = vmul.f32 %v866, %v655
      %869 = vst [vmem:[#allocation1] ss:$2 sm:$0xff] %v543
      %v870 = vld.sshfl [vmem:[#allocation1] sm:$0xff pattern:$0x75316420]
      %v871 = vld.sshfl [vmem:[#allocation1 + $0x8] sm:$0xff pattern:$0x75316420]
      %874 = vrot.lane.b32.xlu0 %v870, 112
      %v875 = vpop.permute.xlu0 %874
      %876 = vrot.lane.b32.xlu0 %v871, 112
      %v877 = vpop.permute.xlu0 %876
      %v878 = vsel %vm667, %v875, %v877
      %v879 = vsel %vm667, %v877, %v875
      %v880 = vmul.f32 %v878, %v670
      %v881 = vmul.f32 %v879, %v671
      %882 = vst [vmem:[#allocation1] ss:$2 sm:$0xff] %v543
      %v883 = vld.sshfl [vmem:[#allocation1] sm:$0xff pattern:$0x75316420]
      %v884 = vld.sshfl [vmem:[#allocation1 + $0x8] sm:$0xff pattern:$0x75316420]
      %887 = vrot.lane.b32.xlu0 %v883, 111
      %v888 = vpop.permute.xlu0 %887
      %889 = vrot.lane.b32.xlu0 %v884, 111
      %v890 = vpop.permute.xlu0 %889
      %v891 = vsel %vm683, %v888, %v890
      %v892 = vsel %vm683, %v890, %v888
      %v893 = vmul.f32 %v891, %v686
      %v894 = vmul.f32 %v892, %v687
      %v897 = vrot.slane %v814, 4
      %v898 = vrot.slane %v815, 4
      %v903 = vrot.slane %v840, 4
      %v904 = vrot.slane %v841, 4
      %908 = vst [vmem:[#allocation1] ss:$2 sm:$0xff] %v842
      %v909 = vld.sshfl [vmem:[#allocation1] sm:$0xff pattern:$0x75316420]
      %v910 = vld.sshfl [vmem:[#allocation1 + $0x8] sm:$0xff pattern:$0x75316420]
      %v915 = vrot.slane %v854, 4
      %v916 = vrot.slane %v855, 4
      %v921 = vrot.slane %v880, 4
      %v922 = vrot.slane %v881, 4
      %v925 = vsel %vm622, %v801, %v897
      %v926 = vsel %vm622, %v802, %v898
      %v927 = vsel %vm622, %v827, %v903
      %v928 = vsel %vm622, %v828, %v904
      %v929 = vsel %vm622, %v909, %v915
      %v930 = vsel %vm622, %v910, %v916
      %v931 = vsel %vm622, %v867, %v921
      %v932 = vsel %vm622, %v868, %v922
      %v934 = vsel %vm728, %v787, 0
      %v937 = vsel %vm728, %v788, 0
      %v940 = vsel %vm622, %v893, 0
      %v943 = vsel %vm622, %v894, 0
      %945 = vmatpush.msra.mxu0 0.0
      %946 = vmatpush.msra.mxu0 0.0
      %947 = vmatpush.msra.mxu0 0.0
      %948 = vmatpush.msra.mxu0 0.0
      %949 = vmatpush.msra.mxu0 0.0
      %950 = vmatpush.msra.mxu0 0.0
      %951 = vmatpush.msra.mxu0 0.0
      %952 = vmatpush.msra.mxu0 0.0
      %953 = vmatpush.msra.mxu0 0.0
      %954 = vmatpush.msra.mxu0 0.0
      %955 = vmatpush.msra.mxu0 0.0
      %956 = vmatpush.msra.mxu0 %v940
      %957 = vmatpush.msra.mxu0 %v931
      %958 = vmatpush.msra.mxu0 %v929
      %959 = vmatpush.msra.mxu0 %v927
      %960 = vmatpush.msra.mxu0 %v925
      %961 = vmatmul.f32.gmra.mxu0 %v934
      %v962 = vpop.f32.mrf.mxu0
      %v963 = vadd.f32 0.0, %v962
      %964 = vmatmul.f32.gmra.mxu0 %v937
      %v965 = vpop.f32.mrf.mxu0
      %v966 = vadd.f32 0.0, %v965
      %967 = vdwg.mxu0
      %968 = vmatpush.msra.mxu0 0.0
      %969 = vmatpush.msra.mxu0 0.0
      %970 = vmatpush.msra.mxu0 0.0
      %971 = vmatpush.msra.mxu0 0.0
      %972 = vmatpush.msra.mxu0 0.0
      %973 = vmatpush.msra.mxu0 0.0
      %974 = vmatpush.msra.mxu0 0.0
      %975 = vmatpush.msra.mxu0 0.0
      %976 = vmatpush.msra.mxu0 0.0
      %977 = vmatpush.msra.mxu0 0.0
      %978 = vmatpush.msra.mxu0 0.0
      %979 = vmatpush.msra.mxu0 %v943
      %980 = vmatpush.msra.mxu0 %v932
      %981 = vmatpush.msra.mxu0 %v930
      %982 = vmatpush.msra.mxu0 %v928
      %983 = vmatpush.msra.mxu0 %v926
      %984 = vmatmul.f32.gmra.mxu0 %v934
      %v985 = vpop.f32.mrf.mxu0
      %v986 = vadd.f32 0.0, %v985
      %987 = vmatmul.f32.gmra.mxu0 %v937
      %v988 = vpop.f32.mrf.mxu0
      %v989 = vadd.f32 0.0, %v988
      %990 = vdwg.mxu0
      %v991 = vld [vmem:[%s4] sm:$0xff]
      %v992 = vld [vmem:[%s4 + $0x8] sm:$0xf]
      %994 = vset.pattern.permute.xlu0 0
      %995 = vperm.xlu0 %994, %v991
      %v996 = vpop.permute.xlu0 %995
      %999 = vset.pattern.permute.xlu0 0
      %1000 = vperm.xlu0 %999, %v992
      %v1001 = vpop.permute.xlu0 %1000
      %v1003 = vmul.f32 %v759, %v996
      %v1004 = vmul.f32 %v782, %v996
      %v1005 = vmul.f32 %v762, %v1001
      %v1006 = vmul.f32 %v785, %v1001
      %v1007 = vld [vmem:[%s5] sm:$0xff]
      %v1008 = vld [vmem:[%s5 + $0x8] sm:$0xf]
      %1010 = vset.pattern.permute.xlu0 0
      %1011 = vperm.xlu0 %1010, %v1007
      %v1012 = vpop.permute.xlu0 %1011
      %1015 = vset.pattern.permute.xlu0 0
      %1016 = vperm.xlu0 %1015, %v1008
      %v1017 = vpop.permute.xlu0 %1016
      %v1019 = vadd.f32 %v1003, %v1012
      %v1020 = vadd.f32 %v1004, %v1012
      %v1021 = vadd.f32 %v1005, %v1017
      %v1022 = vadd.f32 %v1006, %v1017
      %v1023 = vxor.u32 %v1019, 2147483648
      %v1024 = vxor.u32 %v1020, 2147483648
      %v1025 = vxor.u32 %v1021, 2147483648
      %v1026 = vxor.u32 %v1022, 2147483648
      %v1027 = vmul.f32 %v1023, 1.442695
      %v1028 = vpow.pop %v1027
      %v1029 = vmul.f32 %v1024, 1.442695
      %v1030 = vpow.pop %v1029
      %v1031 = vmul.f32 %v1025, 1.442695
      %v1032 = vpow.pop %v1031
      %v1033 = vmul.f32 %v1026, 1.442695
      %v1034 = vpow.pop %v1033
      %v1035 = vadd.f32 %v1028, 1.0
      %v1036 = vadd.f32 %v1030, 1.0
      %v1037 = vadd.f32 %v1032, 1.0
      %v1038 = vadd.f32 %v1034, 1.0
      %v1039 = vrcp.pop %v1035
      %v1040 = vmul.f32 %v1035, %v1039
      %v1041 = vsub.f32 1.0, %v1040
      %v1042 = vmul.f32 %v1039, %v1041
      %v1043 = vadd.f32 %v1039, %v1042
      %vm1044 = vweird.f32 %v1035
      %vm1045 = vweird.f32 %v1039
      %vm1046 = vmor %vm1044, %vm1045
      %v1047 = vsel %vm1046, %v1039, %v1043
      %v1048 = vand.u32 2147483647, %v1035
      %vm1049 = vcmp.eq.f32.partialorder %v1048, 8.507059e+37
      %v1050 = vand.u32 %v1035, 2147483648
      %v1051 = vor.u32 1.1754944e-38, %v1050
      %v1052 = vsel %vm1049, %v1051, %v1047
      %v1053 = vmul.f32 1.0, %v1052
      %v1054 = vrcp.pop %v1036
      %v1055 = vmul.f32 %v1036, %v1054
      %v1056 = vsub.f32 1.0, %v1055
      %v1057 = vmul.f32 %v1054, %v1056
      %v1058 = vadd.f32 %v1054, %v1057
      %vm1059 = vweird.f32 %v1036
      %vm1060 = vweird.f32 %v1054
      %vm1061 = vmor %vm1059, %vm1060
      %v1062 = vsel %vm1061, %v1054, %v1058
      %v1063 = vand.u32 2147483647, %v1036
      %vm1064 = vcmp.eq.f32.partialorder %v1063, 8.507059e+37
      %v1065 = vand.u32 %v1036, 2147483648
      %v1066 = vor.u32 1.1754944e-38, %v1065
      %v1067 = vsel %vm1064, %v1066, %v1062
      %v1068 = vmul.f32 1.0, %v1067
      %v1069 = vrcp.pop %v1037
      %v1070 = vmul.f32 %v1037, %v1069
      %v1071 = vsub.f32 1.0, %v1070
      %v1072 = vmul.f32 %v1069, %v1071
      %v1073 = vadd.f32 %v1069, %v1072
      %vm1074 = vweird.f32 %v1037
      %vm1075 = vweird.f32 %v1069
      %vm1076 = vmor %vm1074, %vm1075
      %v1077 = vsel %vm1076, %v1069, %v1073
      %v1078 = vand.u32 2147483647, %v1037
      %vm1079 = vcmp.eq.f32.partialorder %v1078, 8.507059e+37
      %v1080 = vand.u32 %v1037, 2147483648
      %v1081 = vor.u32 1.1754944e-38, %v1080
      %v1082 = vsel %vm1079, %v1081, %v1077
      %v1083 = vmul.f32 1.0, %v1082
      %v1084 = vrcp.pop %v1038
      %v1085 = vmul.f32 %v1038, %v1084
      %v1086 = vsub.f32 1.0, %v1085
      %v1087 = vmul.f32 %v1084, %v1086
      %v1088 = vadd.f32 %v1084, %v1087
      %vm1089 = vweird.f32 %v1038
      %vm1090 = vweird.f32 %v1084
      %vm1091 = vmor %vm1089, %vm1090
      %v1092 = vsel %vm1091, %v1084, %v1088
      %v1093 = vand.u32 2147483647, %v1038
      %vm1094 = vcmp.eq.f32.partialorder %v1093, 8.507059e+37
      %v1095 = vand.u32 %v1038, 2147483648
      %v1096 = vor.u32 1.1754944e-38, %v1095
      %v1097 = vsel %vm1094, %v1096, %v1092
      %v1098 = vmul.f32 1.0, %v1097
      %v1099 = vld [vmem:[%s7] sm:$0xff]
      %v1100 = vld [vmem:[%s7 + $0x8] sm:$0xf]
      %1102 = vset.pattern.permute.xlu0 0
      %1103 = vperm.xlu0 %1102, %v1099
      %v1104 = vpop.permute.xlu0 %1103
      %1107 = vset.pattern.permute.xlu0 0
      %1108 = vperm.xlu0 %1107, %v1100
      %v1109 = vpop.permute.xlu0 %1108
      %v1111 = vmul.f32 %v963, %v1104
      %v1112 = vmul.f32 %v986, %v1104
      %v1113 = vmul.f32 %v966, %v1109
      %v1114 = vmul.f32 %v989, %v1109
      %v1115 = vld [vmem:[%s8] sm:$0xff]
      %v1116 = vld [vmem:[%s8 + $0x8] sm:$0xf]
      %1118 = vset.pattern.permute.xlu0 0
      %1119 = vperm.xlu0 %1118, %v1115
      %v1120 = vpop.permute.xlu0 %1119
      %1123 = vset.pattern.permute.xlu0 0
      %1124 = vperm.xlu0 %1123, %v1116
      %v1125 = vpop.permute.xlu0 %1124
      %v1127 = vadd.f32 %v1111, %v1120
      %v1128 = vadd.f32 %v1112, %v1120
      %v1129 = vadd.f32 %v1113, %v1125
      %v1130 = vadd.f32 %v1114, %v1125
      %v1131 = vxor.u32 %v1127, 2147483648
      %v1132 = vxor.u32 %v1128, 2147483648
      %v1133 = vxor.u32 %v1129, 2147483648
      %v1134 = vxor.u32 %v1130, 2147483648
      %v1135 = vmul.f32 %v1131, 1.442695
      %v1136 = vpow.pop %v1135
      %v1137 = vmul.f32 %v1132, 1.442695
      %v1138 = vpow.pop %v1137
      %v1139 = vmul.f32 %v1133, 1.442695
      %v1140 = vpow.pop %v1139
      %v1141 = vmul.f32 %v1134, 1.442695
      %v1142 = vpow.pop %v1141
      %v1143 = vadd.f32 %v1136, 1.0
      %v1144 = vadd.f32 %v1138, 1.0
      %v1145 = vadd.f32 %v1140, 1.0
      %v1146 = vadd.f32 %v1142, 1.0
      %v1147 = vrcp.pop %v1143
      %v1148 = vmul.f32 %v1143, %v1147
      %v1149 = vsub.f32 1.0, %v1148
      %v1150 = vmul.f32 %v1147, %v1149
      %v1151 = vadd.f32 %v1147, %v1150
      %vm1152 = vweird.f32 %v1143
      %vm1153 = vweird.f32 %v1147
      %vm1154 = vmor %vm1152, %vm1153
      %v1155 = vsel %vm1154, %v1147, %v1151
      %v1156 = vand.u32 2147483647, %v1143
      %vm1157 = vcmp.eq.f32.partialorder %v1156, 8.507059e+37
      %v1158 = vand.u32 %v1143, 2147483648
      %v1159 = vor.u32 1.1754944e-38, %v1158
      %v1160 = vsel %vm1157, %v1159, %v1155
      %v1161 = vmul.f32 1.0, %v1160
      %v1162 = vrcp.pop %v1144
      %v1163 = vmul.f32 %v1144, %v1162
      %v1164 = vsub.f32 1.0, %v1163
      %v1165 = vmul.f32 %v1162, %v1164
      %v1166 = vadd.f32 %v1162, %v1165
      %vm1167 = vweird.f32 %v1144
      %vm1168 = vweird.f32 %v1162
      %vm1169 = vmor %vm1167, %vm1168
      %v1170 = vsel %vm1169, %v1162, %v1166
      %v1171 = vand.u32 2147483647, %v1144
      %vm1172 = vcmp.eq.f32.partialorder %v1171, 8.507059e+37
      %v1173 = vand.u32 %v1144, 2147483648
      %v1174 = vor.u32 1.1754944e-38, %v1173
      %v1175 = vsel %vm1172, %v1174, %v1170
      %v1176 = vmul.f32 1.0, %v1175
      %v1177 = vrcp.pop %v1145
      %v1178 = vmul.f32 %v1145, %v1177
      %v1179 = vsub.f32 1.0, %v1178
      %v1180 = vmul.f32 %v1177, %v1179
      %v1181 = vadd.f32 %v1177, %v1180
      %vm1182 = vweird.f32 %v1145
      %vm1183 = vweird.f32 %v1177
      %vm1184 = vmor %vm1182, %vm1183
      %v1185 = vsel %vm1184, %v1177, %v1181
      %v1186 = vand.u32 2147483647, %v1145
      %vm1187 = vcmp.eq.f32.partialorder %v1186, 8.507059e+37
      %v1188 = vand.u32 %v1145, 2147483648
      %v1189 = vor.u32 1.1754944e-38, %v1188
      %v1190 = vsel %vm1187, %v1189, %v1185
      %v1191 = vmul.f32 1.0, %v1190
      %v1192 = vrcp.pop %v1146
      %v1193 = vmul.f32 %v1146, %v1192
      %v1194 = vsub.f32 1.0, %v1193
      %v1195 = vmul.f32 %v1192, %v1194
      %v1196 = vadd.f32 %v1192, %v1195
      %vm1197 = vweird.f32 %v1146
      %vm1198 = vweird.f32 %v1192
      %vm1199 = vmor %vm1197, %vm1198
      %v1200 = vsel %vm1199, %v1192, %v1196
      %v1201 = vand.u32 2147483647, %v1146
      %vm1202 = vcmp.eq.f32.partialorder %v1201, 8.507059e+37
      %v1203 = vand.u32 %v1146, 2147483648
      %v1204 = vor.u32 1.1754944e-38, %v1203
      %v1205 = vsel %vm1202, %v1204, %v1200
      %v1206 = vmul.f32 1.0, %v1205
      %v1207 = vmul.f32 %v1053, %v1161
      %v1208 = vmul.f32 %v1068, %v1176
      %v1209 = vmul.f32 %v1053, %v1053
      %v1210 = vmul.f32 %v1068, %v1068
      %v1211 = vmul.f32 %v1161, %v1161
      %v1212 = vmul.f32 %v1176, %v1176
      %v1213 = vsel %vm622, %v1207, 0.0
      %v1214 = vrot.slane %v1213, 4
      %v1215 = vadd.f32 %v1213, %v1214
      %v1216 = vrot.slane %v1215, 2
      %v1217 = vadd.f32 %v1215, %v1216
      %v1218 = vrot.slane %v1217, 1
      %v1219 = vadd.f32 %v1217, %v1218
      %v1220 = vsel %vm622, %v1208, 0.0
      %v1221 = vrot.slane %v1220, 4
      %v1222 = vadd.f32 %v1220, %v1221
      %v1223 = vrot.slane %v1222, 2
      %v1224 = vadd.f32 %v1222, %v1223
      %v1225 = vrot.slane %v1224, 1
      %v1226 = vadd.f32 %v1224, %v1225
      %v1227 = vsel %vm622, %v1209, 0.0
      %v1228 = vrot.slane %v1227, 4
      %v1229 = vadd.f32 %v1227, %v1228
      %v1230 = vrot.slane %v1229, 2
      %v1231 = vadd.f32 %v1229, %v1230
      %v1232 = vrot.slane %v1231, 1
      %v1233 = vadd.f32 %v1231, %v1232
      %v1234 = vsel %vm622, %v1210, 0.0
      %v1235 = vrot.slane %v1234, 4
      %v1236 = vadd.f32 %v1234, %v1235
      %v1237 = vrot.slane %v1236, 2
      %v1238 = vadd.f32 %v1236, %v1237
      %v1239 = vrot.slane %v1238, 1
      %v1240 = vadd.f32 %v1238, %v1239
      %v1241 = vsel %vm622, %v1211, 0.0
      %v1242 = vrot.slane %v1241, 4
      %v1243 = vadd.f32 %v1241, %v1242
      %v1244 = vrot.slane %v1243, 2
      %v1245 = vadd.f32 %v1243, %v1244
      %v1246 = vrot.slane %v1245, 1
      %v1247 = vadd.f32 %v1245, %v1246
      %v1248 = vsel %vm622, %v1212, 0.0
      %v1249 = vrot.slane %v1248, 4
      %v1250 = vadd.f32 %v1248, %v1249
      %v1251 = vrot.slane %v1250, 2
      %v1252 = vadd.f32 %v1250, %v1251
      %v1253 = vrot.slane %v1252, 1
      %v1254 = vadd.f32 %v1252, %v1253
      %v1255 = vsel %vm622, %v1053, 0.0
      %v1256 = vrot.slane %v1255, 4
      %v1257 = vadd.f32 %v1255, %v1256
      %v1258 = vrot.slane %v1257, 2
      %v1259 = vadd.f32 %v1257, %v1258
      %v1260 = vrot.slane %v1259, 1
      %v1261 = vadd.f32 %v1259, %v1260
      %v1262 = vsel %vm622, %v1068, 0.0
      %v1263 = vrot.slane %v1262, 4
      %v1264 = vadd.f32 %v1262, %v1263
      %v1265 = vrot.slane %v1264, 2
      %v1266 = vadd.f32 %v1264, %v1265
      %v1267 = vrot.slane %v1266, 1
      %v1268 = vadd.f32 %v1266, %v1267
      %v1269 = vsel %vm622, %v1161, 0.0
      %v1270 = vrot.slane %v1269, 4
      %v1271 = vadd.f32 %v1269, %v1270
      %v1272 = vrot.slane %v1271, 2
      %v1273 = vadd.f32 %v1271, %v1272
      %v1274 = vrot.slane %v1273, 1
      %v1275 = vadd.f32 %v1273, %v1274
      %v1276 = vsel %vm622, %v1176, 0.0
      %v1277 = vrot.slane %v1276, 4
      %v1278 = vadd.f32 %v1276, %v1277
      %v1279 = vrot.slane %v1278, 2
      %v1280 = vadd.f32 %v1278, %v1279
      %v1281 = vrot.slane %v1280, 1
      %v1282 = vadd.f32 %v1280, %v1281
      %v1283 = vadd.f32 %v1233, %v1247
      %v1284 = vadd.f32 %v1240, %v1254
      %v1285 = vmul.f32 %v1219, -1.0
      %v1286 = vmul.f32 %v1226, -1.0
      %v1287 = vadd.f32 %v1283, %v1285
      %v1288 = vadd.f32 %v1284, %v1286
      %v1289 = vadd.f32 %v1287, 1e-05
      %v1290 = vadd.f32 %v1288, 1e-05
      %v1291 = vrcp.pop %v1289
      %v1292 = vmul.f32 %v1289, %v1291
      %v1293 = vsub.f32 1.0, %v1292
      %v1294 = vmul.f32 %v1291, %v1293
      %v1295 = vadd.f32 %v1291, %v1294
      %vm1296 = vweird.f32 %v1289
      %vm1297 = vweird.f32 %v1291
      %vm1298 = vmor %vm1296, %vm1297
      %v1299 = vsel %vm1298, %v1291, %v1295
      %v1300 = vand.u32 2147483647, %v1289
      %vm1301 = vcmp.eq.f32.partialorder %v1300, 8.507059e+37
      %v1302 = vand.u32 %v1289, 2147483648
      %v1303 = vor.u32 1.1754944e-38, %v1302
      %v1304 = vsel %vm1301, %v1303, %v1299
      %v1305 = vmul.f32 1.0, %v1304
      %v1306 = vrcp.pop %v1290
      %v1307 = vmul.f32 %v1290, %v1306
      %v1308 = vsub.f32 1.0, %v1307
      %v1309 = vmul.f32 %v1306, %v1308
      %v1310 = vadd.f32 %v1306, %v1309
      %vm1311 = vweird.f32 %v1290
      %vm1312 = vweird.f32 %v1306
      %vm1313 = vmor %vm1311, %vm1312
      %v1314 = vsel %vm1313, %v1306, %v1310
      %v1315 = vand.u32 2147483647, %v1290
      %vm1316 = vcmp.eq.f32.partialorder %v1315, 8.507059e+37
      %v1317 = vand.u32 %v1290, 2147483648
      %v1318 = vor.u32 1.1754944e-38, %v1317
      %v1319 = vsel %vm1316, %v1318, %v1314
      %v1320 = vmul.f32 1.0, %v1319
      %v1321 = vadd.f32 %v1305, 0.0
      %v1322 = vadd.f32 %v1320, 0.0
      %v1323 = vmul.f32 %v1283, 2.0
      %v1324 = vmul.f32 %v1284, 2.0
      %v1325 = vmul.f32 %v1219, -3.0
      %v1326 = vmul.f32 %v1226, -3.0
      %v1327 = vadd.f32 %v1323, %v1325
      %v1328 = vadd.f32 %v1324, %v1326
      %v1329 = vadd.f32 %v1327, 1e-05
      %v1330 = vadd.f32 %v1328, 1e-05
      %v1331 = vrcp.pop %v1329
      %v1332 = vmul.f32 %v1329, %v1331
      %v1333 = vsub.f32 1.0, %v1332
      %v1334 = vmul.f32 %v1331, %v1333
      %v1335 = vadd.f32 %v1331, %v1334
      %vm1336 = vweird.f32 %v1329
      %vm1337 = vweird.f32 %v1331
      %vm1338 = vmor %vm1336, %vm1337
      %v1339 = vsel %vm1338, %v1331, %v1335
      %v1340 = vand.u32 2147483647, %v1329
      %vm1341 = vcmp.eq.f32.partialorder %v1340, 8.507059e+37
      %v1342 = vand.u32 %v1329, 2147483648
      %v1343 = vor.u32 1.1754944e-38, %v1342
      %v1344 = vsel %vm1341, %v1343, %v1339
      %v1345 = vmul.f32 1.0, %v1344
      %v1346 = vrcp.pop %v1330
      %v1347 = vmul.f32 %v1330, %v1346
      %v1348 = vsub.f32 1.0, %v1347
      %v1349 = vmul.f32 %v1346, %v1348
      %v1350 = vadd.f32 %v1346, %v1349
      %vm1351 = vweird.f32 %v1330
      %vm1352 = vweird.f32 %v1346
      %vm1353 = vmor %vm1351, %vm1352
      %v1354 = vsel %vm1353, %v1346, %v1350
      %v1355 = vand.u32 2147483647, %v1330
      %vm1356 = vcmp.eq.f32.partialorder %v1355, 8.507059e+37
      %v1357 = vand.u32 %v1330, 2147483648
      %v1358 = vor.u32 1.1754944e-38, %v1357
      %v1359 = vsel %vm1356, %v1358, %v1354
      %v1360 = vmul.f32 1.0, %v1359
      %v1361 = vadd.f32 %v1321, %v1345
      %v1362 = vadd.f32 %v1322, %v1360
      %v1363 = vmul.f32 %v1283, 4.0
      %v1364 = vmul.f32 %v1284, 4.0
      %v1365 = vmul.f32 %v1219, -7.0
      %v1366 = vmul.f32 %v1226, -7.0
      %v1367 = vadd.f32 %v1363, %v1365
      %v1368 = vadd.f32 %v1364, %v1366
      %v1369 = vadd.f32 %v1367, 1e-05
      %v1370 = vadd.f32 %v1368, 1e-05
      %v1371 = vrcp.pop %v1369
      %v1372 = vmul.f32 %v1369, %v1371
      %v1373 = vsub.f32 1.0, %v1372
      %v1374 = vmul.f32 %v1371, %v1373
      %v1375 = vadd.f32 %v1371, %v1374
      %vm1376 = vweird.f32 %v1369
      %vm1377 = vweird.f32 %v1371
      %vm1378 = vmor %vm1376, %vm1377
      %v1379 = vsel %vm1378, %v1371, %v1375
      %v1380 = vand.u32 2147483647, %v1369
      %vm1381 = vcmp.eq.f32.partialorder %v1380, 8.507059e+37
      %v1382 = vand.u32 %v1369, 2147483648
      %v1383 = vor.u32 1.1754944e-38, %v1382
      %v1384 = vsel %vm1381, %v1383, %v1379
      %v1385 = vmul.f32 1.0, %v1384
      %v1386 = vrcp.pop %v1370
      %v1387 = vmul.f32 %v1370, %v1386
      %v1388 = vsub.f32 1.0, %v1387
      %v1389 = vmul.f32 %v1386, %v1388
      %v1390 = vadd.f32 %v1386, %v1389
      %vm1391 = vweird.f32 %v1370
      %vm1392 = vweird.f32 %v1386
      %vm1393 = vmor %vm1391, %vm1392
      %v1394 = vsel %vm1393, %v1386, %v1390
      %v1395 = vand.u32 2147483647, %v1370
      %vm1396 = vcmp.eq.f32.partialorder %v1395, 8.507059e+37
      %v1397 = vand.u32 %v1370, 2147483648
      %v1398 = vor.u32 1.1754944e-38, %v1397
      %v1399 = vsel %vm1396, %v1398, %v1394
      %v1400 = vmul.f32 1.0, %v1399
      %v1401 = vadd.f32 %v1361, %v1385
      %v1402 = vadd.f32 %v1362, %v1400
      %v1403 = vmul.f32 %v1283, 8.0
      %v1404 = vmul.f32 %v1284, 8.0
      %v1405 = vmul.f32 %v1219, -15.0
      %v1406 = vmul.f32 %v1226, -15.0
      %v1407 = vadd.f32 %v1403, %v1405
      %v1408 = vadd.f32 %v1404, %v1406
      %v1409 = vadd.f32 %v1407, 1e-05
      %v1410 = vadd.f32 %v1408, 1e-05
      %v1411 = vrcp.pop %v1409
      %v1412 = vmul.f32 %v1409, %v1411
      %v1413 = vsub.f32 1.0, %v1412
      %v1414 = vmul.f32 %v1411, %v1413
      %v1415 = vadd.f32 %v1411, %v1414
      %vm1416 = vweird.f32 %v1409
      %vm1417 = vweird.f32 %v1411
      %vm1418 = vmor %vm1416, %vm1417
      %v1419 = vsel %vm1418, %v1411, %v1415
      %v1420 = vand.u32 2147483647, %v1409
      %vm1421 = vcmp.eq.f32.partialorder %v1420, 8.507059e+37
      %v1422 = vand.u32 %v1409, 2147483648
      %v1423 = vor.u32 1.1754944e-38, %v1422
      %v1424 = vsel %vm1421, %v1423, %v1419
      %v1425 = vmul.f32 1.0, %v1424
      %v1426 = vrcp.pop %v1410
      %v1427 = vmul.f32 %v1410, %v1426
      %v1428 = vsub.f32 1.0, %v1427
      %v1429 = vmul.f32 %v1426, %v1428
      %v1430 = vadd.f32 %v1426, %v1429
      %vm1431 = vweird.f32 %v1410
      %vm1432 = vweird.f32 %v1426
      %vm1433 = vmor %vm1431, %vm1432
      %v1434 = vsel %vm1433, %v1426, %v1430
      %v1435 = vand.u32 2147483647, %v1410
      %vm1436 = vcmp.eq.f32.partialorder %v1435, 8.507059e+37
      %v1437 = vand.u32 %v1410, 2147483648
      %v1438 = vor.u32 1.1754944e-38, %v1437
      %v1439 = vsel %vm1436, %v1438, %v1434
      %v1440 = vmul.f32 1.0, %v1439
      %v1441 = vadd.f32 %v1401, %v1425
      %v1442 = vadd.f32 %v1402, %v1440
      %v1443 = vmul.f32 %v1283, 16.0
      %v1444 = vmul.f32 %v1284, 16.0
      %v1445 = vmul.f32 %v1219, -31.0
      %v1446 = vmul.f32 %v1226, -31.0
      %v1447 = vadd.f32 %v1443, %v1445
      %v1448 = vadd.f32 %v1444, %v1446
      %v1449 = vadd.f32 %v1447, 1e-05
      %v1450 = vadd.f32 %v1448, 1e-05
      %v1451 = vrcp.pop %v1449
      %v1452 = vmul.f32 %v1449, %v1451
      %v1453 = vsub.f32 1.0, %v1452
      %v1454 = vmul.f32 %v1451, %v1453
      %v1455 = vadd.f32 %v1451, %v1454
      %vm1456 = vweird.f32 %v1449
      %vm1457 = vweird.f32 %v1451
      %vm1458 = vmor %vm1456, %vm1457
      %v1459 = vsel %vm1458, %v1451, %v1455
      %v1460 = vand.u32 2147483647, %v1449
      %vm1461 = vcmp.eq.f32.partialorder %v1460, 8.507059e+37
      %v1462 = vand.u32 %v1449, 2147483648
      %v1463 = vor.u32 1.1754944e-38, %v1462
      %v1464 = vsel %vm1461, %v1463, %v1459
      %v1465 = vmul.f32 1.0, %v1464
      %v1466 = vrcp.pop %v1450
      %v1467 = vmul.f32 %v1450, %v1466
      %v1468 = vsub.f32 1.0, %v1467
      %v1469 = vmul.f32 %v1466, %v1468
      %v1470 = vadd.f32 %v1466, %v1469
      %vm1471 = vweird.f32 %v1450
      %vm1472 = vweird.f32 %v1466
      %vm1473 = vmor %vm1471, %vm1472
      %v1474 = vsel %vm1473, %v1466, %v1470
      %v1475 = vand.u32 2147483647, %v1450
      %vm1476 = vcmp.eq.f32.partialorder %v1475, 8.507059e+37
      %v1477 = vand.u32 %v1450, 2147483648
      %v1478 = vor.u32 1.1754944e-38, %v1477
      %v1479 = vsel %vm1476, %v1478, %v1474
      %v1480 = vmul.f32 1.0, %v1479
      %v1481 = vadd.f32 %v1441, %v1465
      %v1482 = vadd.f32 %v1442, %v1480
      %v1483 = vadd.f32 %v1219, 1e-05
      %v1484 = vadd.f32 %v1226, 1e-05
      %v1485 = vmul.f32 %v1483, %v1481
      %v1486 = vmul.f32 %v1484, %v1482
      %v1487 = vmul.f32 %v1485, 0.2
      %v1488 = vmul.f32 %v1486, 0.2
      %v1489 = vsub.f32 4.0, %v1261
      %v1490 = vsub.f32 4.0, %v1268
      %v1491 = vsub.f32 %v1489, %v1275
      %v1492 = vsub.f32 %v1490, %v1282
      %v1493 = vadd.f32 %v1491, %v1219
      %v1494 = vadd.f32 %v1492, %v1226
      %v1495 = vmul.f32 %v1261, 2.0
      %v1496 = vmul.f32 %v1268, 2.0
      %v1497 = vsub.f32 4.0, %v1495
      %v1498 = vsub.f32 4.0, %v1496
      %v1499 = vadd.f32 %v1497, %v1233
      %v1500 = vadd.f32 %v1498, %v1240
      %v1501 = vmul.f32 %v1275, 2.0
      %v1502 = vmul.f32 %v1282, 2.0
      %v1503 = vsub.f32 4.0, %v1501
      %v1504 = vsub.f32 4.0, %v1502
      %v1505 = vadd.f32 %v1503, %v1247
      %v1506 = vadd.f32 %v1504, %v1254
      %v1507 = vadd.f32 %v1499, %v1505
      %v1508 = vadd.f32 %v1500, %v1506
      %v1509 = vmul.f32 %v1493, -1.0
      %v1510 = vmul.f32 %v1494, -1.0
      %v1511 = vadd.f32 %v1507, %v1509
      %v1512 = vadd.f32 %v1508, %v1510
      %v1513 = vadd.f32 %v1511, 1e-05
      %v1514 = vadd.f32 %v1512, 1e-05
      %v1515 = vrcp.pop %v1513
      %v1516 = vmul.f32 %v1513, %v1515
      %v1517 = vsub.f32 1.0, %v1516
      %v1518 = vmul.f32 %v1515, %v1517
      %v1519 = vadd.f32 %v1515, %v1518
      %vm1520 = vweird.f32 %v1513
      %vm1521 = vweird.f32 %v1515
      %vm1522 = vmor %vm1520, %vm1521
      %v1523 = vsel %vm1522, %v1515, %v1519
      %v1524 = vand.u32 2147483647, %v1513
      %vm1525 = vcmp.eq.f32.partialorder %v1524, 8.507059e+37
      %v1526 = vand.u32 %v1513, 2147483648
      %v1527 = vor.u32 1.1754944e-38, %v1526
      %v1528 = vsel %vm1525, %v1527, %v1523
      %v1529 = vmul.f32 1.0, %v1528
      %v1530 = vrcp.pop %v1514
      %v1531 = vmul.f32 %v1514, %v1530
      %v1532 = vsub.f32 1.0, %v1531
      %v1533 = vmul.f32 %v1530, %v1532
      %v1534 = vadd.f32 %v1530, %v1533
      %vm1535 = vweird.f32 %v1514
      %vm1536 = vweird.f32 %v1530
      %vm1537 = vmor %vm1535, %vm1536
      %v1538 = vsel %vm1537, %v1530, %v1534
      %v1539 = vand.u32 2147483647, %v1514
      %vm1540 = vcmp.eq.f32.partialorder %v1539, 8.507059e+37
      %v1541 = vand.u32 %v1514, 2147483648
      %v1542 = vor.u32 1.1754944e-38, %v1541
      %v1543 = vsel %vm1540, %v1542, %v1538
      %v1544 = vmul.f32 1.0, %v1543
      %v1545 = vadd.f32 %v1529, 0.0
      %v1546 = vadd.f32 %v1544, 0.0
      %v1547 = vmul.f32 %v1507, 2.0
      %v1548 = vmul.f32 %v1508, 2.0
      %v1549 = vmul.f32 %v1493, -3.0
      %v1550 = vmul.f32 %v1494, -3.0
      %v1551 = vadd.f32 %v1547, %v1549
      %v1552 = vadd.f32 %v1548, %v1550
      %v1553 = vadd.f32 %v1551, 1e-05
      %v1554 = vadd.f32 %v1552, 1e-05
      %v1555 = vrcp.pop %v1553
      %v1556 = vmul.f32 %v1553, %v1555
      %v1557 = vsub.f32 1.0, %v1556
      %v1558 = vmul.f32 %v1555, %v1557
      %v1559 = vadd.f32 %v1555, %v1558
      %vm1560 = vweird.f32 %v1553
      %vm1561 = vweird.f32 %v1555
      %vm1562 = vmor %vm1560, %vm1561
      %v1563 = vsel %vm1562, %v1555, %v1559
      %v1564 = vand.u32 2147483647, %v1553
      %vm1565 = vcmp.eq.f32.partialorder %v1564, 8.507059e+37
      %v1566 = vand.u32 %v1553, 2147483648
      %v1567 = vor.u32 1.1754944e-38, %v1566
      %v1568 = vsel %vm1565, %v1567, %v1563
      %v1569 = vmul.f32 1.0, %v1568
      %v1570 = vrcp.pop %v1554
      %v1571 = vmul.f32 %v1554, %v1570
      %v1572 = vsub.f32 1.0, %v1571
      %v1573 = vmul.f32 %v1570, %v1572
      %v1574 = vadd.f32 %v1570, %v1573
      %vm1575 = vweird.f32 %v1554
      %vm1576 = vweird.f32 %v1570
      %vm1577 = vmor %vm1575, %vm1576
      %v1578 = vsel %vm1577, %v1570, %v1574
      %v1579 = vand.u32 2147483647, %v1554
      %vm1580 = vcmp.eq.f32.partialorder %v1579, 8.507059e+37
      %v1581 = vand.u32 %v1554, 2147483648
      %v1582 = vor.u32 1.1754944e-38, %v1581
      %v1583 = vsel %vm1580, %v1582, %v1578
      %v1584 = vmul.f32 1.0, %v1583
      %v1585 = vadd.f32 %v1545, %v1569
      %v1586 = vadd.f32 %v1546, %v1584
      %v1587 = vmul.f32 %v1507, 4.0
      %v1588 = vmul.f32 %v1508, 4.0
      %v1589 = vmul.f32 %v1493, -7.0
      %v1590 = vmul.f32 %v1494, -7.0
      %v1591 = vadd.f32 %v1587, %v1589
      %v1592 = vadd.f32 %v1588, %v1590
      %v1593 = vadd.f32 %v1591, 1e-05
      %v1594 = vadd.f32 %v1592, 1e-05
      %v1595 = vrcp.pop %v1593
      %v1596 = vmul.f32 %v1593, %v1595
      %v1597 = vsub.f32 1.0, %v1596
      %v1598 = vmul.f32 %v1595, %v1597
      %v1599 = vadd.f32 %v1595, %v1598
      %vm1600 = vweird.f32 %v1593
      %vm1601 = vweird.f32 %v1595
      %vm1602 = vmor %vm1600, %vm1601
      %v1603 = vsel %vm1602, %v1595, %v1599
      %v1604 = vand.u32 2147483647, %v1593
      %vm1605 = vcmp.eq.f32.partialorder %v1604, 8.507059e+37
      %v1606 = vand.u32 %v1593, 2147483648
      %v1607 = vor.u32 1.1754944e-38, %v1606
      %v1608 = vsel %vm1605, %v1607, %v1603
      %v1609 = vmul.f32 1.0, %v1608
      %v1610 = vrcp.pop %v1594
      %v1611 = vmul.f32 %v1594, %v1610
      %v1612 = vsub.f32 1.0, %v1611
      %v1613 = vmul.f32 %v1610, %v1612
      %v1614 = vadd.f32 %v1610, %v1613
      %vm1615 = vweird.f32 %v1594
      %vm1616 = vweird.f32 %v1610
      %vm1617 = vmor %vm1615, %vm1616
      %v1618 = vsel %vm1617, %v1610, %v1614
      %v1619 = vand.u32 2147483647, %v1594
      %vm1620 = vcmp.eq.f32.partialorder %v1619, 8.507059e+37
      %v1621 = vand.u32 %v1594, 2147483648
      %v1622 = vor.u32 1.1754944e-38, %v1621
      %v1623 = vsel %vm1620, %v1622, %v1618
      %v1624 = vmul.f32 1.0, %v1623
      %v1625 = vadd.f32 %v1585, %v1609
      %v1626 = vadd.f32 %v1586, %v1624
      %v1627 = vmul.f32 %v1507, 8.0
      %v1628 = vmul.f32 %v1508, 8.0
      %v1629 = vmul.f32 %v1493, -15.0
      %v1630 = vmul.f32 %v1494, -15.0
      %v1631 = vadd.f32 %v1627, %v1629
      %v1632 = vadd.f32 %v1628, %v1630
      %v1633 = vadd.f32 %v1631, 1e-05
      %v1634 = vadd.f32 %v1632, 1e-05
      %v1635 = vrcp.pop %v1633
      %v1636 = vmul.f32 %v1633, %v1635
      %v1637 = vsub.f32 1.0, %v1636
      %v1638 = vmul.f32 %v1635, %v1637
      %v1639 = vadd.f32 %v1635, %v1638
      %vm1640 = vweird.f32 %v1633
      %vm1641 = vweird.f32 %v1635
      %vm1642 = vmor %vm1640, %vm1641
      %v1643 = vsel %vm1642, %v1635, %v1639
      %v1644 = vand.u32 2147483647, %v1633
      %vm1645 = vcmp.eq.f32.partialorder %v1644, 8.507059e+37
      %v1646 = vand.u32 %v1633, 2147483648
      %v1647 = vor.u32 1.1754944e-38, %v1646
      %v1648 = vsel %vm1645, %v1647, %v1643
      %v1649 = vmul.f32 1.0, %v1648
      %v1650 = vrcp.pop %v1634
      %v1651 = vmul.f32 %v1634, %v1650
      %v1652 = vsub.f32 1.0, %v1651
      %v1653 = vmul.f32 %v1650, %v1652
      %v1654 = vadd.f32 %v1650, %v1653
      %vm1655 = vweird.f32 %v1634
      %vm1656 = vweird.f32 %v1650
      %vm1657 = vmor %vm1655, %vm1656
      %v1658 = vsel %vm1657, %v1650, %v1654
      %v1659 = vand.u32 2147483647, %v1634
      %vm1660 = vcmp.eq.f32.partialorder %v1659, 8.507059e+37
      %v1661 = vand.u32 %v1634, 2147483648
      %v1662 = vor.u32 1.1754944e-38, %v1661
      %v1663 = vsel %vm1660, %v1662, %v1658
      %v1664 = vmul.f32 1.0, %v1663
      %v1665 = vadd.f32 %v1625, %v1649
      %v1666 = vadd.f32 %v1626, %v1664
      %v1667 = vmul.f32 %v1507, 16.0
      %v1668 = vmul.f32 %v1508, 16.0
      %v1669 = vmul.f32 %v1493, -31.0
      %v1670 = vmul.f32 %v1494, -31.0
      %v1671 = vadd.f32 %v1667, %v1669
      %v1672 = vadd.f32 %v1668, %v1670
      %v1673 = vadd.f32 %v1671, 1e-05
      %v1674 = vadd.f32 %v1672, 1e-05
      %v1675 = vrcp.pop %v1673
      %v1676 = vmul.f32 %v1673, %v1675
      %v1677 = vsub.f32 1.0, %v1676
      %v1678 = vmul.f32 %v1675, %v1677
      %v1679 = vadd.f32 %v1675, %v1678
      %vm1680 = vweird.f32 %v1673
      %vm1681 = vweird.f32 %v1675
      %vm1682 = vmor %vm1680, %vm1681
      %v1683 = vsel %vm1682, %v1675, %v1679
      %v1684 = vand.u32 2147483647, %v1673
      %vm1685 = vcmp.eq.f32.partialorder %v1684, 8.507059e+37
      %v1686 = vand.u32 %v1673, 2147483648
      %v1687 = vor.u32 1.1754944e-38, %v1686
      %v1688 = vsel %vm1685, %v1687, %v1683
      %v1689 = vmul.f32 1.0, %v1688
      %v1690 = vrcp.pop %v1674
      %v1691 = vmul.f32 %v1674, %v1690
      %v1692 = vsub.f32 1.0, %v1691
      %v1693 = vmul.f32 %v1690, %v1692
      %v1694 = vadd.f32 %v1690, %v1693
      %vm1695 = vweird.f32 %v1674
      %vm1696 = vweird.f32 %v1690
      %vm1697 = vmor %vm1695, %vm1696
      %v1698 = vsel %vm1697, %v1690, %v1694
      %v1699 = vand.u32 2147483647, %v1674
      %vm1700 = vcmp.eq.f32.partialorder %v1699, 8.507059e+37
      %v1701 = vand.u32 %v1674, 2147483648
      %v1702 = vor.u32 1.1754944e-38, %v1701
      %v1703 = vsel %vm1700, %v1702, %v1698
      %v1704 = vmul.f32 1.0, %v1703
      %v1705 = vadd.f32 %v1665, %v1689
      %v1706 = vadd.f32 %v1666, %v1704
      %v1707 = vadd.f32 %v1493, 1e-05
      %v1708 = vadd.f32 %v1494, 1e-05
      %v1709 = vmul.f32 %v1707, %v1705
      %v1710 = vmul.f32 %v1708, %v1706
      %v1711 = vmul.f32 %v1709, 0.2
      %v1712 = vmul.f32 %v1710, 0.2
      %v1713 = vadd.f32 %v1487, %v1711
      %v1714 = vadd.f32 %v1488, %v1712
      %v1715 = vmul.f32 %v1713, 0.5
      %v1716 = vmul.f32 %v1714, 0.5
      %v1717 = vadd.f32 %v1213, %v1220
      %1718 = vadd.xlane.f32.xlu0 %v1717
      %v1719 = vpop.xlane.xlu0 %1718
      %v1720 = vadd.f32 %v1227, %v1234
      %1721 = vadd.xlane.f32.xlu0 %v1720
      %v1722 = vpop.xlane.xlu0 %1721
      %v1723 = vadd.f32 %v1241, %v1248
      %1724 = vadd.xlane.f32.xlu0 %v1723
      %v1725 = vpop.xlane.xlu0 %1724
      %v1726 = vadd.f32 %v1255, %v1262
      %1727 = vadd.xlane.f32.xlu0 %v1726
      %v1728 = vpop.xlane.xlu0 %1727
      %v1729 = vadd.f32 %v1269, %v1276
      %1730 = vadd.xlane.f32.xlu0 %v1729
      %v1731 = vpop.xlane.xlu0 %1730
      %v1732 = vadd.f32 %v1722, %v1725
      %v1733 = vmul.f32 %v1719, -1.0
      %v1734 = vadd.f32 %v1732, %v1733
      %v1735 = vadd.f32 %v1734, 1e-05
      %v1736 = vrcp.pop %v1735
      %v1737 = vmul.f32 %v1735, %v1736
      %v1738 = vsub.f32 1.0, %v1737
      %v1739 = vmul.f32 %v1736, %v1738
      %v1740 = vadd.f32 %v1736, %v1739
      %vm1741 = vweird.f32 %v1735
      %vm1742 = vweird.f32 %v1736
      %vm1743 = vmor %vm1741, %vm1742
      %v1744 = vsel %vm1743, %v1736, %v1740
      %v1745 = vand.u32 2147483647, %v1735
      %vm1746 = vcmp.eq.f32.partialorder %v1745, 8.507059e+37
      %v1747 = vand.u32 %v1735, 2147483648
      %v1748 = vor.u32 1.1754944e-38, %v1747
      %v1749 = vsel %vm1746, %v1748, %v1744
      %v1750 = vmul.f32 1.0, %v1749
      %v1751 = vadd.f32 %v1750, 0.0
      %v1752 = vmul.f32 %v1732, 2.0
      %v1753 = vmul.f32 %v1719, -3.0
      %v1754 = vadd.f32 %v1752, %v1753
      %v1755 = vadd.f32 %v1754, 1e-05
      %v1756 = vrcp.pop %v1755
      %v1757 = vmul.f32 %v1755, %v1756
      %v1758 = vsub.f32 1.0, %v1757
      %v1759 = vmul.f32 %v1756, %v1758
      %v1760 = vadd.f32 %v1756, %v1759
      %vm1761 = vweird.f32 %v1755
      %vm1762 = vweird.f32 %v1756
      %vm1763 = vmor %vm1761, %vm1762
      %v1764 = vsel %vm1763, %v1756, %v1760
      %v1765 = vand.u32 2147483647, %v1755
      %vm1766 = vcmp.eq.f32.partialorder %v1765, 8.507059e+37
      %v1767 = vand.u32 %v1755, 2147483648
      %v1768 = vor.u32 1.1754944e-38, %v1767
      %v1769 = vsel %vm1766, %v1768, %v1764
      %v1770 = vmul.f32 1.0, %v1769
      %v1771 = vadd.f32 %v1751, %v1770
      %v1772 = vmul.f32 %v1732, 4.0
      %v1773 = vmul.f32 %v1719, -7.0
      %v1774 = vadd.f32 %v1772, %v1773
      %v1775 = vadd.f32 %v1774, 1e-05
      %v1776 = vrcp.pop %v1775
      %v1777 = vmul.f32 %v1775, %v1776
      %v1778 = vsub.f32 1.0, %v1777
      %v1779 = vmul.f32 %v1776, %v1778
      %v1780 = vadd.f32 %v1776, %v1779
      %vm1781 = vweird.f32 %v1775
      %vm1782 = vweird.f32 %v1776
      %vm1783 = vmor %vm1781, %vm1782
      %v1784 = vsel %vm1783, %v1776, %v1780
      %v1785 = vand.u32 2147483647, %v1775
      %vm1786 = vcmp.eq.f32.partialorder %v1785, 8.507059e+37
      %v1787 = vand.u32 %v1775, 2147483648
      %v1788 = vor.u32 1.1754944e-38, %v1787
      %v1789 = vsel %vm1786, %v1788, %v1784
      %v1790 = vmul.f32 1.0, %v1789
      %v1791 = vadd.f32 %v1771, %v1790
      %v1792 = vmul.f32 %v1732, 8.0
      %v1793 = vmul.f32 %v1719, -15.0
      %v1794 = vadd.f32 %v1792, %v1793
      %v1795 = vadd.f32 %v1794, 1e-05
      %v1796 = vrcp.pop %v1795
      %v1797 = vmul.f32 %v1795, %v1796
      %v1798 = vsub.f32 1.0, %v1797
      %v1799 = vmul.f32 %v1796, %v1798
      %v1800 = vadd.f32 %v1796, %v1799
      %vm1801 = vweird.f32 %v1795
      %vm1802 = vweird.f32 %v1796
      %vm1803 = vmor %vm1801, %vm1802
      %v1804 = vsel %vm1803, %v1796, %v1800
      %v1805 = vand.u32 2147483647, %v1795
      %vm1806 = vcmp.eq.f32.partialorder %v1805, 8.507059e+37
      %v1807 = vand.u32 %v1795, 2147483648
      %v1808 = vor.u32 1.1754944e-38, %v1807
      %v1809 = vsel %vm1806, %v1808, %v1804
      %v1810 = vmul.f32 1.0, %v1809
      %v1811 = vadd.f32 %v1791, %v1810
      %v1812 = vmul.f32 %v1732, 16.0
      %v1813 = vmul.f32 %v1719, -31.0
      %v1814 = vadd.f32 %v1812, %v1813
      %v1815 = vadd.f32 %v1814, 1e-05
      %v1816 = vrcp.pop %v1815
      %v1817 = vmul.f32 %v1815, %v1816
      %v1818 = vsub.f32 1.0, %v1817
      %v1819 = vmul.f32 %v1816, %v1818
      %v1820 = vadd.f32 %v1816, %v1819
      %vm1821 = vweird.f32 %v1815
      %vm1822 = vweird.f32 %v1816
      %vm1823 = vmor %vm1821, %vm1822
      %v1824 = vsel %vm1823, %v1816, %v1820
      %v1825 = vand.u32 2147483647, %v1815
      %vm1826 = vcmp.eq.f32.partialorder %v1825, 8.507059e+37
      %v1827 = vand.u32 %v1815, 2147483648
      %v1828 = vor.u32 1.1754944e-38, %v1827
      %v1829 = vsel %vm1826, %v1828, %v1824
      %v1830 = vmul.f32 1.0, %v1829
      %v1831 = vadd.f32 %v1811, %v1830
      %v1832 = vadd.f32 %v1719, 1e-05
      %v1833 = vmul.f32 %v1832, %v1831
      %v1834 = vmul.f32 %v1833, 0.2
      %v1835 = vsub.f32 256.0, %v1728
      %v1836 = vsub.f32 %v1835, %v1731
      %v1837 = vadd.f32 %v1836, %v1719
      %v1838 = vmul.f32 %v1728, 2.0
      %v1839 = vsub.f32 256.0, %v1838
      %v1840 = vadd.f32 %v1839, %v1722
      %v1841 = vmul.f32 %v1731, 2.0
      %v1842 = vsub.f32 256.0, %v1841
      %v1843 = vadd.f32 %v1842, %v1725
      %v1844 = vadd.f32 %v1840, %v1843
      %v1845 = vmul.f32 %v1837, -1.0
      %v1846 = vadd.f32 %v1844, %v1845
      %v1847 = vadd.f32 %v1846, 1e-05
      %v1848 = vrcp.pop %v1847
      %v1849 = vmul.f32 %v1847, %v1848
      %v1850 = vsub.f32 1.0, %v1849
      %v1851 = vmul.f32 %v1848, %v1850
      %v1852 = vadd.f32 %v1848, %v1851
      %vm1853 = vweird.f32 %v1847
      %vm1854 = vweird.f32 %v1848
      %vm1855 = vmor %vm1853, %vm1854
      %v1856 = vsel %vm1855, %v1848, %v1852
      %v1857 = vand.u32 2147483647, %v1847
      %vm1858 = vcmp.eq.f32.partialorder %v1857, 8.507059e+37
      %v1859 = vand.u32 %v1847, 2147483648
      %v1860 = vor.u32 1.1754944e-38, %v1859
      %v1861 = vsel %vm1858, %v1860, %v1856
      %v1862 = vmul.f32 1.0, %v1861
      %v1863 = vadd.f32 %v1862, 0.0
      %v1864 = vmul.f32 %v1844, 2.0
      %v1865 = vmul.f32 %v1837, -3.0
      %v1866 = vadd.f32 %v1864, %v1865
      %v1867 = vadd.f32 %v1866, 1e-05
      %v1868 = vrcp.pop %v1867
      %v1869 = vmul.f32 %v1867, %v1868
      %v1870 = vsub.f32 1.0, %v1869
      %v1871 = vmul.f32 %v1868, %v1870
      %v1872 = vadd.f32 %v1868, %v1871
      %vm1873 = vweird.f32 %v1867
      %vm1874 = vweird.f32 %v1868
      %vm1875 = vmor %vm1873, %vm1874
      %v1876 = vsel %vm1875, %v1868, %v1872
      %v1877 = vand.u32 2147483647, %v1867
      %vm1878 = vcmp.eq.f32.partialorder %v1877, 8.507059e+37
      %v1879 = vand.u32 %v1867, 2147483648
      %v1880 = vor.u32 1.1754944e-38, %v1879
      %v1881 = vsel %vm1878, %v1880, %v1876
      %v1882 = vmul.f32 1.0, %v1881
      %v1883 = vadd.f32 %v1863, %v1882
      %v1884 = vmul.f32 %v1844, 4.0
      %v1885 = vmul.f32 %v1837, -7.0
      %v1886 = vadd.f32 %v1884, %v1885
      %v1887 = vadd.f32 %v1886, 1e-05
      %v1888 = vrcp.pop %v1887
      %v1889 = vmul.f32 %v1887, %v1888
      %v1890 = vsub.f32 1.0, %v1889
      %v1891 = vmul.f32 %v1888, %v1890
      %v1892 = vadd.f32 %v1888, %v1891
      %vm1893 = vweird.f32 %v1887
      %vm1894 = vweird.f32 %v1888
      %vm1895 = vmor %vm1893, %vm1894
      %v1896 = vsel %vm1895, %v1888, %v1892
      %v1897 = vand.u32 2147483647, %v1887
      %vm1898 = vcmp.eq.f32.partialorder %v1897, 8.507059e+37
      %v1899 = vand.u32 %v1887, 2147483648
      %v1900 = vor.u32 1.1754944e-38, %v1899
      %v1901 = vsel %vm1898, %v1900, %v1896
      %v1902 = vmul.f32 1.0, %v1901
      %v1903 = vadd.f32 %v1883, %v1902
      %v1904 = vmul.f32 %v1844, 8.0
      %v1905 = vmul.f32 %v1837, -15.0
      %v1906 = vadd.f32 %v1904, %v1905
      %v1907 = vadd.f32 %v1906, 1e-05
      %v1908 = vrcp.pop %v1907
      %v1909 = vmul.f32 %v1907, %v1908
      %v1910 = vsub.f32 1.0, %v1909
      %v1911 = vmul.f32 %v1908, %v1910
      %v1912 = vadd.f32 %v1908, %v1911
      %vm1913 = vweird.f32 %v1907
      %vm1914 = vweird.f32 %v1908
      %vm1915 = vmor %vm1913, %vm1914
      %v1916 = vsel %vm1915, %v1908, %v1912
      %v1917 = vand.u32 2147483647, %v1907
      %vm1918 = vcmp.eq.f32.partialorder %v1917, 8.507059e+37
      %v1919 = vand.u32 %v1907, 2147483648
      %v1920 = vor.u32 1.1754944e-38, %v1919
      %v1921 = vsel %vm1918, %v1920, %v1916
      %v1922 = vmul.f32 1.0, %v1921
      %v1923 = vadd.f32 %v1903, %v1922
      %v1924 = vmul.f32 %v1844, 16.0
      %v1925 = vmul.f32 %v1837, -31.0
      %v1926 = vadd.f32 %v1924, %v1925
      %v1927 = vadd.f32 %v1926, 1e-05
      %v1928 = vrcp.pop %v1927
      %v1929 = vmul.f32 %v1927, %v1928
      %v1930 = vsub.f32 1.0, %v1929
      %v1931 = vmul.f32 %v1928, %v1930
      %v1932 = vadd.f32 %v1928, %v1931
      %vm1933 = vweird.f32 %v1927
      %vm1934 = vweird.f32 %v1928
      %vm1935 = vmor %vm1933, %vm1934
      %v1936 = vsel %vm1935, %v1928, %v1932
      %v1937 = vand.u32 2147483647, %v1927
      %vm1938 = vcmp.eq.f32.partialorder %v1937, 8.507059e+37
      %v1939 = vand.u32 %v1927, 2147483648
      %v1940 = vor.u32 1.1754944e-38, %v1939
      %v1941 = vsel %vm1938, %v1940, %v1936
      %v1942 = vmul.f32 1.0, %v1941
      %v1943 = vadd.f32 %v1923, %v1942
      %v1944 = vadd.f32 %v1837, 1e-05
      %v1945 = vmul.f32 %v1944, %v1943
      %v1946 = vmul.f32 %v1945, 0.2
      %v1947 = vadd.f32 %v1834, %v1946
      %v1948 = vmul.f32 %v1947, 0.5
      %v1951 = vrot.slane %v1161, 4
      %v1952 = vrot.slane %v1176, 4
      %v1955 = vmul.f32 %v1948, %v1951
      %v1956 = vmul.f32 %v1948, %v1952
      %v1957 = vmul.f32 %v1955, 0.5
      %v1958 = vmul.f32 %v1956, 0.5
      %v1959 = vmul.f32 %v1715, %v1161
      %v1960 = vmul.f32 %v1716, %v1176
      %v1963 = vrot.slane %v1959, 4
      %v1964 = vrot.slane %v1960, 4
      %v1967 = vmul.f32 %v1957, %v1963
      %v1968 = vmul.f32 %v1958, %v1964
      %v1969 = vld [vmem:[%s9] sm:$0xf]
      %1971 = vset.pattern.permute.xlu0 0
      %1972 = vperm.xlu0 %1971, %v1969
      %v1973 = vpop.permute.xlu0 %1972
      %v1975 = vmul.f32 %v1967, %v1973
      %v1976 = vmul.f32 %v1968, %v1973
      %v1977 = vld [vmem:[%s10] sm:$0xf]
      %1979 = vset.pattern.permute.xlu0 0
      %1980 = vperm.xlu0 %1979, %v1977
      %v1981 = vpop.permute.xlu0 %1980
      %v1983 = vadd.f32 %v1975, %v1981
      %v1984 = vadd.f32 %v1976, %v1981
      %v1987 = vrot.slane %v1053, 4
      %v1988 = vrot.slane %v1068, 4
      %v1991 = vmul.f32 %v1191, %v1987
      %v1992 = vmul.f32 %v1206, %v1988
      %v1993 = vmul.f32 %v1191, %v1191
      %v1994 = vmul.f32 %v1206, %v1206
      %v1995 = vsel %vm622, %v1991, 0.0
      %v1996 = vrot.slane %v1995, 4
      %v1997 = vadd.f32 %v1995, %v1996
      %v1998 = vrot.slane %v1997, 2
      %v1999 = vadd.f32 %v1997, %v1998
      %v2000 = vrot.slane %v1999, 1
      %v2001 = vadd.f32 %v1999, %v2000
      %v2002 = vsel %vm622, %v1992, 0.0
      %v2003 = vrot.slane %v2002, 4
      %v2004 = vadd.f32 %v2002, %v2003
      %v2005 = vrot.slane %v2004, 2
      %v2006 = vadd.f32 %v2004, %v2005
      %v2007 = vrot.slane %v2006, 1
      %v2008 = vadd.f32 %v2006, %v2007
      %v2009 = vsel %vm622, %v1993, 0.0
      %v2010 = vrot.slane %v2009, 4
      %v2011 = vadd.f32 %v2009, %v2010
      %v2012 = vrot.slane %v2011, 2
      %v2013 = vadd.f32 %v2011, %v2012
      %v2014 = vrot.slane %v2013, 1
      %v2015 = vadd.f32 %v2013, %v2014
      %v2016 = vsel %vm622, %v1994, 0.0
      %v2017 = vrot.slane %v2016, 4
      %v2018 = vadd.f32 %v2016, %v2017
      %v2019 = vrot.slane %v2018, 2
      %v2020 = vadd.f32 %v2018, %v2019
      %v2021 = vrot.slane %v2020, 1
      %v2022 = vadd.f32 %v2020, %v2021
      %v2025 = vrot.slane %v1209, 4
      %v2026 = vrot.slane %v1210, 4
      %v2029 = vsel %vm622, %v2025, 0.0
      %v2030 = vrot.slane %v2029, 4
      %v2031 = vadd.f32 %v2029, %v2030
      %v2032 = vrot.slane %v2031, 2
      %v2033 = vadd.f32 %v2031, %v2032
      %v2034 = vrot.slane %v2033, 1
      %v2035 = vadd.f32 %v2033, %v2034
      %v2036 = vsel %vm622, %v2026, 0.0
      %v2037 = vrot.slane %v2036, 4
      %v2038 = vadd.f32 %v2036, %v2037
      %v2039 = vrot.slane %v2038, 2
      %v2040 = vadd.f32 %v2038, %v2039
      %v2041 = vrot.slane %v2040, 1
      %v2042 = vadd.f32 %v2040, %v2041
      %v2043 = vsel %vm622, %v1191, 0.0
      %v2044 = vrot.slane %v2043, 4
      %v2045 = vadd.f32 %v2043, %v2044
      %v2046 = vrot.slane %v2045, 2
      %v2047 = vadd.f32 %v2045, %v2046
      %v2048 = vrot.slane %v2047, 1
      %v2049 = vadd.f32 %v2047, %v2048
      %v2050 = vsel %vm622, %v1206, 0.0
      %v2051 = vrot.slane %v2050, 4
      %v2052 = vadd.f32 %v2050, %v2051
      %v2053 = vrot.slane %v2052, 2
      %v2054 = vadd.f32 %v2052, %v2053
      %v2055 = vrot.slane %v2054, 1
      %v2056 = vadd.f32 %v2054, %v2055
      %v2057 = vsel %vm622, %v1987, 0.0
      %v2058 = vrot.slane %v2057, 4
      %v2059 = vadd.f32 %v2057, %v2058
      %v2060 = vrot.slane %v2059, 2
      %v2061 = vadd.f32 %v2059, %v2060
      %v2062 = vrot.slane %v2061, 1
      %v2063 = vadd.f32 %v2061, %v2062
      %v2064 = vsel %vm622, %v1988, 0.0
      %v2065 = vrot.slane %v2064, 4
      %v2066 = vadd.f32 %v2064, %v2065
      %v2067 = vrot.slane %v2066, 2
      %v2068 = vadd.f32 %v2066, %v2067
      %v2069 = vrot.slane %v2068, 1
      %v2070 = vadd.f32 %v2068, %v2069
      %v2071 = vadd.f32 %v2015, %v2035
      %v2072 = vadd.f32 %v2022, %v2042
      %v2073 = vmul.f32 %v2001, -1.0
      %v2074 = vmul.f32 %v2008, -1.0
      %v2075 = vadd.f32 %v2071, %v2073
      %v2076 = vadd.f32 %v2072, %v2074
      %v2077 = vadd.f32 %v2075, 1e-05
      %v2078 = vadd.f32 %v2076, 1e-05
      %v2079 = vrcp.pop %v2077
      %v2080 = vmul.f32 %v2077, %v2079
      %v2081 = vsub.f32 1.0, %v2080
      %v2082 = vmul.f32 %v2079, %v2081
      %v2083 = vadd.f32 %v2079, %v2082
      %vm2084 = vweird.f32 %v2077
      %vm2085 = vweird.f32 %v2079
      %vm2086 = vmor %vm2084, %vm2085
      %v2087 = vsel %vm2086, %v2079, %v2083
      %v2088 = vand.u32 2147483647, %v2077
      %vm2089 = vcmp.eq.f32.partialorder %v2088, 8.507059e+37
      %v2090 = vand.u32 %v2077, 2147483648
      %v2091 = vor.u32 1.1754944e-38, %v2090
      %v2092 = vsel %vm2089, %v2091, %v2087
      %v2093 = vmul.f32 1.0, %v2092
      %v2094 = vrcp.pop %v2078
      %v2095 = vmul.f32 %v2078, %v2094
      %v2096 = vsub.f32 1.0, %v2095
      %v2097 = vmul.f32 %v2094, %v2096
      %v2098 = vadd.f32 %v2094, %v2097
      %vm2099 = vweird.f32 %v2078
      %vm2100 = vweird.f32 %v2094
      %vm2101 = vmor %vm2099, %vm2100
      %v2102 = vsel %vm2101, %v2094, %v2098
      %v2103 = vand.u32 2147483647, %v2078
      %vm2104 = vcmp.eq.f32.partialorder %v2103, 8.507059e+37
      %v2105 = vand.u32 %v2078, 2147483648
      %v2106 = vor.u32 1.1754944e-38, %v2105
      %v2107 = vsel %vm2104, %v2106, %v2102
      %v2108 = vmul.f32 1.0, %v2107
      %v2109 = vadd.f32 %v2093, 0.0
      %v2110 = vadd.f32 %v2108, 0.0
      %v2111 = vmul.f32 %v2071, 2.0
      %v2112 = vmul.f32 %v2072, 2.0
      %v2113 = vmul.f32 %v2001, -3.0
      %v2114 = vmul.f32 %v2008, -3.0
      %v2115 = vadd.f32 %v2111, %v2113
      %v2116 = vadd.f32 %v2112, %v2114
      %v2117 = vadd.f32 %v2115, 1e-05
      %v2118 = vadd.f32 %v2116, 1e-05
      %v2119 = vrcp.pop %v2117
      %v2120 = vmul.f32 %v2117, %v2119
      %v2121 = vsub.f32 1.0, %v2120
      %v2122 = vmul.f32 %v2119, %v2121
      %v2123 = vadd.f32 %v2119, %v2122
      %vm2124 = vweird.f32 %v2117
      %vm2125 = vweird.f32 %v2119
      %vm2126 = vmor %vm2124, %vm2125
      %v2127 = vsel %vm2126, %v2119, %v2123
      %v2128 = vand.u32 2147483647, %v2117
      %vm2129 = vcmp.eq.f32.partialorder %v2128, 8.507059e+37
      %v2130 = vand.u32 %v2117, 2147483648
      %v2131 = vor.u32 1.1754944e-38, %v2130
      %v2132 = vsel %vm2129, %v2131, %v2127
      %v2133 = vmul.f32 1.0, %v2132
      %v2134 = vrcp.pop %v2118
      %v2135 = vmul.f32 %v2118, %v2134
      %v2136 = vsub.f32 1.0, %v2135
      %v2137 = vmul.f32 %v2134, %v2136
      %v2138 = vadd.f32 %v2134, %v2137
      %vm2139 = vweird.f32 %v2118
      %vm2140 = vweird.f32 %v2134
      %vm2141 = vmor %vm2139, %vm2140
      %v2142 = vsel %vm2141, %v2134, %v2138
      %v2143 = vand.u32 2147483647, %v2118
      %vm2144 = vcmp.eq.f32.partialorder %v2143, 8.507059e+37
      %v2145 = vand.u32 %v2118, 2147483648
      %v2146 = vor.u32 1.1754944e-38, %v2145
      %v2147 = vsel %vm2144, %v2146, %v2142
      %v2148 = vmul.f32 1.0, %v2147
      %v2149 = vadd.f32 %v2109, %v2133
      %v2150 = vadd.f32 %v2110, %v2148
      %v2151 = vmul.f32 %v2071, 4.0
      %v2152 = vmul.f32 %v2072, 4.0
      %v2153 = vmul.f32 %v2001, -7.0
      %v2154 = vmul.f32 %v2008, -7.0
      %v2155 = vadd.f32 %v2151, %v2153
      %v2156 = vadd.f32 %v2152, %v2154
      %v2157 = vadd.f32 %v2155, 1e-05
      %v2158 = vadd.f32 %v2156, 1e-05
      %v2159 = vrcp.pop %v2157
      %v2160 = vmul.f32 %v2157, %v2159
      %v2161 = vsub.f32 1.0, %v2160
      %v2162 = vmul.f32 %v2159, %v2161
      %v2163 = vadd.f32 %v2159, %v2162
      %vm2164 = vweird.f32 %v2157
      %vm2165 = vweird.f32 %v2159
      %vm2166 = vmor %vm2164, %vm2165
      %v2167 = vsel %vm2166, %v2159, %v2163
      %v2168 = vand.u32 2147483647, %v2157
      %vm2169 = vcmp.eq.f32.partialorder %v2168, 8.507059e+37
      %v2170 = vand.u32 %v2157, 2147483648
      %v2171 = vor.u32 1.1754944e-38, %v2170
      %v2172 = vsel %vm2169, %v2171, %v2167
      %v2173 = vmul.f32 1.0, %v2172
      %v2174 = vrcp.pop %v2158
      %v2175 = vmul.f32 %v2158, %v2174
      %v2176 = vsub.f32 1.0, %v2175
      %v2177 = vmul.f32 %v2174, %v2176
      %v2178 = vadd.f32 %v2174, %v2177
      %vm2179 = vweird.f32 %v2158
      %vm2180 = vweird.f32 %v2174
      %vm2181 = vmor %vm2179, %vm2180
      %v2182 = vsel %vm2181, %v2174, %v2178
      %v2183 = vand.u32 2147483647, %v2158
      %vm2184 = vcmp.eq.f32.partialorder %v2183, 8.507059e+37
      %v2185 = vand.u32 %v2158, 2147483648
      %v2186 = vor.u32 1.1754944e-38, %v2185
      %v2187 = vsel %vm2184, %v2186, %v2182
      %v2188 = vmul.f32 1.0, %v2187
      %v2189 = vadd.f32 %v2149, %v2173
      %v2190 = vadd.f32 %v2150, %v2188
      %v2191 = vmul.f32 %v2071, 8.0
      %v2192 = vmul.f32 %v2072, 8.0
      %v2193 = vmul.f32 %v2001, -15.0
      %v2194 = vmul.f32 %v2008, -15.0
      %v2195 = vadd.f32 %v2191, %v2193
      %v2196 = vadd.f32 %v2192, %v2194
      %v2197 = vadd.f32 %v2195, 1e-05
      %v2198 = vadd.f32 %v2196, 1e-05
      %v2199 = vrcp.pop %v2197
      %v2200 = vmul.f32 %v2197, %v2199
      %v2201 = vsub.f32 1.0, %v2200
      %v2202 = vmul.f32 %v2199, %v2201
      %v2203 = vadd.f32 %v2199, %v2202
      %vm2204 = vweird.f32 %v2197
      %vm2205 = vweird.f32 %v2199
      %vm2206 = vmor %vm2204, %vm2205
      %v2207 = vsel %vm2206, %v2199, %v2203
      %v2208 = vand.u32 2147483647, %v2197
      %vm2209 = vcmp.eq.f32.partialorder %v2208, 8.507059e+37
      %v2210 = vand.u32 %v2197, 2147483648
      %v2211 = vor.u32 1.1754944e-38, %v2210
      %v2212 = vsel %vm2209, %v2211, %v2207
      %v2213 = vmul.f32 1.0, %v2212
      %v2214 = vrcp.pop %v2198
      %v2215 = vmul.f32 %v2198, %v2214
      %v2216 = vsub.f32 1.0, %v2215
      %v2217 = vmul.f32 %v2214, %v2216
      %v2218 = vadd.f32 %v2214, %v2217
      %vm2219 = vweird.f32 %v2198
      %vm2220 = vweird.f32 %v2214
      %vm2221 = vmor %vm2219, %vm2220
      %v2222 = vsel %vm2221, %v2214, %v2218
      %v2223 = vand.u32 2147483647, %v2198
      %vm2224 = vcmp.eq.f32.partialorder %v2223, 8.507059e+37
      %v2225 = vand.u32 %v2198, 2147483648
      %v2226 = vor.u32 1.1754944e-38, %v2225
      %v2227 = vsel %vm2224, %v2226, %v2222
      %v2228 = vmul.f32 1.0, %v2227
      %v2229 = vadd.f32 %v2189, %v2213
      %v2230 = vadd.f32 %v2190, %v2228
      %v2231 = vmul.f32 %v2071, 16.0
      %v2232 = vmul.f32 %v2072, 16.0
      %v2233 = vmul.f32 %v2001, -31.0
      %v2234 = vmul.f32 %v2008, -31.0
      %v2235 = vadd.f32 %v2231, %v2233
      %v2236 = vadd.f32 %v2232, %v2234
      %v2237 = vadd.f32 %v2235, 1e-05
      %v2238 = vadd.f32 %v2236, 1e-05
      %v2239 = vrcp.pop %v2237
      %v2240 = vmul.f32 %v2237, %v2239
      %v2241 = vsub.f32 1.0, %v2240
      %v2242 = vmul.f32 %v2239, %v2241
      %v2243 = vadd.f32 %v2239, %v2242
      %vm2244 = vweird.f32 %v2237
      %vm2245 = vweird.f32 %v2239
      %vm2246 = vmor %vm2244, %vm2245
      %v2247 = vsel %vm2246, %v2239, %v2243
      %v2248 = vand.u32 2147483647, %v2237
      %vm2249 = vcmp.eq.f32.partialorder %v2248, 8.507059e+37
      %v2250 = vand.u32 %v2237, 2147483648
      %v2251 = vor.u32 1.1754944e-38, %v2250
      %v2252 = vsel %vm2249, %v2251, %v2247
      %v2253 = vmul.f32 1.0, %v2252
      %v2254 = vrcp.pop %v2238
      %v2255 = vmul.f32 %v2238, %v2254
      %v2256 = vsub.f32 1.0, %v2255
      %v2257 = vmul.f32 %v2254, %v2256
      %v2258 = vadd.f32 %v2254, %v2257
      %vm2259 = vweird.f32 %v2238
      %vm2260 = vweird.f32 %v2254
      %vm2261 = vmor %vm2259, %vm2260
      %v2262 = vsel %vm2261, %v2254, %v2258
      %v2263 = vand.u32 2147483647, %v2238
      %vm2264 = vcmp.eq.f32.partialorder %v2263, 8.507059e+37
      %v2265 = vand.u32 %v2238, 2147483648
      %v2266 = vor.u32 1.1754944e-38, %v2265
      %v2267 = vsel %vm2264, %v2266, %v2262
      %v2268 = vmul.f32 1.0, %v2267
      %v2269 = vadd.f32 %v2229, %v2253
      %v2270 = vadd.f32 %v2230, %v2268
      %v2271 = vadd.f32 %v2001, 1e-05
      %v2272 = vadd.f32 %v2008, 1e-05
      %v2273 = vmul.f32 %v2271, %v2269
      %v2274 = vmul.f32 %v2272, %v2270
      %v2275 = vmul.f32 %v2273, 0.2
      %v2276 = vmul.f32 %v2274, 0.2
      %v2277 = vsub.f32 4.0, %v2049
      %v2278 = vsub.f32 4.0, %v2056
      %v2279 = vsub.f32 %v2277, %v2063
      %v2280 = vsub.f32 %v2278, %v2070
      %v2281 = vadd.f32 %v2279, %v2001
      %v2282 = vadd.f32 %v2280, %v2008
      %v2283 = vmul.f32 %v2049, 2.0
      %v2284 = vmul.f32 %v2056, 2.0
      %v2285 = vsub.f32 4.0, %v2283
      %v2286 = vsub.f32 4.0, %v2284
      %v2287 = vadd.f32 %v2285, %v2015
      %v2288 = vadd.f32 %v2286, %v2022
      %v2289 = vmul.f32 %v2063, 2.0
      %v2290 = vmul.f32 %v2070, 2.0
      %v2291 = vsub.f32 4.0, %v2289
      %v2292 = vsub.f32 4.0, %v2290
      %v2293 = vadd.f32 %v2291, %v2035
      %v2294 = vadd.f32 %v2292, %v2042
      %v2295 = vadd.f32 %v2287, %v2293
      %v2296 = vadd.f32 %v2288, %v2294
      %v2297 = vmul.f32 %v2281, -1.0
      %v2298 = vmul.f32 %v2282, -1.0
      %v2299 = vadd.f32 %v2295, %v2297
      %v2300 = vadd.f32 %v2296, %v2298
      %v2301 = vadd.f32 %v2299, 1e-05
      %v2302 = vadd.f32 %v2300, 1e-05
      %v2303 = vrcp.pop %v2301
      %v2304 = vmul.f32 %v2301, %v2303
      %v2305 = vsub.f32 1.0, %v2304
      %v2306 = vmul.f32 %v2303, %v2305
      %v2307 = vadd.f32 %v2303, %v2306
      %vm2308 = vweird.f32 %v2301
      %vm2309 = vweird.f32 %v2303
      %vm2310 = vmor %vm2308, %vm2309
      %v2311 = vsel %vm2310, %v2303, %v2307
      %v2312 = vand.u32 2147483647, %v2301
      %vm2313 = vcmp.eq.f32.partialorder %v2312, 8.507059e+37
      %v2314 = vand.u32 %v2301, 2147483648
      %v2315 = vor.u32 1.1754944e-38, %v2314
      %v2316 = vsel %vm2313, %v2315, %v2311
      %v2317 = vmul.f32 1.0, %v2316
      %v2318 = vrcp.pop %v2302
      %v2319 = vmul.f32 %v2302, %v2318
      %v2320 = vsub.f32 1.0, %v2319
      %v2321 = vmul.f32 %v2318, %v2320
      %v2322 = vadd.f32 %v2318, %v2321
      %vm2323 = vweird.f32 %v2302
      %vm2324 = vweird.f32 %v2318
      %vm2325 = vmor %vm2323, %vm2324
      %v2326 = vsel %vm2325, %v2318, %v2322
      %v2327 = vand.u32 2147483647, %v2302
      %vm2328 = vcmp.eq.f32.partialorder %v2327, 8.507059e+37
      %v2329 = vand.u32 %v2302, 2147483648
      %v2330 = vor.u32 1.1754944e-38, %v2329
      %v2331 = vsel %vm2328, %v2330, %v2326
      %v2332 = vmul.f32 1.0, %v2331
      %v2333 = vadd.f32 %v2317, 0.0
      %v2334 = vadd.f32 %v2332, 0.0
      %v2335 = vmul.f32 %v2295, 2.0
      %v2336 = vmul.f32 %v2296, 2.0
      %v2337 = vmul.f32 %v2281, -3.0
      %v2338 = vmul.f32 %v2282, -3.0
      %v2339 = vadd.f32 %v2335, %v2337
      %v2340 = vadd.f32 %v2336, %v2338
      %v2341 = vadd.f32 %v2339, 1e-05
      %v2342 = vadd.f32 %v2340, 1e-05
      %v2343 = vrcp.pop %v2341
      %v2344 = vmul.f32 %v2341, %v2343
      %v2345 = vsub.f32 1.0, %v2344
      %v2346 = vmul.f32 %v2343, %v2345
      %v2347 = vadd.f32 %v2343, %v2346
      %vm2348 = vweird.f32 %v2341
      %vm2349 = vweird.f32 %v2343
      %vm2350 = vmor %vm2348, %vm2349
      %v2351 = vsel %vm2350, %v2343, %v2347
      %v2352 = vand.u32 2147483647, %v2341
      %vm2353 = vcmp.eq.f32.partialorder %v2352, 8.507059e+37
      %v2354 = vand.u32 %v2341, 2147483648
      %v2355 = vor.u32 1.1754944e-38, %v2354
      %v2356 = vsel %vm2353, %v2355, %v2351
      %v2357 = vmul.f32 1.0, %v2356
      %v2358 = vrcp.pop %v2342
      %v2359 = vmul.f32 %v2342, %v2358
      %v2360 = vsub.f32 1.0, %v2359
      %v2361 = vmul.f32 %v2358, %v2360
      %v2362 = vadd.f32 %v2358, %v2361
      %vm2363 = vweird.f32 %v2342
      %vm2364 = vweird.f32 %v2358
      %vm2365 = vmor %vm2363, %vm2364
      %v2366 = vsel %vm2365, %v2358, %v2362
      %v2367 = vand.u32 2147483647, %v2342
      %vm2368 = vcmp.eq.f32.partialorder %v2367, 8.507059e+37
      %v2369 = vand.u32 %v2342, 2147483648
      %v2370 = vor.u32 1.1754944e-38, %v2369
      %v2371 = vsel %vm2368, %v2370, %v2366
      %v2372 = vmul.f32 1.0, %v2371
      %v2373 = vadd.f32 %v2333, %v2357
      %v2374 = vadd.f32 %v2334, %v2372
      %v2375 = vmul.f32 %v2295, 4.0
      %v2376 = vmul.f32 %v2296, 4.0
      %v2377 = vmul.f32 %v2281, -7.0
      %v2378 = vmul.f32 %v2282, -7.0
      %v2379 = vadd.f32 %v2375, %v2377
      %v2380 = vadd.f32 %v2376, %v2378
      %v2381 = vadd.f32 %v2379, 1e-05
      %v2382 = vadd.f32 %v2380, 1e-05
      %v2383 = vrcp.pop %v2381
      %v2384 = vmul.f32 %v2381, %v2383
      %v2385 = vsub.f32 1.0, %v2384
      %v2386 = vmul.f32 %v2383, %v2385
      %v2387 = vadd.f32 %v2383, %v2386
      %vm2388 = vweird.f32 %v2381
      %vm2389 = vweird.f32 %v2383
      %vm2390 = vmor %vm2388, %vm2389
      %v2391 = vsel %vm2390, %v2383, %v2387
      %v2392 = vand.u32 2147483647, %v2381
      %vm2393 = vcmp.eq.f32.partialorder %v2392, 8.507059e+37
      %v2394 = vand.u32 %v2381, 2147483648
      %v2395 = vor.u32 1.1754944e-38, %v2394
      %v2396 = vsel %vm2393, %v2395, %v2391
      %v2397 = vmul.f32 1.0, %v2396
      %v2398 = vrcp.pop %v2382
      %v2399 = vmul.f32 %v2382, %v2398
      %v2400 = vsub.f32 1.0, %v2399
      %v2401 = vmul.f32 %v2398, %v2400
      %v2402 = vadd.f32 %v2398, %v2401
      %vm2403 = vweird.f32 %v2382
      %vm2404 = vweird.f32 %v2398
      %vm2405 = vmor %vm2403, %vm2404
      %v2406 = vsel %vm2405, %v2398, %v2402
      %v2407 = vand.u32 2147483647, %v2382
      %vm2408 = vcmp.eq.f32.partialorder %v2407, 8.507059e+37
      %v2409 = vand.u32 %v2382, 2147483648
      %v2410 = vor.u32 1.1754944e-38, %v2409
      %v2411 = vsel %vm2408, %v2410, %v2406
      %v2412 = vmul.f32 1.0, %v2411
      %v2413 = vadd.f32 %v2373, %v2397
      %v2414 = vadd.f32 %v2374, %v2412
      %v2415 = vmul.f32 %v2295, 8.0
      %v2416 = vmul.f32 %v2296, 8.0
      %v2417 = vmul.f32 %v2281, -15.0
      %v2418 = vmul.f32 %v2282, -15.0
      %v2419 = vadd.f32 %v2415, %v2417
      %v2420 = vadd.f32 %v2416, %v2418
      %v2421 = vadd.f32 %v2419, 1e-05
      %v2422 = vadd.f32 %v2420, 1e-05
      %v2423 = vrcp.pop %v2421
      %v2424 = vmul.f32 %v2421, %v2423
      %v2425 = vsub.f32 1.0, %v2424
      %v2426 = vmul.f32 %v2423, %v2425
      %v2427 = vadd.f32 %v2423, %v2426
      %vm2428 = vweird.f32 %v2421
      %vm2429 = vweird.f32 %v2423
      %vm2430 = vmor %vm2428, %vm2429
      %v2431 = vsel %vm2430, %v2423, %v2427
      %v2432 = vand.u32 2147483647, %v2421
      %vm2433 = vcmp.eq.f32.partialorder %v2432, 8.507059e+37
      %v2434 = vand.u32 %v2421, 2147483648
      %v2435 = vor.u32 1.1754944e-38, %v2434
      %v2436 = vsel %vm2433, %v2435, %v2431
      %v2437 = vmul.f32 1.0, %v2436
      %v2438 = vrcp.pop %v2422
      %v2439 = vmul.f32 %v2422, %v2438
      %v2440 = vsub.f32 1.0, %v2439
      %v2441 = vmul.f32 %v2438, %v2440
      %v2442 = vadd.f32 %v2438, %v2441
      %vm2443 = vweird.f32 %v2422
      %vm2444 = vweird.f32 %v2438
      %vm2445 = vmor %vm2443, %vm2444
      %v2446 = vsel %vm2445, %v2438, %v2442
      %v2447 = vand.u32 2147483647, %v2422
      %vm2448 = vcmp.eq.f32.partialorder %v2447, 8.507059e+37
      %v2449 = vand.u32 %v2422, 2147483648
      %v2450 = vor.u32 1.1754944e-38, %v2449
      %v2451 = vsel %vm2448, %v2450, %v2446
      %v2452 = vmul.f32 1.0, %v2451
      %v2453 = vadd.f32 %v2413, %v2437
      %v2454 = vadd.f32 %v2414, %v2452
      %v2455 = vmul.f32 %v2295, 16.0
      %v2456 = vmul.f32 %v2296, 16.0
      %v2457 = vmul.f32 %v2281, -31.0
      %v2458 = vmul.f32 %v2282, -31.0
      %v2459 = vadd.f32 %v2455, %v2457
      %v2460 = vadd.f32 %v2456, %v2458
      %v2461 = vadd.f32 %v2459, 1e-05
      %v2462 = vadd.f32 %v2460, 1e-05
      %v2463 = vrcp.pop %v2461
      %v2464 = vmul.f32 %v2461, %v2463
      %v2465 = vsub.f32 1.0, %v2464
      %v2466 = vmul.f32 %v2463, %v2465
      %v2467 = vadd.f32 %v2463, %v2466
      %vm2468 = vweird.f32 %v2461
      %vm2469 = vweird.f32 %v2463
      %vm2470 = vmor %vm2468, %vm2469
      %v2471 = vsel %vm2470, %v2463, %v2467
      %v2472 = vand.u32 2147483647, %v2461
      %vm2473 = vcmp.eq.f32.partialorder %v2472, 8.507059e+37
      %v2474 = vand.u32 %v2461, 2147483648
      %v2475 = vor.u32 1.1754944e-38, %v2474
      %v2476 = vsel %vm2473, %v2475, %v2471
      %v2477 = vmul.f32 1.0, %v2476
      %v2478 = vrcp.pop %v2462
      %v2479 = vmul.f32 %v2462, %v2478
      %v2480 = vsub.f32 1.0, %v2479
      %v2481 = vmul.f32 %v2478, %v2480
      %v2482 = vadd.f32 %v2478, %v2481
      %vm2483 = vweird.f32 %v2462
      %vm2484 = vweird.f32 %v2478
      %vm2485 = vmor %vm2483, %vm2484
      %v2486 = vsel %vm2485, %v2478, %v2482
      %v2487 = vand.u32 2147483647, %v2462
      %vm2488 = vcmp.eq.f32.partialorder %v2487, 8.507059e+37
      %v2489 = vand.u32 %v2462, 2147483648
      %v2490 = vor.u32 1.1754944e-38, %v2489
      %v2491 = vsel %vm2488, %v2490, %v2486
      %v2492 = vmul.f32 1.0, %v2491
      %v2493 = vadd.f32 %v2453, %v2477
      %v2494 = vadd.f32 %v2454, %v2492
      %v2495 = vadd.f32 %v2281, 1e-05
      %v2496 = vadd.f32 %v2282, 1e-05
      %v2497 = vmul.f32 %v2495, %v2493
      %v2498 = vmul.f32 %v2496, %v2494
      %v2499 = vmul.f32 %v2497, 0.2
      %v2500 = vmul.f32 %v2498, 0.2
      %v2501 = vadd.f32 %v2275, %v2499
      %v2502 = vadd.f32 %v2276, %v2500
      %v2503 = vmul.f32 %v2501, 0.5
      %v2504 = vmul.f32 %v2502, 0.5
      %v2505 = vadd.f32 %v1995, %v2002
      %2506 = vadd.xlane.f32.xlu0 %v2505
      %v2507 = vpop.xlane.xlu0 %2506
      %v2508 = vadd.f32 %v2009, %v2016
      %2509 = vadd.xlane.f32.xlu0 %v2508
      %v2510 = vpop.xlane.xlu0 %2509
      %vm2511 = vcmask 1047556
      %v2512 = vsel %vm2511, %v1209, 0.0
      %v2513 = vsel %vm2511, %v1210, 0.0
      %v2514 = vadd.f32 %v2512, %v2513
      %2515 = vadd.xlane.f32.xlu0 %v2514
      %v2516 = vpop.xlane.xlu0 %2515
      %v2517 = vadd.f32 %v2043, %v2050
      %2518 = vadd.xlane.f32.xlu0 %v2517
      %v2519 = vpop.xlane.xlu0 %2518
      %v2520 = vsel %vm2511, %v1053, 0.0
      %v2521 = vsel %vm2511, %v1068, 0.0
      %v2522 = vadd.f32 %v2520, %v2521
      %2523 = vadd.xlane.f32.xlu0 %v2522
      %v2524 = vpop.xlane.xlu0 %2523
      %v2526 = vrot.slane %v2516, 4
      %v2528 = vadd.f32 %v2510, %v2526
      %v2529 = vmul.f32 %v2507, -1.0
      %v2530 = vadd.f32 %v2528, %v2529
      %v2531 = vadd.f32 %v2530, 1e-05
      %v2532 = vrcp.pop %v2531
      %v2533 = vmul.f32 %v2531, %v2532
      %v2534 = vsub.f32 1.0, %v2533
      %v2535 = vmul.f32 %v2532, %v2534
      %v2536 = vadd.f32 %v2532, %v2535
      %vm2537 = vweird.f32 %v2531
      %vm2538 = vweird.f32 %v2532
      %vm2539 = vmor %vm2537, %vm2538
      %v2540 = vsel %vm2539, %v2532, %v2536
      %v2541 = vand.u32 2147483647, %v2531
      %vm2542 = vcmp.eq.f32.partialorder %v2541, 8.507059e+37
      %v2543 = vand.u32 %v2531, 2147483648
      %v2544 = vor.u32 1.1754944e-38, %v2543
      %v2545 = vsel %vm2542, %v2544, %v2540
      %v2546 = vmul.f32 1.0, %v2545
      %v2547 = vadd.f32 %v2546, 0.0
      %v2548 = vmul.f32 %v2528, 2.0
      %v2549 = vmul.f32 %v2507, -3.0
      %v2550 = vadd.f32 %v2548, %v2549
      %v2551 = vadd.f32 %v2550, 1e-05
      %v2552 = vrcp.pop %v2551
      %v2553 = vmul.f32 %v2551, %v2552
      %v2554 = vsub.f32 1.0, %v2553
      %v2555 = vmul.f32 %v2552, %v2554
      %v2556 = vadd.f32 %v2552, %v2555
      %vm2557 = vweird.f32 %v2551
      %vm2558 = vweird.f32 %v2552
      %vm2559 = vmor %vm2557, %vm2558
      %v2560 = vsel %vm2559, %v2552, %v2556
      %v2561 = vand.u32 2147483647, %v2551
      %vm2562 = vcmp.eq.f32.partialorder %v2561, 8.507059e+37
      %v2563 = vand.u32 %v2551, 2147483648
      %v2564 = vor.u32 1.1754944e-38, %v2563
      %v2565 = vsel %vm2562, %v2564, %v2560
      %v2566 = vmul.f32 1.0, %v2565
      %v2567 = vadd.f32 %v2547, %v2566
      %v2568 = vmul.f32 %v2528, 4.0
      %v2569 = vmul.f32 %v2507, -7.0
      %v2570 = vadd.f32 %v2568, %v2569
      %v2571 = vadd.f32 %v2570, 1e-05
      %v2572 = vrcp.pop %v2571
      %v2573 = vmul.f32 %v2571, %v2572
      %v2574 = vsub.f32 1.0, %v2573
      %v2575 = vmul.f32 %v2572, %v2574
      %v2576 = vadd.f32 %v2572, %v2575
      %vm2577 = vweird.f32 %v2571
      %vm2578 = vweird.f32 %v2572
      %vm2579 = vmor %vm2577, %vm2578
      %v2580 = vsel %vm2579, %v2572, %v2576
      %v2581 = vand.u32 2147483647, %v2571
      %vm2582 = vcmp.eq.f32.partialorder %v2581, 8.507059e+37
      %v2583 = vand.u32 %v2571, 2147483648
      %v2584 = vor.u32 1.1754944e-38, %v2583
      %v2585 = vsel %vm2582, %v2584, %v2580
      %v2586 = vmul.f32 1.0, %v2585
      %v2587 = vadd.f32 %v2567, %v2586
      %v2588 = vmul.f32 %v2528, 8.0
      %v2589 = vmul.f32 %v2507, -15.0
      %v2590 = vadd.f32 %v2588, %v2589
      %v2591 = vadd.f32 %v2590, 1e-05
      %v2592 = vrcp.pop %v2591
      %v2593 = vmul.f32 %v2591, %v2592
      %v2594 = vsub.f32 1.0, %v2593
      %v2595 = vmul.f32 %v2592, %v2594
      %v2596 = vadd.f32 %v2592, %v2595
      %vm2597 = vweird.f32 %v2591
      %vm2598 = vweird.f32 %v2592
      %vm2599 = vmor %vm2597, %vm2598
      %v2600 = vsel %vm2599, %v2592, %v2596
      %v2601 = vand.u32 2147483647, %v2591
      %vm2602 = vcmp.eq.f32.partialorder %v2601, 8.507059e+37
      %v2603 = vand.u32 %v2591, 2147483648
      %v2604 = vor.u32 1.1754944e-38, %v2603
      %v2605 = vsel %vm2602, %v2604, %v2600
      %v2606 = vmul.f32 1.0, %v2605
      %v2607 = vadd.f32 %v2587, %v2606
      %v2608 = vmul.f32 %v2528, 16.0
      %v2609 = vmul.f32 %v2507, -31.0
      %v2610 = vadd.f32 %v2608, %v2609
      %v2611 = vadd.f32 %v2610, 1e-05
      %v2612 = vrcp.pop %v2611
      %v2613 = vmul.f32 %v2611, %v2612
      %v2614 = vsub.f32 1.0, %v2613
      %v2615 = vmul.f32 %v2612, %v2614
      %v2616 = vadd.f32 %v2612, %v2615
      %vm2617 = vweird.f32 %v2611
      %vm2618 = vweird.f32 %v2612
      %vm2619 = vmor %vm2617, %vm2618
      %v2620 = vsel %vm2619, %v2612, %v2616
      %v2621 = vand.u32 2147483647, %v2611
      %vm2622 = vcmp.eq.f32.partialorder %v2621, 8.507059e+37
      %v2623 = vand.u32 %v2611, 2147483648
      %v2624 = vor.u32 1.1754944e-38, %v2623
      %v2625 = vsel %vm2622, %v2624, %v2620
      %v2626 = vmul.f32 1.0, %v2625
      %v2627 = vadd.f32 %v2607, %v2626
      %v2628 = vadd.f32 %v2507, 1e-05
      %v2629 = vmul.f32 %v2628, %v2627
      %v2630 = vmul.f32 %v2629, 0.2
      %v2631 = vsub.f32 256.0, %v2519
      %v2633 = vrot.slane %v2524, 4
      %v2635 = vsub.f32 %v2631, %v2633
      %v2636 = vadd.f32 %v2635, %v2507
      %v2637 = vmul.f32 %v2519, 2.0
      %v2638 = vsub.f32 256.0, %v2637
      %v2639 = vadd.f32 %v2638, %v2510
      %v2640 = vmul.f32 %v2524, 2.0
      %v2641 = vsub.f32 256.0, %v2640
      %v2642 = vadd.f32 %v2641, %v2516
      %v2644 = vrot.slane %v2642, 4
      %v2646 = vadd.f32 %v2639, %v2644
      %v2647 = vmul.f32 %v2636, -1.0
      %v2648 = vadd.f32 %v2646, %v2647
      %v2649 = vadd.f32 %v2648, 1e-05
      %v2650 = vrcp.pop %v2649
      %v2651 = vmul.f32 %v2649, %v2650
      %v2652 = vsub.f32 1.0, %v2651
      %v2653 = vmul.f32 %v2650, %v2652
      %v2654 = vadd.f32 %v2650, %v2653
      %vm2655 = vweird.f32 %v2649
      %vm2656 = vweird.f32 %v2650
      %vm2657 = vmor %vm2655, %vm2656
      %v2658 = vsel %vm2657, %v2650, %v2654
      %v2659 = vand.u32 2147483647, %v2649
      %vm2660 = vcmp.eq.f32.partialorder %v2659, 8.507059e+37
      %v2661 = vand.u32 %v2649, 2147483648
      %v2662 = vor.u32 1.1754944e-38, %v2661
      %v2663 = vsel %vm2660, %v2662, %v2658
      %v2664 = vmul.f32 1.0, %v2663
      %v2665 = vadd.f32 %v2664, 0.0
      %v2666 = vmul.f32 %v2646, 2.0
      %v2667 = vmul.f32 %v2636, -3.0
      %v2668 = vadd.f32 %v2666, %v2667
      %v2669 = vadd.f32 %v2668, 1e-05
      %v2670 = vrcp.pop %v2669
      %v2671 = vmul.f32 %v2669, %v2670
      %v2672 = vsub.f32 1.0, %v2671
      %v2673 = vmul.f32 %v2670, %v2672
      %v2674 = vadd.f32 %v2670, %v2673
      %vm2675 = vweird.f32 %v2669
      %vm2676 = vweird.f32 %v2670
      %vm2677 = vmor %vm2675, %vm2676
      %v2678 = vsel %vm2677, %v2670, %v2674
      %v2679 = vand.u32 2147483647, %v2669
      %vm2680 = vcmp.eq.f32.partialorder %v2679, 8.507059e+37
      %v2681 = vand.u32 %v2669, 2147483648
      %v2682 = vor.u32 1.1754944e-38, %v2681
      %v2683 = vsel %vm2680, %v2682, %v2678
      %v2684 = vmul.f32 1.0, %v2683
      %v2685 = vadd.f32 %v2665, %v2684
      %v2686 = vmul.f32 %v2646, 4.0
      %v2687 = vmul.f32 %v2636, -7.0
      %v2688 = vadd.f32 %v2686, %v2687
      %v2689 = vadd.f32 %v2688, 1e-05
      %v2690 = vrcp.pop %v2689
      %v2691 = vmul.f32 %v2689, %v2690
      %v2692 = vsub.f32 1.0, %v2691
      %v2693 = vmul.f32 %v2690, %v2692
      %v2694 = vadd.f32 %v2690, %v2693
      %vm2695 = vweird.f32 %v2689
      %vm2696 = vweird.f32 %v2690
      %vm2697 = vmor %vm2695, %vm2696
      %v2698 = vsel %vm2697, %v2690, %v2694
      %v2699 = vand.u32 2147483647, %v2689
      %vm2700 = vcmp.eq.f32.partialorder %v2699, 8.507059e+37
      %v2701 = vand.u32 %v2689, 2147483648
      %v2702 = vor.u32 1.1754944e-38, %v2701
      %v2703 = vsel %vm2700, %v2702, %v2698
      %v2704 = vmul.f32 1.0, %v2703
      %v2705 = vadd.f32 %v2685, %v2704
      %v2706 = vmul.f32 %v2646, 8.0
      %v2707 = vmul.f32 %v2636, -15.0
      %v2708 = vadd.f32 %v2706, %v2707
      %v2709 = vadd.f32 %v2708, 1e-05
      %v2710 = vrcp.pop %v2709
      %v2711 = vmul.f32 %v2709, %v2710
      %v2712 = vsub.f32 1.0, %v2711
      %v2713 = vmul.f32 %v2710, %v2712
      %v2714 = vadd.f32 %v2710, %v2713
      %vm2715 = vweird.f32 %v2709
      %vm2716 = vweird.f32 %v2710
      %vm2717 = vmor %vm2715, %vm2716
      %v2718 = vsel %vm2717, %v2710, %v2714
      %v2719 = vand.u32 2147483647, %v2709
      %vm2720 = vcmp.eq.f32.partialorder %v2719, 8.507059e+37
      %v2721 = vand.u32 %v2709, 2147483648
      %v2722 = vor.u32 1.1754944e-38, %v2721
      %v2723 = vsel %vm2720, %v2722, %v2718
      %v2724 = vmul.f32 1.0, %v2723
      %v2725 = vadd.f32 %v2705, %v2724
      %v2726 = vmul.f32 %v2646, 16.0
      %v2727 = vmul.f32 %v2636, -31.0
      %v2728 = vadd.f32 %v2726, %v2727
      %v2729 = vadd.f32 %v2728, 1e-05
      %v2730 = vrcp.pop %v2729
      %v2731 = vmul.f32 %v2729, %v2730
      %v2732 = vsub.f32 1.0, %v2731
      %v2733 = vmul.f32 %v2730, %v2732
      %v2734 = vadd.f32 %v2730, %v2733
      %vm2735 = vweird.f32 %v2729
      %vm2736 = vweird.f32 %v2730
      %vm2737 = vmor %vm2735, %vm2736
      %v2738 = vsel %vm2737, %v2730, %v2734
      %v2739 = vand.u32 2147483647, %v2729
      %vm2740 = vcmp.eq.f32.partialorder %v2739, 8.507059e+37
      %v2741 = vand.u32 %v2729, 2147483648
      %v2742 = vor.u32 1.1754944e-38, %v2741
      %v2743 = vsel %vm2740, %v2742, %v2738
      %v2744 = vmul.f32 1.0, %v2743
      %v2745 = vadd.f32 %v2725, %v2744
      %v2746 = vadd.f32 %v2636, 1e-05
      %v2747 = vmul.f32 %v2746, %v2745
      %v2748 = vmul.f32 %v2747, 0.2
      %v2749 = vadd.f32 %v2630, %v2748
      %v2750 = vmul.f32 %v2749, 0.5
      %2752 = vset.pattern.permute.xlu0 0
      %2753 = vperm.xlu0 %2752, %v2750
      %v2754 = vpop.permute.xlu0 %2753
      %v2756 = vmul.f32 %v2754, %v1083
      %v2757 = vmul.f32 %v2754, %v1098
      %v2758 = vmul.f32 %v2756, 0.5
      %v2759 = vmul.f32 %v2757, 0.5
      %v2760 = vmul.f32 %v2503, %v1083
      %v2761 = vmul.f32 %v2504, %v1098
      %v2762 = vmul.f32 %v2758, %v2760
      %v2763 = vmul.f32 %v2759, %v2761
      %v2764 = vld [vmem:[%s11] sm:$0xf]
      %2766 = vset.pattern.permute.xlu0 0
      %2767 = vperm.xlu0 %2766, %v2764
      %v2768 = vpop.permute.xlu0 %2767
      %v2770 = vmul.f32 %v2762, %v2768
      %v2771 = vmul.f32 %v2763, %v2768
      %v2772 = vld [vmem:[%s12] sm:$0xf]
      %2774 = vset.pattern.permute.xlu0 0
      %2775 = vperm.xlu0 %2774, %v2772
      %v2776 = vpop.permute.xlu0 %2775
      %v2778 = vadd.f32 %v2770, %v2776
      %v2779 = vadd.f32 %v2771, %v2776
      %v2780 = vadd.f32 %v1983, 1.0
      %v2781 = vadd.f32 %v1984, 1.0
      %v2784 = vrot.slane %v2781, 4
      %v2785 = vsel %vm622, %v2780, %v2784
      %v2787 = vmul.f32 %v542, %v2785
      %v2788 = vadd.f32 %v2778, 1.0
      %v2789 = vadd.f32 %v2779, 1.0
      %v2792 = vrot.slane %v2789, 4
      %v2793 = vsel %vm622, %v2788, %v2792
      %v2795 = vmul.f32 %v543, %v2793
      %2797 = vst [vmem:[#allocation1] ss:$2 sm:$0xff] %v2787
      %v2798 = vld.sshfl [vmem:[#allocation1] sm:$0xff pattern:$0x75316420]
      %v2799 = vld.sshfl [vmem:[#allocation1 + $0x8] sm:$0xff pattern:$0x75316420]
      %2802 = vrot.lane.b32.xlu0 %v2798, 17
      %v2803 = vpop.permute.xlu0 %2802
      %2804 = vrot.lane.b32.xlu0 %v2799, 17
      %v2805 = vpop.permute.xlu0 %2804
      %v2806 = vsel %vm562, %v2803, %v2805
      %v2807 = vsel %vm562, %v2805, %v2803
      %v2808 = vmul.f32 %v2807, %v565
      %v2809 = vmul.f32 %v2806, %v566
      %2810 = vst [vmem:[#allocation1] ss:$2 sm:$0xff] %v2787
      %v2811 = vld.sshfl [vmem:[#allocation1] sm:$0xff pattern:$0x75316420]
      %v2812 = vld.sshfl [vmem:[#allocation1 + $0x8] sm:$0xff pattern:$0x75316420]
      %2815 = vrot.lane.b32.xlu0 %v2811, 16
      %v2816 = vpop.permute.xlu0 %2815
      %2817 = vrot.lane.b32.xlu0 %v2812, 16
      %v2818 = vpop.permute.xlu0 %2817
      %v2819 = vsel %vm578, %v2816, %v2818
      %v2820 = vsel %vm578, %v2818, %v2816
      %v2821 = vmul.f32 %v2820, %v581
      %v2822 = vmul.f32 %v2819, %v582
      %2823 = vst [vmem:[#allocation1] ss:$2 sm:$0xff] %v2787
      %v2824 = vld.sshfl [vmem:[#allocation1] sm:$0xff pattern:$0x75316420]
      %v2825 = vld.sshfl [vmem:[#allocation1 + $0x8] sm:$0xff pattern:$0x75316420]
      %2828 = vrot.lane.b32.xlu0 %v2824, 15
      %v2829 = vpop.permute.xlu0 %2828
      %2830 = vrot.lane.b32.xlu0 %v2825, 15
      %v2831 = vpop.permute.xlu0 %2830
      %v2832 = vsel %vm594, %v2829, %v2831
      %v2833 = vsel %vm594, %v2831, %v2829
      %v2834 = vmul.f32 %v2833, %v597
      %v2835 = vmul.f32 %v2832, %v598
      %2836 = vst [vmem:[#allocation1] ss:$2 sm:$0xff] %v2787
      %v2837 = vld.sshfl [vmem:[#allocation1] sm:$0xff pattern:$0x75316420]
      %v2838 = vld.sshfl [vmem:[#allocation1 + $0x8] sm:$0xff pattern:$0x75316420]
      %2841 = vrot.lane.b32.xlu0 %v2837, 1
      %v2842 = vpop.permute.xlu0 %2841
      %2843 = vrot.lane.b32.xlu0 %v2838, 1
      %v2844 = vpop.permute.xlu0 %2843
      %v2845 = vsel %vm610, %v2842, %v2844
      %v2846 = vsel %vm610, %v2844, %v2842
      %v2847 = vmul.f32 %v2846, %v613
      %v2848 = vmul.f32 %v2845, %v614
      %v2849 = vmul.f32 %v2787, %v623
      %2850 = vst [vmem:[#allocation1] ss:$2 sm:$0xff] %v2787
      %v2851 = vld.sshfl [vmem:[#allocation1] sm:$0xff pattern:$0x75316420]
      %v2852 = vld.sshfl [vmem:[#allocation1 + $0x8] sm:$0xff pattern:$0x75316420]
      %2855 = vrot.lane.b32.xlu0 %v2851, 127
      %v2856 = vpop.permute.xlu0 %2855
      %2857 = vrot.lane.b32.xlu0 %v2852, 127
      %v2858 = vpop.permute.xlu0 %2857
      %v2859 = vsel %vm635, %v2856, %v2858
      %v2860 = vsel %vm635, %v2858, %v2856
      %v2861 = vmul.f32 %v2859, %v638
      %v2862 = vmul.f32 %v2860, %v639
      %2863 = vst [vmem:[#allocation1] ss:$2 sm:$0xff] %v2787
      %v2864 = vld.sshfl [vmem:[#allocation1] sm:$0xff pattern:$0x75316420]
      %v2865 = vld.sshfl [vmem:[#allocation1 + $0x8] sm:$0xff pattern:$0x75316420]
      %2868 = vrot.lane.b32.xlu0 %v2864, 113
      %v2869 = vpop.permute.xlu0 %2868
      %2870 = vrot.lane.b32.xlu0 %v2865, 113
      %v2871 = vpop.permute.xlu0 %2870
      %v2872 = vsel %vm651, %v2869, %v2871
      %v2873 = vsel %vm651, %v2871, %v2869
      %v2874 = vmul.f32 %v2872, %v654
      %v2875 = vmul.f32 %v2873, %v655
      %2876 = vst [vmem:[#allocation1] ss:$2 sm:$0xff] %v2787
      %v2877 = vld.sshfl [vmem:[#allocation1] sm:$0xff pattern:$0x75316420]
      %v2878 = vld.sshfl [vmem:[#allocation1 + $0x8] sm:$0xff pattern:$0x75316420]
      %2881 = vrot.lane.b32.xlu0 %v2877, 112
      %v2882 = vpop.permute.xlu0 %2881
      %2883 = vrot.lane.b32.xlu0 %v2878, 112
      %v2884 = vpop.permute.xlu0 %2883
      %v2885 = vsel %vm667, %v2882, %v2884
      %v2886 = vsel %vm667, %v2884, %v2882
      %v2887 = vmul.f32 %v2885, %v670
      %v2888 = vmul.f32 %v2886, %v671
      %2889 = vst [vmem:[#allocation1] ss:$2 sm:$0xff] %v2787
      %v2890 = vld.sshfl [vmem:[#allocation1] sm:$0xff pattern:$0x75316420]
      %v2891 = vld.sshfl [vmem:[#allocation1 + $0x8] sm:$0xff pattern:$0x75316420]
      %2894 = vrot.lane.b32.xlu0 %v2890, 111
      %v2895 = vpop.permute.xlu0 %2894
      %2896 = vrot.lane.b32.xlu0 %v2891, 111
      %v2897 = vpop.permute.xlu0 %2896
      %v2898 = vsel %vm683, %v2895, %v2897
      %v2899 = vsel %vm683, %v2897, %v2895
      %v2900 = vmul.f32 %v2898, %v686
      %v2901 = vmul.f32 %v2899, %v687
      %v2904 = vrot.slane %v2821, 4
      %v2905 = vrot.slane %v2822, 4
      %v2910 = vrot.slane %v2847, 4
      %v2911 = vrot.slane %v2848, 4
      %2915 = vst [vmem:[#allocation1] ss:$2 sm:$0xff] %v2849
      %v2916 = vld.sshfl [vmem:[#allocation1] sm:$0xff pattern:$0x75316420]
      %v2917 = vld.sshfl [vmem:[#allocation1 + $0x8] sm:$0xff pattern:$0x75316420]
      %v2922 = vrot.slane %v2861, 4
      %v2923 = vrot.slane %v2862, 4
      %v2928 = vrot.slane %v2887, 4
      %v2929 = vrot.slane %v2888, 4
      %v2932 = vsel %vm622, %v2808, %v2904
      %v2933 = vsel %vm622, %v2809, %v2905
      %v2934 = vsel %vm622, %v2834, %v2910
      %v2935 = vsel %vm622, %v2835, %v2911
      %v2936 = vsel %vm622, %v2916, %v2922
      %v2937 = vsel %vm622, %v2917, %v2923
      %v2938 = vsel %vm622, %v2874, %v2928
      %v2939 = vsel %vm622, %v2875, %v2929
      %2941 = vst [vmem:[#allocation1] ss:$2 sm:$0xff] %v2795
      %v2942 = vld.sshfl [vmem:[#allocation1] sm:$0xff pattern:$0x75316420]
      %v2943 = vld.sshfl [vmem:[#allocation1 + $0x8] sm:$0xff pattern:$0x75316420]
      %2946 = vrot.lane.b32.xlu0 %v2942, 17
      %v2947 = vpop.permute.xlu0 %2946
      %2948 = vrot.lane.b32.xlu0 %v2943, 17
      %v2949 = vpop.permute.xlu0 %2948
      %v2950 = vsel %vm562, %v2947, %v2949
      %v2951 = vsel %vm562, %v2949, %v2947
      %v2952 = vmul.f32 %v2951, %v565
      %v2953 = vmul.f32 %v2950, %v566
      %2954 = vst [vmem:[#allocation1] ss:$2 sm:$0xff] %v2795
      %v2955 = vld.sshfl [vmem:[#allocation1] sm:$0xff pattern:$0x75316420]
      %v2956 = vld.sshfl [vmem:[#allocation1 + $0x8] sm:$0xff pattern:$0x75316420]
      %2959 = vrot.lane.b32.xlu0 %v2955, 16
      %v2960 = vpop.permute.xlu0 %2959
      %2961 = vrot.lane.b32.xlu0 %v2956, 16
      %v2962 = vpop.permute.xlu0 %2961
      %v2963 = vsel %vm578, %v2960, %v2962
      %v2964 = vsel %vm578, %v2962, %v2960
      %v2965 = vmul.f32 %v2964, %v581
      %v2966 = vmul.f32 %v2963, %v582
      %2967 = vst [vmem:[#allocation1] ss:$2 sm:$0xff] %v2795
      %v2968 = vld.sshfl [vmem:[#allocation1] sm:$0xff pattern:$0x75316420]
      %v2969 = vld.sshfl [vmem:[#allocation1 + $0x8] sm:$0xff pattern:$0x75316420]
      %2972 = vrot.lane.b32.xlu0 %v2968, 15
      %v2973 = vpop.permute.xlu0 %2972
      %2974 = vrot.lane.b32.xlu0 %v2969, 15
      %v2975 = vpop.permute.xlu0 %2974
      %v2976 = vsel %vm594, %v2973, %v2975
      %v2977 = vsel %vm594, %v2975, %v2973
      %v2978 = vmul.f32 %v2977, %v597
      %v2979 = vmul.f32 %v2976, %v598
      %2980 = vst [vmem:[#allocation1] ss:$2 sm:$0xff] %v2795
      %v2981 = vld.sshfl [vmem:[#allocation1] sm:$0xff pattern:$0x75316420]
      %v2982 = vld.sshfl [vmem:[#allocation1 + $0x8] sm:$0xff pattern:$0x75316420]
      %2985 = vrot.lane.b32.xlu0 %v2981, 1
      %v2986 = vpop.permute.xlu0 %2985
      %2987 = vrot.lane.b32.xlu0 %v2982, 1
      %v2988 = vpop.permute.xlu0 %2987
      %v2989 = vsel %vm610, %v2986, %v2988
      %v2990 = vsel %vm610, %v2988, %v2986
      %v2991 = vmul.f32 %v2990, %v613
      %v2992 = vmul.f32 %v2989, %v614
      %v2993 = vmul.f32 %v2795, %v623
      %2994 = vst [vmem:[#allocation1] ss:$2 sm:$0xff] %v2795
      %v2995 = vld.sshfl [vmem:[#allocation1] sm:$0xff pattern:$0x75316420]
      %v2996 = vld.sshfl [vmem:[#allocation1 + $0x8] sm:$0xff pattern:$0x75316420]
      %2999 = vrot.lane.b32.xlu0 %v2995, 127
      %v3000 = vpop.permute.xlu0 %2999
      %3001 = vrot.lane.b32.xlu0 %v2996, 127
      %v3002 = vpop.permute.xlu0 %3001
      %v3003 = vsel %vm635, %v3000, %v3002
      %v3004 = vsel %vm635, %v3002, %v3000
      %v3005 = vmul.f32 %v3003, %v638
      %v3006 = vmul.f32 %v3004, %v639
      %3007 = vst [vmem:[#allocation1] ss:$2 sm:$0xff] %v2795
      %v3008 = vld.sshfl [vmem:[#allocation1] sm:$0xff pattern:$0x75316420]
      %v3009 = vld.sshfl [vmem:[#allocation1 + $0x8] sm:$0xff pattern:$0x75316420]
      %3012 = vrot.lane.b32.xlu0 %v3008, 113
      %v3013 = vpop.permute.xlu0 %3012
      %3014 = vrot.lane.b32.xlu0 %v3009, 113
      %v3015 = vpop.permute.xlu0 %3014
      %v3016 = vsel %vm651, %v3013, %v3015
      %v3017 = vsel %vm651, %v3015, %v3013
      %v3018 = vmul.f32 %v3016, %v654
      %v3019 = vmul.f32 %v3017, %v655
      %3020 = vst [vmem:[#allocation1] ss:$2 sm:$0xff] %v2795
      %v3021 = vld.sshfl [vmem:[#allocation1] sm:$0xff pattern:$0x75316420]
      %v3022 = vld.sshfl [vmem:[#allocation1 + $0x8] sm:$0xff pattern:$0x75316420]
      %3025 = vrot.lane.b32.xlu0 %v3021, 112
      %v3026 = vpop.permute.xlu0 %3025
      %3027 = vrot.lane.b32.xlu0 %v3022, 112
      %v3028 = vpop.permute.xlu0 %3027
      %v3029 = vsel %vm667, %v3026, %v3028
      %v3030 = vsel %vm667, %v3028, %v3026
      %v3031 = vmul.f32 %v3029, %v670
      %v3032 = vmul.f32 %v3030, %v671
      %3033 = vst [vmem:[#allocation1] ss:$2 sm:$0xff] %v2795
      %v3034 = vld.sshfl [vmem:[#allocation1] sm:$0xff pattern:$0x75316420]
      %v3035 = vld.sshfl [vmem:[#allocation1 + $0x8] sm:$0xff pattern:$0x75316420]
      %3038 = vrot.lane.b32.xlu0 %v3034, 111
      %v3039 = vpop.permute.xlu0 %3038
      %3040 = vrot.lane.b32.xlu0 %v3035, 111
      %v3041 = vpop.permute.xlu0 %3040
      %v3042 = vsel %vm683, %v3039, %v3041
      %v3043 = vsel %vm683, %v3041, %v3039
      %v3044 = vmul.f32 %v3042, %v686
      %v3045 = vmul.f32 %v3043, %v687
      %v3048 = vrot.slane %v2965, 4
      %v3049 = vrot.slane %v2966, 4
      %v3054 = vrot.slane %v2991, 4
      %v3055 = vrot.slane %v2992, 4
      %3059 = vst [vmem:[#allocation1] ss:$2 sm:$0xff] %v2993
      %v3060 = vld.sshfl [vmem:[#allocation1] sm:$0xff pattern:$0x75316420]
      %v3061 = vld.sshfl [vmem:[#allocation1 + $0x8] sm:$0xff pattern:$0x75316420]
      %v3066 = vrot.slane %v3005, 4
      %v3067 = vrot.slane %v3006, 4
      %v3072 = vrot.slane %v3031, 4
      %v3073 = vrot.slane %v3032, 4
      %v3076 = vsel %vm622, %v2952, %v3048
      %v3077 = vsel %vm622, %v2953, %v3049
      %v3078 = vsel %vm622, %v2978, %v3054
      %v3079 = vsel %vm622, %v2979, %v3055
      %v3080 = vsel %vm622, %v3060, %v3066
      %v3081 = vsel %vm622, %v3061, %v3067
      %v3082 = vsel %vm622, %v3018, %v3072
      %v3083 = vsel %vm622, %v3019, %v3073
      %v3094 = vrot.slane %v3076, 4
      %v3095 = vrot.slane %v3077, 4
      %v3096 = vrot.slane %v3078, 4
      %v3097 = vsel %vm622, %v3094, %v3096
      %v3098 = vrot.slane %v3079, 4
      %v3099 = vsel %vm622, %v3095, %v3098
      %v3100 = vrot.slane %v3080, 4
      %v3101 = vsel %vm622, %v3096, %v3100
      %v3102 = vrot.slane %v3081, 4
      %v3103 = vsel %vm622, %v3098, %v3102
      %v3104 = vrot.slane %v3082, 4
      %v3105 = vsel %vm622, %v3100, %v3104
      %v3106 = vrot.slane %v3083, 4
      %v3107 = vsel %vm622, %v3102, %v3106
      %v3108 = vrot.slane %v3044, 4
      %v3109 = vsel %vm622, %v3104, %v3108
      %v3110 = vrot.slane %v3045, 4
      %v3111 = vsel %vm622, %v3106, %v3110
      %v3122 = vsel %vm622, %v2900, %v3094
      %v3123 = vsel %vm622, %v2901, %v3095
      %v3124 = vld [vmem:[%s13] sm:$0xff]
      %vm3125 = vcmask 588800
      %v3127 = vsel %vm3125, %v3124, 0
      %3129 = vmatpush.msra.mxu0 0.0
      %3130 = vmatpush.msra.mxu0 0.0
      %3131 = vmatpush.msra.mxu0 0.0
      %3132 = vmatpush.msra.mxu0 0.0
      %3133 = vmatpush.msra.mxu0 0.0
      %3134 = vmatpush.msra.mxu0 0.0
      %3135 = vmatpush.msra.mxu0 0.0
      %3136 = vmatpush.msra.mxu0 %v3109
      %3137 = vmatpush.msra.mxu0 %v3105
      %3138 = vmatpush.msra.mxu0 %v3101
      %3139 = vmatpush.msra.mxu0 %v3097
      %3140 = vmatpush.msra.mxu0 %v3122
      %3141 = vmatpush.msra.mxu0 %v2938
      %3142 = vmatpush.msra.mxu0 %v2936
      %3143 = vmatpush.msra.mxu0 %v2934
      %3144 = vmatpush.msra.mxu0 %v2932
      %3145 = vmatmul.f32.gmra.mxu0 %v3127
      %v3146 = vpop.f32.mrf.mxu0
      %v3147 = vadd.f32 0.0, %v3146
      %3148 = vdwg.mxu0
      %3149 = vmatpush.msra.mxu0 0.0
      %3150 = vmatpush.msra.mxu0 0.0
      %3151 = vmatpush.msra.mxu0 0.0
      %3152 = vmatpush.msra.mxu0 0.0
      %3153 = vmatpush.msra.mxu0 0.0
      %3154 = vmatpush.msra.mxu0 0.0
      %3155 = vmatpush.msra.mxu0 0.0
      %3156 = vmatpush.msra.mxu0 %v3111
      %3157 = vmatpush.msra.mxu0 %v3107
      %3158 = vmatpush.msra.mxu0 %v3103
      %3159 = vmatpush.msra.mxu0 %v3099
      %3160 = vmatpush.msra.mxu0 %v3123
      %3161 = vmatpush.msra.mxu0 %v2939
      %3162 = vmatpush.msra.mxu0 %v2937
      %3163 = vmatpush.msra.mxu0 %v2935
      %3164 = vmatpush.msra.mxu0 %v2933
      %3165 = vmatmul.f32.gmra.mxu0 %v3127
      %v3166 = vpop.f32.mrf.mxu0
      %v3167 = vadd.f32 0.0, %v3166
      %3168 = vdwg.mxu0
      %v3169 = vld [vmem:[%s14] sm:$0xff]
      %3171 = vset.pattern.permute.xlu0 0
      %3172 = vperm.xlu0 %3171, %v3169
      %v3173 = vpop.permute.xlu0 %3172
      %v3175 = vmul.f32 %v3147, %v3173
      %v3176 = vmul.f32 %v3167, %v3173
      %v3177 = vld [vmem:[%s15] sm:$0xff]
      %3179 = vset.pattern.permute.xlu0 0
      %3180 = vperm.xlu0 %3179, %v3177
      %v3181 = vpop.permute.xlu0 %3180
      %v3183 = vadd.f32 %v3175, %v3181
      %v3184 = vadd.f32 %v3176, %v3181
      %v3185 = vmax.f32 %v3183, 0.0
      %v3186 = vmax.f32 %v3184, 0.0
      %3187 = vst [vmem:[%s541] sm:$0xff] %v3185
      %3188 = vst [vmem:[%s541 + $0x8] sm:$0xff] %v3186
      %p3189 = scmp.lt.s32.totalorder %s27, 1
      %s3190 = scalar_select %p3189, %s27, 1
      %s3191 = smul.addr %s3190, 2
      %s3192 = smul.addr %s3191, 8
      %s3193 = scalar_lea.vmem %s16, %s3192
      // Predicated region
      $region85: #{catfusion_forward.1} parent=83 // pred_check
        %p3194 = pneg %p391
      $region86: #{catfusion_forward.1} parent=83 // pred_check_branch
        %3196 = sbr.rel (%p3194) target = $region88
      $region87: #{catfusion_forward.1} parent=83 // pred_region
        _
      $region88: #{catfusion_forward.1} parent=83 // pred_fallthru
        _
    $region84: #{catfusion_forward.1} parent=5 // pred_fallthru
      _
    %p3197 = scmp.le.s32.totalorder 2, %s22
    // Predicated region
    $region89: #{catfusion_forward.1} parent=5 // pred_check
      %p3198 = pneg %p3197
    $region90: #{catfusion_forward.1} parent=5 // pred_check_branch
      %3200 = sbr.rel (%p3198) target = $region92
    $region91: #{catfusion_forward.1} parent=5 // pred_region
      %s3201 = ssub.s32 %s22, 2
      // Predicated region
      $region93: #{catfusion_forward.1} parent=91 // pred_check
        %p3202 = pneg %p397
      $region94: #{catfusion_forward.1} parent=91 // pred_check_branch
        %3204 = sbr.rel (%p3202) target = $region96
      $region95: #{catfusion_forward.1} parent=91 // pred_region
        %p3205 = scmp.lt.s32.totalorder %s28, 1
        %s3206 = scalar_select %p3205, %s28, 1
        %s3207 = smul.addr %s3206, 2
        %s3208 = smul.addr %s3207, 8
        %s3209 = scalar_lea.vmem %s16, %s3208
      $region96: #{catfusion_forward.1} parent=91 // pred_fallthru
        _
    $region92: #{catfusion_forward.1} parent=5 // pred_fallthru
      _
  $region6: #{catfusion_forward.1} parent=0 // loop_footer
    %s26 = sadd.s32 1, %s22
  $region7: #{catfusion_forward.1} parent=0 // loop_footer_branch
    %21 = sbr.rel target = $region3
  $region8: #{catfusion_forward.1} parent=0 // loop_exit
    _

</llo_original>
